<compile_context>
chip_gen: v6e
topology: v6e:2x2x1
jax: 0.10.0
libtpu: 0.0.40
codegen_flags: <defaults>
</compile_context>

<pallas_src>
import functools
import math

import jax
import jax.numpy as jnp
import numpy as np
from jax import lax
from jax.experimental import pallas as pl
from jax.experimental.pallas import tpu as pltpu

BN_EPS = 1e-5
_LANE = 128


def _round_up(x, m):
    return (x + m - 1) // m * m


@functools.lru_cache(maxsize=None)
def _vmem_limit_bytes():
    """Per-chip scoped-VMEM cap: <=48 MiB on v7x (64 MiB phys), 96 MiB on v5e/v6e."""
    cap = 64 * 1024 * 1024
    try:
        cap = int(getattr(pltpu.get_tpu_info(), "vmem_capacity_bytes", cap))
    except Exception:  # non-TPU backend / interpret mode
        pass
    return int(max(32 * 1024 * 1024,
                   min(cap - 16 * 1024 * 1024, 96 * 1024 * 1024)))


def _pick_batch_block(batch, per_item_bytes, budget_bytes):
    """Largest divisor of `batch` whose per-step footprint fits the budget."""
    bblk = int(max(1, min(batch, budget_bytes // max(per_item_bytes, 1))))
    while batch % bblk:
        bblk -= 1
    return bblk


# ---------------------------------------------------------------------------
# Pass A: conv3x3 (MXU, f32 accumulation) + per-block BN partial statistics
# ---------------------------------------------------------------------------
def _conv_stats_im2col_kernel(p_ref, w_ref, conv_ref, stats_ref):
    """Layer-1 path: pre-im2col'd (Bblk, 4, P, 9*Cin) patches -> one matmul."""
    bblk, nph, npos, kk = p_ref.shape
    lhs = p_ref[...].reshape(bblk * nph * npos, kk)           # outer-dim merge: free
    acc = jnp.dot(lhs, w_ref[...], preferred_element_type=jnp.float32)
    conv_ref[...] = acc.reshape(conv_ref.shape)
    s = jnp.sum(acc, axis=0, keepdims=True)
    ss = jnp.sum(acc * acc, axis=0, keepdims=True)
    stats_ref[...] = jnp.concatenate([s, ss], axis=0)[None]   # (1, 2, Cp)


def _conv_stats_split_kernel(x_ref, w_ref, conv_ref, stats_ref, *, hp, wp):
    """Layers 2/3 path: parity/column-split input, 9-tap K-loop accumulation.

    x_ref[b, cidx, i*wp + j, c] with cidx = ay*4 + ax*2 + qx equals the padded
    input pixel at row 2*i + ay, col 2*(j + qx) + ax.
    """
    x = x_ref[...]                                            # (Bblk, 8, R, Cin)
    bblk, _, _, cin = x.shape
    cp = w_ref.shape[-1]
    npos = hp * wp
    acc = jnp.zeros((bblk * 4 * npos, cp), jnp.float32)
    for ky in range(3):
        for kx in range(3):
            tap = ky * 3 + kx
            slabs = []
            for py in range(2):
                for px in range(2):
                    ay, qy = (py + ky) % 2, (py + ky) // 2
                    ax, qx = (px + kx) % 2, (px + kx) // 2
                    cidx = ay * 4 + ax * 2 + qx
                    slabs.append(x[:, cidx, qy * wp: qy * wp + npos, :])
            slab = jnp.stack(slabs, axis=1)                   # (Bblk, 4, P, Cin)
            acc = acc + jnp.dot(slab.reshape(bblk * 4 * npos, cin),
                                w_ref[tap * cin:(tap + 1) * cin, :],
                                preferred_element_type=jnp.float32)
    conv_ref[...] = acc.reshape(conv_ref.shape)
    s = jnp.sum(acc, axis=0, keepdims=True)
    ss = jnp.sum(acc * acc, axis=0, keepdims=True)
    stats_ref[...] = jnp.concatenate([s, ss], axis=0)[None]


# ---------------------------------------------------------------------------
# Pass B: BN apply (precomputed scale/shift) + ReLU + 2x2 MaxPool (phase max)
# ---------------------------------------------------------------------------
def _bn_relu_pool_kernel(conv_ref, scale_ref, shift_ref, out_ref):
    y = jnp.maximum(conv_ref[...] * scale_ref[...] + shift_ref[...], 0.0)
    out_ref[...] = jnp.max(y, axis=1)                         # max over pool phases


# ---------------------------------------------------------------------------
# One ConvEtAl layer: conv3x3(pad=1, no bias) -> BN(batch stats) -> ReLU -> MaxPool2x2
# ---------------------------------------------------------------------------
def conv_bn_relu_pool(x_nhwc, w_oihw, gamma, beta, *, eps=BN_EPS):
    B, H, W, Cin = x_nhwc.shape
    Cout = w_oihw.shape[0]
    assert H % 2 == 0 and W % 2 == 0
    Hp, Wp = H // 2, W // 2
    P = Hp * Wp
    K = 9 * Cin
    Cp = _round_up(Cout, _LANE)          # lane-dense stores (layer1: 64 -> 128)
    vmem_limit = _vmem_limit_bytes()

    # Weight (ky, kx, cin) x cout -> (9*Cin, Cp) bf16; BN params zero-padded
    # (padded channels produce exactly 0 after BN+ReLU and are sliced off).
    w_mat = jnp.transpose(w_oihw, (2, 3, 1, 0)).reshape(K, Cout)
    w_mat = jnp.pad(w_mat, ((0, 0), (0, Cp - Cout))).astype(jnp.bfloat16)
    gamma_p = jnp.pad(gamma.astype(jnp.float32), (0, Cp - Cout))
    beta_p = jnp.pad(beta.astype(jnp.float32), (0, Cp - Cout))

    xp = jnp.pad(x_nhwc, ((0, 0), (1, 1), (1, 1), (0, 0))).astype(jnp.bfloat16)

    use_im2col = K <= _LANE              # layer1 (Cin=4): dense (4P, 36) LHS
    if use_im2col:
        phases = []
        for py in range(2):
            for px in range(2):
                taps = []
                for ky in range(3):
                    for kx in range(3):
                        sl = xp[:, py + ky: py + ky + 2 * Hp - 1: 2,
                                px + kx: px + kx + 2 * Wp - 1: 2, :]
                        taps.append(sl.reshape(B, P, Cin))
                phases.append(jnp.concatenate(taps, axis=-1))    # (B, P, 9*Cin)
        lhs = jnp.stack(phases, axis=1)                          # (B, 4, P, K)
        in_item_bytes = 4 * P * K * 2
        kern_a = _conv_stats_im2col_kernel
        in_block = (None, 4, P, K)
    else:
        R = (Hp + 1) * Wp
        cols = []
        for ay in (0, 1):
            for ax in (0, 1):
                for qx in (0, 1):
                    c = xp[:, ay::2, (ax + 2 * qx)::2, :][:, :, :Wp, :]
                    cols.append(c.reshape(B, R, Cin))
        lhs = jnp.stack(cols, axis=1)                            # (B, 8, R, Cin)
        in_item_bytes = 8 * R * Cin * 2
        kern_a = functools.partial(_conv_stats_split_kernel, hp=Hp, wp=Wp)
        in_block = (None, 8, R, Cin)

    conv_item_bytes = 4 * P * Cp * 4
    bblk_a = _pick_batch_block(B, 2 * (in_item_bytes + conv_item_bytes),
                               vmem_limit // 2 - 2 * K * Cp * 2)
    nb_a = B // bblk_a
    in_block = (bblk_a,) + in_block[1:]

    conv, part_stats = pl.pallas_call(
        kern_a,
        grid=(nb_a,),
        in_specs=[pl.BlockSpec(in_block, lambda b: (b, 0, 0, 0)),
                  pl.BlockSpec((K, Cp), lambda b: (0, 0))],
        out_specs=[pl.BlockSpec((bblk_a, 4, P, Cp), lambda b: (b, 0, 0, 0)),
                   pl.BlockSpec((1, 2, Cp), lambda b: (b, 0, 0))],
        out_shape=[jax.ShapeDtypeStruct((B, 4, P, Cp), jnp.float32),
                   jax.ShapeDtypeStruct((nb_a, 2, Cp), jnp.float32)],
        compiler_params=pltpu.CompilerParams(
            dimension_semantics=("parallel",),       # per-block partial stats
            vmem_limit_bytes=vmem_limit),
        cost_estimate=pl.CostEstimate(
            flops=2 * B * 4 * P * K * Cp, transcendentals=0,
            bytes_accessed=B * in_item_bytes + K * Cp * 2
            + B * conv_item_bytes + nb_a * 2 * Cp * 4),
    )(lhs, w_mat)

    # Fold partial stats; hoist BN scale/shift out of the per-step pass-B body.
    stats = jnp.sum(part_stats, axis=0)                          # (2, Cp)
    n = B * H * W
    mean = stats[0] / n
    var = jnp.maximum(stats[1] / n - mean * mean, 0.0)           # biased variance
    inv = lax.rsqrt(var + eps)
    scale = (gamma_p * inv).reshape(1, Cp)
    shift = (beta_p - mean * gamma_p * inv).reshape(1, Cp)

    out_item_bytes = P * Cp * 4
    bblk_b = _pick_batch_block(B, 2 * (conv_item_bytes + out_item_bytes),
                               vmem_limit // 2)
    nb_b = B // bblk_b

    pooled = pl.pallas_call(
        _bn_relu_pool_kernel,
        grid=(nb_b,),
        in_specs=[pl.BlockSpec((bblk_b, 4, P, Cp), lambda b: (b, 0, 0, 0)),
                  pl.BlockSpec((1, Cp), lambda b: (0, 0)),
                  pl.BlockSpec((1, Cp), lambda b: (0, 0))],
        out_specs=pl.BlockSpec((bblk_b, P, Cp), lambda b: (b, 0, 0)),
        out_shape=jax.ShapeDtypeStruct((B, P, Cp), jnp.float32),
        compiler_params=pltpu.CompilerParams(
            dimension_semantics=("parallel",),
            vmem_limit_bytes=vmem_limit),
        cost_estimate=pl.CostEstimate(
            flops=4 * B * 4 * P * Cp, transcendentals=0,
            bytes_accessed=B * conv_item_bytes + B * out_item_bytes + 4 * Cp * 4),
    )(conv, scale, shift)

    pooled = pooled.reshape(B, Hp, Wp, Cp)
    if Cp != Cout:
        pooled = pooled[..., :Cout]      # drop layer1's lane padding
    return pooled


def conv_etal_forward(x_nchw, params):
    """ConvEtAl.forward: layer1 -> layer2 -> layer3 -> flatten (NCHW order)."""
    x = jnp.transpose(x_nchw, (0, 2, 3, 1)).astype(jnp.float32)
    for (w, gamma, beta) in params:
        x = conv_bn_relu_pool(x, w, gamma, beta)
    B, H, W, C = x.shape
    return jnp.transpose(x, (0, 3, 1, 2)).reshape(B, C * H * W)


# ---------------------------------------------------------------------------
# Pure-JAX references
# ---------------------------------------------------------------------------
def reference_layer(x_nhwc, w_oihw, gamma, beta, eps=BN_EPS,
                    operand_dtype=jnp.float32):
    """One layer in plain JAX; operand_dtype=bf16 reproduces the kernel's MXU
    operand quantization (f32 accumulation either way)."""
    w_hwio = jnp.transpose(w_oihw, (2, 3, 1, 0))
    y = lax.conv_general_dilated(
        x_nhwc.astype(operand_dtype), w_hwio.astype(operand_dtype),
        (1, 1), 'SAME', dimension_numbers=('NHWC', 'HWIO', 'NHWC'),
        preferred_element_type=jnp.float32)
    mean = jnp.mean(y, axis=(0, 1, 2), keepdims=True)
    var = jnp.mean((y - mean) ** 2, axis=(0, 1, 2), keepdims=True)
    y = jnp.maximum((y - mean) * lax.rsqrt(var + eps) * gamma + beta, 0.0)
    B, H, W, C = y.shape
    return y.reshape(B, H // 2, 2, W // 2, 2, C).max(axis=(2, 4))


def reference_forward(x_nchw, params, operand_dtype=jnp.float32):
    x = jnp.transpose(x_nchw, (0, 2, 3, 1)).astype(jnp.float32)
    for (w, gamma, beta) in params:
        x = reference_layer(x, w, gamma, beta, operand_dtype=operand_dtype)
    B, H, W, C = x.shape
    return jnp.transpose(x, (0, 3, 1, 2)).reshape(B, C * H * W)


if __name__ == "__main__":
    key = jax.random.PRNGKey(0)
    k_x, k1, k2, k3 = jax.random.split(key, 4)

    B, Cin, H, W = 2, 4, 16, 16
    x = jax.random.normal(k_x, (B, Cin, H, W), jnp.float32)

    def init_conv(k, cout, cin):
        n = 3 * 3 * cout  # torch init: normal(0, sqrt(2 / (kH*kW*out_channels)))
        return jax.random.normal(k, (cout, cin, 3, 3), jnp.float32) * math.sqrt(2.0 / n)

    params = []
    for k, cin, cout in ((k1, Cin, 64), (k2, 64, 128), (k3, 128, 256)):
        params.append((init_conv(k, cout, cin),
                       jnp.ones((cout,), jnp.float32),      # BN weight = 1
                       jnp.zeros((cout,), jnp.float32)))    # BN bias = 0

    fwd = jax.jit(conv_etal_forward)
    out = jax.block_until_ready(fwd(x, params))
    assert out.shape == (B, 256 * (H // 8) * (W // 8))

    # (1) Per-layer algorithm check at matched precision: both sides see the
    #     same f32 input, quantize matmul operands to bf16 and accumulate in
    #     f32, so only summation-order noise remains.
    xk = jnp.transpose(x, (0, 2, 3, 1))
    for (w, gamma, beta) in params:
        got = conv_bn_relu_pool(xk, w, gamma, beta)
        want = reference_layer(xk, w, gamma, beta, operand_dtype=jnp.bfloat16)
        np.testing.assert_allclose(np.asarray(got), np.asarray(want),
                                   rtol=2e-3, atol=2e-3)
        xk = got

    # (2) End-to-end deviation vs. the pure-f32 reference, dominated by the
    #     bf16 quantization of the MXU operands across three conv+BN layers
    #     (BN's 1/sigma normalization amplifies ~0.4% operand rounding).
    ref = reference_forward(x, params, operand_dtype=jnp.float32)
    np.testing.assert_allclose(np.asarray(out), np.asarray(ref),
                               rtol=5e-2, atol=5e-2)
    print("KERNEL_OK")
</pallas_src>

<mosaic_0001>
module attributes {stable_mosaic.version = 11 : i64} {
  func.func @_conv_stats_im2col_kernel(%arg0: i32, %arg1: memref<2x4x64x36xbf16, #tpu.memory_space<vmem>>, %arg2: memref<36x128xbf16, #tpu.memory_space<vmem>>, %arg3: memref<2x4x64x128xf32, #tpu.memory_space<vmem>>, %arg4: memref<1x2x128xf32, #tpu.memory_space<vmem>>) attributes {dimension_semantics = [#tpu.dimension_semantics<parallel>], iteration_bounds = array<i64: 1>, scalar_prefetch = 0 : i64, scratch_operands = 0 : i64, tpu.core_type = #tpu.core_type<tc>, window_params = [{transform_indices = @transform_0, window_bounds = array<i64: 2, 4, 64, 36>}, {pipeline_mode = #tpu.pipeline_mode<synchronous>, transform_indices = @transform_1, window_bounds = array<i64: 36, 128>}, {transform_indices = @transform_2, window_bounds = array<i64: 2, 4, 64, 128>}, {transform_indices = @transform_3, window_bounds = array<i64: 1, 2, 128>}]} {
    %c0 = arith.constant 0 : index
    %c0_0 = arith.constant 0 : index
    %c0_1 = arith.constant 0 : index
    %c0_2 = arith.constant 0 : index
    %0 = vector.load %arg1[%c0, %c0_0, %c0_1, %c0_2] : memref<2x4x64x36xbf16, #tpu.memory_space<vmem>>, vector<2x4x64x36xbf16>
    %1 = vector.shape_cast %0 : vector<2x4x64x36xbf16> to vector<512x36xbf16>
    %c0_3 = arith.constant 0 : index
    %c0_4 = arith.constant 0 : index
    %2 = vector.load %arg2[%c0_3, %c0_4] : memref<36x128xbf16, #tpu.memory_space<vmem>>, vector<36x128xbf16>
    %cst = arith.constant dense<0.000000e+00> : vector<512x128xf32>
    %3 = tpu.matmul %1, %2, %cst {dimension_numbers = #tpu.dot_dimension_numbers<[1], [0], [0], [1], [0, 0, 1, 1], [], []>} : vector<512x36xbf16>, vector<36x128xbf16>, vector<512x128xf32> -> vector<512x128xf32>
    %4 = vector.shape_cast %3 : vector<512x128xf32> to vector<2x4x64x128xf32>
    %c0_5 = arith.constant 0 : index
    %c0_6 = arith.constant 0 : index
    %c0_7 = arith.constant 0 : index
    %c0_8 = arith.constant 0 : index
    %5 = vector.load %arg3[%c0_5, %c0_6, %c0_7, %c0_8] : memref<2x4x64x128xf32, #tpu.memory_space<vmem>>, vector<2x4x64x128xf32>
    tpu.vector_store %arg3[%c0_5, %c0_6, %c0_7, %c0_8], %4 {strides = array<i32>} : memref<2x4x64x128xf32, #tpu.memory_space<vmem>>, vector<2x4x64x128xf32>,
    %cst_9 = arith.constant dense<0.000000e+00> : vector<128xf32>
    %6 = vector.multi_reduction <add>, %3, %cst_9 [0] : vector<512x128xf32> to vector<128xf32>
    %7 = vector.shape_cast %6 : vector<128xf32> to vector<1x128xf32>
    %8 = arith.mulf %3, %3 : vector<512x128xf32>
    %cst_10 = arith.constant dense<0.000000e+00> : vector<128xf32>
    %9 = vector.multi_reduction <add>, %8, %cst_10 [0] : vector<512x128xf32> to vector<128xf32>
    %10 = vector.shape_cast %9 : vector<128xf32> to vector<1x128xf32>
    %11 = tpu.concatenate %7, %10 in 0 : vector<1x128xf32>, vector<1x128xf32> -> vector<2x128xf32>
    %12 = vector.shape_cast %11 : vector<2x128xf32> to vector<1x2x128xf32>
    %c0_11 = arith.constant 0 : index
    %c0_12 = arith.constant 0 : index
    %c0_13 = arith.constant 0 : index
    %13 = vector.load %arg4[%c0_11, %c0_12, %c0_13] : memref<1x2x128xf32, #tpu.memory_space<vmem>>, vector<1x2x128xf32>
    tpu.vector_store %arg4[%c0_11, %c0_12, %c0_13], %12 {strides = array<i32>} : memref<1x2x128xf32, #tpu.memory_space<vmem>>, vector<1x2x128xf32>,
    return
  }
  func.func @transform_0(%arg0: i32) -> (i32, i32, i32, i32) {
    %c0_i32 = arith.constant 0 : i32
    %c0_i32_0 = arith.constant 0 : i32
    %c0_i32_1 = arith.constant 0 : i32
    %c0_i32_2 = arith.constant 0 : i32
    return %arg0, %c0_i32, %c0_i32_0, %c0_i32_1 : i32, i32, i32, i32
  }
  func.func @transform_1(%arg0: i32) -> (i32, i32) {
    %c0_i32 = arith.constant 0 : i32
    %c0_i32_0 = arith.constant 0 : i32
    %c0_i32_1 = arith.constant 0 : i32
    return %c0_i32, %c0_i32_0 : i32, i32
  }
  func.func @transform_2(%arg0: i32) -> (i32, i32, i32, i32) {
    %c0_i32 = arith.constant 0 : i32
    %c0_i32_0 = arith.constant 0 : i32
    %c0_i32_1 = arith.constant 0 : i32
    %c0_i32_2 = arith.constant 0 : i32
    return %arg0, %c0_i32, %c0_i32_0, %c0_i32_1 : i32, i32, i32, i32
  }
  func.func @transform_3(%arg0: i32) -> (i32, i32, i32) {
    %c0_i32 = arith.constant 0 : i32
    %c0_i32_0 = arith.constant 0 : i32
    %c0_i32_1 = arith.constant 0 : i32
    return %arg0, %c0_i32, %c0_i32_0 : i32, i32, i32
  }
}

module attributes {stable_mosaic.version = 11 : i64} {
  func.func @_bn_relu_pool_kernel(%arg0: i32, %arg1: memref<2x4x64x128xf32, #tpu.memory_space<vmem>>, %arg2: memref<1x128xf32, #tpu.memory_space<vmem>>, %arg3: memref<1x128xf32, #tpu.memory_space<vmem>>, %arg4: memref<2x64x128xf32, #tpu.memory_space<vmem>>) attributes {dimension_semantics = [#tpu.dimension_semantics<parallel>], iteration_bounds = array<i64: 1>, scalar_prefetch = 0 : i64, scratch_operands = 0 : i64, tpu.core_type = #tpu.core_type<tc>, window_params = [{transform_indices = @transform_0, window_bounds = array<i64: 2, 4, 64, 128>}, {pipeline_mode = #tpu.pipeline_mode<synchronous>, transform_indices = @transform_1, window_bounds = array<i64: 1, 128>}, {pipeline_mode = #tpu.pipeline_mode<synchronous>, transform_indices = @transform_2, window_bounds = array<i64: 1, 128>}, {transform_indices = @transform_3, window_bounds = array<i64: 2, 64, 128>}]} {
    %c0 = arith.constant 0 : index
    %c0_0 = arith.constant 0 : index
    %c0_1 = arith.constant 0 : index
    %c0_2 = arith.constant 0 : index
    %0 = vector.load %arg1[%c0, %c0_0, %c0_1, %c0_2] : memref<2x4x64x128xf32, #tpu.memory_space<vmem>>, vector<2x4x64x128xf32>
    %c0_3 = arith.constant 0 : index
    %c0_4 = arith.constant 0 : index
    %1 = vector.load %arg2[%c0_3, %c0_4] : memref<1x128xf32, #tpu.memory_space<vmem>>, vector<1x128xf32>
    %2 = vector.shape_cast %1 : vector<1x128xf32> to vector<1x1x1x128xf32>
    %3 = vector.broadcast %2 : vector<1x1x1x128xf32> to vector<2x4x64x128xf32>
    %4 = arith.mulf %0, %3 : vector<2x4x64x128xf32>
    %c0_5 = arith.constant 0 : index
    %c0_6 = arith.constant 0 : index
    %5 = vector.load %arg3[%c0_5, %c0_6] : memref<1x128xf32, #tpu.memory_space<vmem>>, vector<1x128xf32>
    %6 = vector.shape_cast %5 : vector<1x128xf32> to vector<1x1x1x128xf32>
    %7 = vector.broadcast %6 : vector<1x1x1x128xf32> to vector<2x4x64x128xf32>
    %8 = arith.addf %4, %7 : vector<2x4x64x128xf32>
    %cst = arith.constant 0.000000e+00 : f32
    %9 = vector.broadcast %cst : f32 to vector<2x4x64x128xf32>
    %10 = arith.maximumf %8, %9 : vector<2x4x64x128xf32>
    %cst_7 = arith.constant dense<0xFF800000> : vector<2x64x128xf32>
    %11 = vector.multi_reduction <maximumf>, %10, %cst_7 [1] : vector<2x4x64x128xf32> to vector<2x64x128xf32>
    %c0_8 = arith.constant 0 : index
    %c0_9 = arith.constant 0 : index
    %c0_10 = arith.constant 0 : index
    %12 = vector.load %arg4[%c0_8, %c0_9, %c0_10] : memref<2x64x128xf32, #tpu.memory_space<vmem>>, vector<2x64x128xf32>
    tpu.vector_store %arg4[%c0_8, %c0_9, %c0_10], %11 {strides = array<i32>} : memref<2x64x128xf32, #tpu.memory_space<vmem>>, vector<2x64x128xf32>,
    return
  }
  func.func @transform_0(%arg0: i32) -> (i32, i32, i32, i32) {
    %c0_i32 = arith.constant 0 : i32
    %c0_i32_0 = arith.constant 0 : i32
    %c0_i32_1 = arith.constant 0 : i32
    %c0_i32_2 = arith.constant 0 : i32
    return %arg0, %c0_i32, %c0_i32_0, %c0_i32_1 : i32, i32, i32, i32
  }
  func.func @transform_1(%arg0: i32) -> (i32, i32) {
    %c0_i32 = arith.constant 0 : i32
    %c0_i32_0 = arith.constant 0 : i32
    %c0_i32_1 = arith.constant 0 : i32
    return %c0_i32, %c0_i32_0 : i32, i32
  }
  func.func @transform_2(%arg0: i32) -> (i32, i32) {
    %c0_i32 = arith.constant 0 : i32
    %c0_i32_0 = arith.constant 0 : i32
    %c0_i32_1 = arith.constant 0 : i32
    return %c0_i32, %c0_i32_0 : i32, i32
  }
  func.func @transform_3(%arg0: i32) -> (i32, i32, i32) {
    %c0_i32 = arith.constant 0 : i32
    %c0_i32_0 = arith.constant 0 : i32
    %c0_i32_1 = arith.constant 0 : i32
    return %arg0, %c0_i32, %c0_i32_0 : i32, i32, i32
  }
}

module attributes {stable_mosaic.version = 11 : i64} {
  func.func @_bn_relu_pool_kernel(%arg0: i32, %arg1: memref<2x4x16x128xf32, #tpu.memory_space<vmem>>, %arg2: memref<1x128xf32, #tpu.memory_space<vmem>>, %arg3: memref<1x128xf32, #tpu.memory_space<vmem>>, %arg4: memref<2x16x128xf32, #tpu.memory_space<vmem>>) attributes {dimension_semantics = [#tpu.dimension_semantics<parallel>], iteration_bounds = array<i64: 1>, scalar_prefetch = 0 : i64, scratch_operands = 0 : i64, tpu.core_type = #tpu.core_type<tc>, window_params = [{transform_indices = @transform_0, window_bounds = array<i64: 2, 4, 16, 128>}, {pipeline_mode = #tpu.pipeline_mode<synchronous>, transform_indices = @transform_1, window_bounds = array<i64: 1, 128>}, {pipeline_mode = #tpu.pipeline_mode<synchronous>, transform_indices = @transform_2, window_bounds = array<i64: 1, 128>}, {transform_indices = @transform_3, window_bounds = array<i64: 2, 16, 128>}]} {
    %c0 = arith.constant 0 : index
    %c0_0 = arith.constant 0 : index
    %c0_1 = arith.constant 0 : index
    %c0_2 = arith.constant 0 : index
    %0 = vector.load %arg1[%c0, %c0_0, %c0_1, %c0_2] : memref<2x4x16x128xf32, #tpu.memory_space<vmem>>, vector<2x4x16x128xf32>
    %c0_3 = arith.constant 0 : index
    %c0_4 = arith.constant 0 : index
    %1 = vector.load %arg2[%c0_3, %c0_4] : memref<1x128xf32, #tpu.memory_space<vmem>>, vector<1x128xf32>
    %2 = vector.shape_cast %1 : vector<1x128xf32> to vector<1x1x1x128xf32>
    %3 = vector.broadcast %2 : vector<1x1x1x128xf32> to vector<2x4x16x128xf32>
    %4 = arith.mulf %0, %3 : vector<2x4x16x128xf32>
    %c0_5 = arith.constant 0 : index
    %c0_6 = arith.constant 0 : index
    %5 = vector.load %arg3[%c0_5, %c0_6] : memref<1x128xf32, #tpu.memory_space<vmem>>, vector<1x128xf32>
    %6 = vector.shape_cast %5 : vector<1x128xf32> to vector<1x1x1x128xf32>
    %7 = vector.broadcast %6 : vector<1x1x1x128xf32> to vector<2x4x16x128xf32>
    %8 = arith.addf %4, %7 : vector<2x4x16x128xf32>
    %cst = arith.constant 0.000000e+00 : f32
    %9 = vector.broadcast %cst : f32 to vector<2x4x16x128xf32>
    %10 = arith.maximumf %8, %9 : vector<2x4x16x128xf32>
    %cst_7 = arith.constant dense<0xFF800000> : vector<2x16x128xf32>
    %11 = vector.multi_reduction <maximumf>, %10, %cst_7 [1] : vector<2x4x16x128xf32> to vector<2x16x128xf32>
    %c0_8 = arith.constant 0 : index
    %c0_9 = arith.constant 0 : index
    %c0_10 = arith.constant 0 : index
    %12 = vector.load %arg4[%c0_8, %c0_9, %c0_10] : memref<2x16x128xf32, #tpu.memory_space<vmem>>, vector<2x16x128xf32>
    tpu.vector_store %arg4[%c0_8, %c0_9, %c0_10], %11 {strides = array<i32>} : memref<2x16x128xf32, #tpu.memory_space<vmem>>, vector<2x16x128xf32>,
    return
  }
  func.func @transform_0(%arg0: i32) -> (i32, i32, i32, i32) {
    %c0_i32 = arith.constant 0 : i32
    %c0_i32_0 = arith.constant 0 : i32
    %c0_i32_1 = arith.constant 0 : i32
    %c0_i32_2 = arith.constant 0 : i32
    return %arg0, %c0_i32, %c0_i32_0, %c0_i32_1 : i32, i32, i32, i32
  }
  func.func @transform_1(%arg0: i32) -> (i32, i32) {
    %c0_i32 = arith.constant 0 : i32
    %c0_i32_0 = arith.constant 0 : i32
    %c0_i32_1 = arith.constant 0 : i32
    return %c0_i32, %c0_i32_0 : i32, i32
  }
  func.func @transform_2(%arg0: i32) -> (i32, i32) {
    %c0_i32 = arith.constant 0 : i32
    %c0_i32_0 = arith.constant 0 : i32
    %c0_i32_1 = arith.constant 0 : i32
    return %c0_i32, %c0_i32_0 : i32, i32
  }
  func.func @transform_3(%arg0: i32) -> (i32, i32, i32) {
    %c0_i32 = arith.constant 0 : i32
    %c0_i32_0 = arith.constant 0 : i32
    %c0_i32_1 = arith.constant 0 : i32
    return %arg0, %c0_i32, %c0_i32_0 : i32, i32, i32
  }
}

module attributes {stable_mosaic.version = 11 : i64} {
  func.func @_conv_stats_split_kernel(%arg0: i32, %arg1: memref<2x8x20x64xbf16, #tpu.memory_space<vmem>>, %arg2: memref<576x128xbf16, #tpu.memory_space<vmem>>, %arg3: memref<2x4x16x128xf32, #tpu.memory_space<vmem>>, %arg4: memref<1x2x128xf32, #tpu.memory_space<vmem>>) attributes {dimension_semantics = [#tpu.dimension_semantics<parallel>], iteration_bounds = array<i64: 1>, scalar_prefetch = 0 : i64, scratch_operands = 0 : i64, tpu.core_type = #tpu.core_type<tc>, window_params = [{transform_indices = @transform_0, window_bounds = array<i64: 2, 8, 20, 64>}, {pipeline_mode = #tpu.pipeline_mode<synchronous>, transform_indices = @transform_1, window_bounds = array<i64: 576, 128>}, {transform_indices = @transform_2, window_bounds = array<i64: 2, 4, 16, 128>}, {transform_indices = @transform_3, window_bounds = array<i64: 1, 2, 128>}]} {
    %c0 = arith.constant 0 : index
    %c0_0 = arith.constant 0 : index
    %c0_1 = arith.constant 0 : index
    %c0_2 = arith.constant 0 : index
    %0 = vector.load %arg1[%c0, %c0_0, %c0_1, %c0_2] : memref<2x8x20x64xbf16, #tpu.memory_space<vmem>>, vector<2x8x20x64xbf16>
    %cst = arith.constant 0.000000e+00 : f32
    %1 = vector.broadcast %cst : f32 to vector<128x128xf32>
    %2 = vector.extract_strided_slice %0 {offsets = [0, 0, 0, 0], sizes = [2, 1, 16, 64], strides = [1, 1, 1, 1]} : vector<2x8x20x64xbf16> to vector<2x1x16x64xbf16>
    %3 = vector.shape_cast %2 : vector<2x1x16x64xbf16> to vector<2x16x64xbf16>
    %4 = vector.extract_strided_slice %0 {offsets = [0, 2, 0, 0], sizes = [2, 1, 16, 64], strides = [1, 1, 1, 1]} : vector<2x8x20x64xbf16> to vector<2x1x16x64xbf16>
    %5 = vector.shape_cast %4 : vector<2x1x16x64xbf16> to vector<2x16x64xbf16>
    %6 = vector.extract_strided_slice %0 {offsets = [0, 4, 0, 0], sizes = [2, 1, 16, 64], strides = [1, 1, 1, 1]} : vector<2x8x20x64xbf16> to vector<2x1x16x64xbf16>
    %7 = vector.shape_cast %6 : vector<2x1x16x64xbf16> to vector<2x16x64xbf16>
    %8 = vector.extract_strided_slice %0 {offsets = [0, 6, 0, 0], sizes = [2, 1, 16, 64], strides = [1, 1, 1, 1]} : vector<2x8x20x64xbf16> to vector<2x1x16x64xbf16>
    %9 = vector.shape_cast %8 : vector<2x1x16x64xbf16> to vector<2x16x64xbf16>
    %10 = vector.shape_cast %3 : vector<2x16x64xbf16> to vector<2x1x16x64xbf16>
    %11 = vector.shape_cast %5 : vector<2x16x64xbf16> to vector<2x1x16x64xbf16>
    %12 = vector.shape_cast %7 : vector<2x16x64xbf16> to vector<2x1x16x64xbf16>
    %13 = vector.shape_cast %9 : vector<2x16x64xbf16> to vector<2x1x16x64xbf16>
    %14 = tpu.concatenate %10, %11, %12, %13 in 1 : vector<2x1x16x64xbf16>, vector<2x1x16x64xbf16>, vector<2x1x16x64xbf16>, vector<2x1x16x64xbf16> -> vector<2x4x16x64xbf16>
    %15 = vector.shape_cast %14 : vector<2x4x16x64xbf16> to vector<128x64xbf16>
    %c0_3 = arith.constant 0 : index
    %c0_4 = arith.constant 0 : index
    %16 = vector.load %arg2[%c0_3, %c0_4] : memref<576x128xbf16, #tpu.memory_space<vmem>>, vector<64x128xbf16>
    %cst_5 = arith.constant dense<0.000000e+00> : vector<128x128xf32>
    %17 = tpu.matmul %15, %16, %cst_5 {dimension_numbers = #tpu.dot_dimension_numbers<[1], [0], [0], [1], [0, 0, 1, 1], [], []>} : vector<128x64xbf16>, vector<64x128xbf16>, vector<128x128xf32> -> vector<128x128xf32>
    %18 = arith.addf %1, %17 : vector<128x128xf32>
    %19 = vector.extract_strided_slice %0 {offsets = [0, 2, 0, 0], sizes = [2, 1, 16, 64], strides = [1, 1, 1, 1]} : vector<2x8x20x64xbf16> to vector<2x1x16x64xbf16>
    %20 = vector.shape_cast %19 : vector<2x1x16x64xbf16> to vector<2x16x64xbf16>
    %21 = vector.extract_strided_slice %0 {offsets = [0, 1, 0, 0], sizes = [2, 1, 16, 64], strides = [1, 1, 1, 1]} : vector<2x8x20x64xbf16> to vector<2x1x16x64xbf16>
    %22 = vector.shape_cast %21 : vector<2x1x16x64xbf16> to vector<2x16x64xbf16>
    %23 = vector.extract_strided_slice %0 {offsets = [0, 6, 0, 0], sizes = [2, 1, 16, 64], strides = [1, 1, 1, 1]} : vector<2x8x20x64xbf16> to vector<2x1x16x64xbf16>
    %24 = vector.shape_cast %23 : vector<2x1x16x64xbf16> to vector<2x16x64xbf16>
    %25 = vector.extract_strided_slice %0 {offsets = [0, 5, 0, 0], sizes = [2, 1, 16, 64], strides = [1, 1, 1, 1]} : vector<2x8x20x64xbf16> to vector<2x1x16x64xbf16>
    %26 = vector.shape_cast %25 : vector<2x1x16x64xbf16> to vector<2x16x64xbf16>
    %27 = vector.shape_cast %20 : vector<2x16x64xbf16> to vector<2x1x16x64xbf16>
    %28 = vector.shape_cast %22 : vector<2x16x64xbf16> to vector<2x1x16x64xbf16>
    %29 = vector.shape_cast %24 : vector<2x16x64xbf16> to vector<2x1x16x64xbf16>
    %30 = vector.shape_cast %26 : vector<2x16x64xbf16> to vector<2x1x16x64xbf16>
    %31 = tpu.concatenate %27, %28, %29, %30 in 1 : vector<2x1x16x64xbf16>, vector<2x1x16x64xbf16>, vector<2x1x16x64xbf16>, vector<2x1x16x64xbf16> -> vector<2x4x16x64xbf16>
    %32 = vector.shape_cast %31 : vector<2x4x16x64xbf16> to vector<128x64xbf16>
    %c64 = arith.constant 64 : index
    %c0_6 = arith.constant 0 : index
    %33 = vector.load %arg2[%c64, %c0_6] : memref<576x128xbf16, #tpu.memory_space<vmem>>, vector<64x128xbf16>
    %cst_7 = arith.constant dense<0.000000e+00> : vector<128x128xf32>
    %34 = tpu.matmul %32, %33, %cst_7 {dimension_numbers = #tpu.dot_dimension_numbers<[1], [0], [0], [1], [0, 0, 1, 1], [], []>} : vector<128x64xbf16>, vector<64x128xbf16>, vector<128x128xf32> -> vector<128x128xf32>
    %35 = arith.addf %18, %34 : vector<128x128xf32>
    %36 = vector.extract_strided_slice %0 {offsets = [0, 1, 0, 0], sizes = [2, 1, 16, 64], strides = [1, 1, 1, 1]} : vector<2x8x20x64xbf16> to vector<2x1x16x64xbf16>
    %37 = vector.shape_cast %36 : vector<2x1x16x64xbf16> to vector<2x16x64xbf16>
    %38 = vector.extract_strided_slice %0 {offsets = [0, 3, 0, 0], sizes = [2, 1, 16, 64], strides = [1, 1, 1, 1]} : vector<2x8x20x64xbf16> to vector<2x1x16x64xbf16>
    %39 = vector.shape_cast %38 : vector<2x1x16x64xbf16> to vector<2x16x64xbf16>
    %40 = vector.extract_strided_slice %0 {offsets = [0, 5, 0, 0], sizes = [2, 1, 16, 64], strides = [1, 1, 1, 1]} : vector<2x8x20x64xbf16> to vector<2x1x16x64xbf16>
    %41 = vector.shape_cast %40 : vector<2x1x16x64xbf16> to vector<2x16x64xbf16>
    %42 = vector.extract_strided_slice %0 {offsets = [0, 7, 0, 0], sizes = [2, 1, 16, 64], strides = [1, 1, 1, 1]} : vector<2x8x20x64xbf16> to vector<2x1x16x64xbf16>
    %43 = vector.shape_cast %42 : vector<2x1x16x64xbf16> to vector<2x16x64xbf16>
    %44 = vector.shape_cast %37 : vector<2x16x64xbf16> to vector<2x1x16x64xbf16>
    %45 = vector.shape_cast %39 : vector<2x16x64xbf16> to vector<2x1x16x64xbf16>
    %46 = vector.shape_cast %41 : vector<2x16x64xbf16> to vector<2x1x16x64xbf16>
    %47 = vector.shape_cast %43 : vector<2x16x64xbf16> to vector<2x1x16x64xbf16>
    %48 = tpu.concatenate %44, %45, %46, %47 in 1 : vector<2x1x16x64xbf16>, vector<2x1x16x64xbf16>, vector<2x1x16x64xbf16>, vector<2x1x16x64xbf16> -> vector<2x4x16x64xbf16>
    %49 = vector.shape_cast %48 : vector<2x4x16x64xbf16> to vector<128x64xbf16>
    %c128 = arith.constant 128 : index
    %c0_8 = arith.constant 0 : index
    %50 = vector.load %arg2[%c128, %c0_8] : memref<576x128xbf16, #tpu.memory_space<vmem>>, vector<64x128xbf16>
    %cst_9 = arith.constant dense<0.000000e+00> : vector<128x128xf32>
    %51 = tpu.matmul %49, %50, %cst_9 {dimension_numbers = #tpu.dot_dimension_numbers<[1], [0], [0], [1], [0, 0, 1, 1], [], []>} : vector<128x64xbf16>, vector<64x128xbf16>, vector<128x128xf32> -> vector<128x128xf32>
    %52 = arith.addf %35, %51 : vector<128x128xf32>
    %53 = vector.extract_strided_slice %0 {offsets = [0, 4, 0, 0], sizes = [2, 1, 16, 64], strides = [1, 1, 1, 1]} : vector<2x8x20x64xbf16> to vector<2x1x16x64xbf16>
    %54 = vector.shape_cast %53 : vector<2x1x16x64xbf16> to vector<2x16x64xbf16>
    %55 = vector.extract_strided_slice %0 {offsets = [0, 6, 0, 0], sizes = [2, 1, 16, 64], strides = [1, 1, 1, 1]} : vector<2x8x20x64xbf16> to vector<2x1x16x64xbf16>
    %56 = vector.shape_cast %55 : vector<2x1x16x64xbf16> to vector<2x16x64xbf16>
    %57 = vector.extract_strided_slice %0 {offsets = [0, 0, 4, 0], sizes = [2, 1, 16, 64], strides = [1, 1, 1, 1]} : vector<2x8x20x64xbf16> to vector<2x1x16x64xbf16>
    %58 = vector.shape_cast %57 : vector<2x1x16x64xbf16> to vector<2x16x64xbf16>
    %59 = vector.extract_strided_slice %0 {offsets = [0, 2, 4, 0], sizes = [2, 1, 16, 64], strides = [1, 1, 1, 1]} : vector<2x8x20x64xbf16> to vector<2x1x16x64xbf16>
    %60 = vector.shape_cast %59 : vector<2x1x16x64xbf16> to vector<2x16x64xbf16>
    %61 = vector.shape_cast %54 : vector<2x16x64xbf16> to vector<2x1x16x64xbf16>
    %62 = vector.shape_cast %56 : vector<2x16x64xbf16> to vector<2x1x16x64xbf16>
    %63 = vector.shape_cast %58 : vector<2x16x64xbf16> to vector<2x1x16x64xbf16>
    %64 = vector.shape_cast %60 : vector<2x16x64xbf16> to vector<2x1x16x64xbf16>
    %65 = tpu.concatenate %61, %62, %63, %64 in 1 : vector<2x1x16x64xbf16>, vector<2x1x16x64xbf16>, vector<2x1x16x64xbf16>, vector<2x1x16x64xbf16> -> vector<2x4x16x64xbf16>
    %66 = vector.shape_cast %65 : vector<2x4x16x64xbf16> to vector<128x64xbf16>
    %c192 = arith.constant 192 : index
    %c0_10 = arith.constant 0 : index
    %67 = vector.load %arg2[%c192, %c0_10] : memref<576x128xbf16, #tpu.memory_space<vmem>>, vector<64x128xbf16>
    %cst_11 = arith.constant dense<0.000000e+00> : vector<128x128xf32>
    %68 = tpu.matmul %66, %67, %cst_11 {dimension_numbers = #tpu.dot_dimension_numbers<[1], [0], [0], [1], [0, 0, 1, 1], [], []>} : vector<128x64xbf16>, vector<64x128xbf16>, vector<128x128xf32> -> vector<128x128xf32>
    %69 = arith.addf %52, %68 : vector<128x128xf32>
    %70 = vector.extract_strided_slice %0 {offsets = [0, 6, 0, 0], sizes = [2, 1, 16, 64], strides = [1, 1, 1, 1]} : vector<2x8x20x64xbf16> to vector<2x1x16x64xbf16>
    %71 = vector.shape_cast %70 : vector<2x1x16x64xbf16> to vector<2x16x64xbf16>
    %72 = vector.extract_strided_slice %0 {offsets = [0, 5, 0, 0], sizes = [2, 1, 16, 64], strides = [1, 1, 1, 1]} : vector<2x8x20x64xbf16> to vector<2x1x16x64xbf16>
    %73 = vector.shape_cast %72 : vector<2x1x16x64xbf16> to vector<2x16x64xbf16>
    %74 = vector.extract_strided_slice %0 {offsets = [0, 2, 4, 0], sizes = [2, 1, 16, 64], strides = [1, 1, 1, 1]} : vector<2x8x20x64xbf16> to vector<2x1x16x64xbf16>
    %75 = vector.shape_cast %74 : vector<2x1x16x64xbf16> to vector<2x16x64xbf16>
    %76 = vector.extract_strided_slice %0 {offsets = [0, 1, 4, 0], sizes = [2, 1, 16, 64], strides = [1, 1, 1, 1]} : vector<2x8x20x64xbf16> to vector<2x1x16x64xbf16>
    %77 = vector.shape_cast %76 : vector<2x1x16x64xbf16> to vector<2x16x64xbf16>
    %78 = vector.shape_cast %71 : vector<2x16x64xbf16> to vector<2x1x16x64xbf16>
    %79 = vector.shape_cast %73 : vector<2x16x64xbf16> to vector<2x1x16x64xbf16>
    %80 = vector.shape_cast %75 : vector<2x16x64xbf16> to vector<2x1x16x64xbf16>
    %81 = vector.shape_cast %77 : vector<2x16x64xbf16> to vector<2x1x16x64xbf16>
    %82 = tpu.concatenate %78, %79, %80, %81 in 1 : vector<2x1x16x64xbf16>, vector<2x1x16x64xbf16>, vector<2x1x16x64xbf16>, vector<2x1x16x64xbf16> -> vector<2x4x16x64xbf16>
    %83 = vector.shape_cast %82 : vector<2x4x16x64xbf16> to vector<128x64xbf16>
    %c256 = arith.constant 256 : index
    %c0_12 = arith.constant 0 : index
    %84 = vector.load %arg2[%c256, %c0_12] : memref<576x128xbf16, #tpu.memory_space<vmem>>, vector<64x128xbf16>
    %cst_13 = arith.constant dense<0.000000e+00> : vector<128x128xf32>
    %85 = tpu.matmul %83, %84, %cst_13 {dimension_numbers = #tpu.dot_dimension_numbers<[1], [0], [0], [1], [0, 0, 1, 1], [], []>} : vector<128x64xbf16>, vector<64x128xbf16>, vector<128x128xf32> -> vector<128x128xf32>
    %86 = arith.addf %69, %85 : vector<128x128xf32>
    %87 = vector.extract_strided_slice %0 {offsets = [0, 5, 0, 0], sizes = [2, 1, 16, 64], strides = [1, 1, 1, 1]} : vector<2x8x20x64xbf16> to vector<2x1x16x64xbf16>
    %88 = vector.shape_cast %87 : vector<2x1x16x64xbf16> to vector<2x16x64xbf16>
    %89 = vector.extract_strided_slice %0 {offsets = [0, 7, 0, 0], sizes = [2, 1, 16, 64], strides = [1, 1, 1, 1]} : vector<2x8x20x64xbf16> to vector<2x1x16x64xbf16>
    %90 = vector.shape_cast %89 : vector<2x1x16x64xbf16> to vector<2x16x64xbf16>
    %91 = vector.extract_strided_slice %0 {offsets = [0, 1, 4, 0], sizes = [2, 1, 16, 64], strides = [1, 1, 1, 1]} : vector<2x8x20x64xbf16> to vector<2x1x16x64xbf16>
    %92 = vector.shape_cast %91 : vector<2x1x16x64xbf16> to vector<2x16x64xbf16>
    %93 = vector.extract_strided_slice %0 {offsets = [0, 3, 4, 0], sizes = [2, 1, 16, 64], strides = [1, 1, 1, 1]} : vector<2x8x20x64xbf16> to vector<2x1x16x64xbf16>
    %94 = vector.shape_cast %93 : vector<2x1x16x64xbf16> to vector<2x16x64xbf16>
    %95 = vector.shape_cast %88 : vector<2x16x64xbf16> to vector<2x1x16x64xbf16>
    %96 = vector.shape_cast %90 : vector<2x16x64xbf16> to vector<2x1x16x64xbf16>
    %97 = vector.shape_cast %92 : vector<2x16x64xbf16> to vector<2x1x16x64xbf16>
    %98 = vector.shape_cast %94 : vector<2x16x64xbf16> to vector<2x1x16x64xbf16>
    %99 = tpu.concatenate %95, %96, %97, %98 in 1 : vector<2x1x16x64xbf16>, vector<2x1x16x64xbf16>, vector<2x1x16x64xbf16>, vector<2x1x16x64xbf16> -> vector<2x4x16x64xbf16>
    %100 = vector.shape_cast %99 : vector<2x4x16x64xbf16> to vector<128x64xbf16>
    %c320 = arith.constant 320 : index
    %c0_14 = arith.constant 0 : index
    %101 = vector.load %arg2[%c320, %c0_14] : memref<576x128xbf16, #tpu.memory_space<vmem>>, vector<64x128xbf16>
    %cst_15 = arith.constant dense<0.000000e+00> : vector<128x128xf32>
    %102 = tpu.matmul %100, %101, %cst_15 {dimension_numbers = #tpu.dot_dimension_numbers<[1], [0], [0], [1], [0, 0, 1, 1], [], []>} : vector<128x64xbf16>, vector<64x128xbf16>, vector<128x128xf32> -> vector<128x128xf32>
    %103 = arith.addf %86, %102 : vector<128x128xf32>
    %104 = vector.extract_strided_slice %0 {offsets = [0, 0, 4, 0], sizes = [2, 1, 16, 64], strides = [1, 1, 1, 1]} : vector<2x8x20x64xbf16> to vector<2x1x16x64xbf16>
    %105 = vector.shape_cast %104 : vector<2x1x16x64xbf16> to vector<2x16x64xbf16>
    %106 = vector.extract_strided_slice %0 {offsets = [0, 2, 4, 0], sizes = [2, 1, 16, 64], strides = [1, 1, 1, 1]} : vector<2x8x20x64xbf16> to vector<2x1x16x64xbf16>
    %107 = vector.shape_cast %106 : vector<2x1x16x64xbf16> to vector<2x16x64xbf16>
    %108 = vector.extract_strided_slice %0 {offsets = [0, 4, 4, 0], sizes = [2, 1, 16, 64], strides = [1, 1, 1, 1]} : vector<2x8x20x64xbf16> to vector<2x1x16x64xbf16>
    %109 = vector.shape_cast %108 : vector<2x1x16x64xbf16> to vector<2x16x64xbf16>
    %110 = vector.extract_strided_slice %0 {offsets = [0, 6, 4, 0], sizes = [2, 1, 16, 64], strides = [1, 1, 1, 1]} : vector<2x8x20x64xbf16> to vector<2x1x16x64xbf16>
    %111 = vector.shape_cast %110 : vector<2x1x16x64xbf16> to vector<2x16x64xbf16>
    %112 = vector.shape_cast %105 : vector<2x16x64xbf16> to vector<2x1x16x64xbf16>
    %113 = vector.shape_cast %107 : vector<2x16x64xbf16> to vector<2x1x16x64xbf16>
    %114 = vector.shape_cast %109 : vector<2x16x64xbf16> to vector<2x1x16x64xbf16>
    %115 = vector.shape_cast %111 : vector<2x16x64xbf16> to vector<2x1x16x64xbf16>
    %116 = tpu.concatenate %112, %113, %114, %115 in 1 : vector<2x1x16x64xbf16>, vector<2x1x16x64xbf16>, vector<2x1x16x64xbf16>, vector<2x1x16x64xbf16> -> vector<2x4x16x64xbf16>
    %117 = vector.shape_cast %116 : vector<2x4x16x64xbf16> to vector<128x64xbf16>
    %c384 = arith.constant 384 : index
    %c0_16 = arith.constant 0 : index
    %118 = vector.load %arg2[%c384, %c0_16] : memref<576x128xbf16, #tpu.memory_space<vmem>>, vector<64x128xbf16>
    %cst_17 = arith.constant dense<0.000000e+00> : vector<128x128xf32>
    %119 = tpu.matmul %117, %118, %cst_17 {dimension_numbers = #tpu.dot_dimension_numbers<[1], [0], [0], [1], [0, 0, 1, 1], [], []>} : vector<128x64xbf16>, vector<64x128xbf16>, vector<128x128xf32> -> vector<128x128xf32>
    %120 = arith.addf %103, %119 : vector<128x128xf32>
    %121 = vector.extract_strided_slice %0 {offsets = [0, 2, 4, 0], sizes = [2, 1, 16, 64], strides = [1, 1, 1, 1]} : vector<2x8x20x64xbf16> to vector<2x1x16x64xbf16>
    %122 = vector.shape_cast %121 : vector<2x1x16x64xbf16> to vector<2x16x64xbf16>
    %123 = vector.extract_strided_slice %0 {offsets = [0, 1, 4, 0], sizes = [2, 1, 16, 64], strides = [1, 1, 1, 1]} : vector<2x8x20x64xbf16> to vector<2x1x16x64xbf16>
    %124 = vector.shape_cast %123 : vector<2x1x16x64xbf16> to vector<2x16x64xbf16>
    %125 = vector.extract_strided_slice %0 {offsets = [0, 6, 4, 0], sizes = [2, 1, 16, 64], strides = [1, 1, 1, 1]} : vector<2x8x20x64xbf16> to vector<2x1x16x64xbf16>
    %126 = vector.shape_cast %125 : vector<2x1x16x64xbf16> to vector<2x16x64xbf16>
    %127 = vector.extract_strided_slice %0 {offsets = [0, 5, 4, 0], sizes = [2, 1, 16, 64], strides = [1, 1, 1, 1]} : vector<2x8x20x64xbf16> to vector<2x1x16x64xbf16>
    %128 = vector.shape_cast %127 : vector<2x1x16x64xbf16> to vector<2x16x64xbf16>
    %129 = vector.shape_cast %122 : vector<2x16x64xbf16> to vector<2x1x16x64xbf16>
    %130 = vector.shape_cast %124 : vector<2x16x64xbf16> to vector<2x1x16x64xbf16>
    %131 = vector.shape_cast %126 : vector<2x16x64xbf16> to vector<2x1x16x64xbf16>
    %132 = vector.shape_cast %128 : vector<2x16x64xbf16> to vector<2x1x16x64xbf16>
    %133 = tpu.concatenate %129, %130, %131, %132 in 1 : vector<2x1x16x64xbf16>, vector<2x1x16x64xbf16>, vector<2x1x16x64xbf16>, vector<2x1x16x64xbf16> -> vector<2x4x16x64xbf16>
    %134 = vector.shape_cast %133 : vector<2x4x16x64xbf16> to vector<128x64xbf16>
    %c448 = arith.constant 448 : index
    %c0_18 = arith.constant 0 : index
    %135 = vector.load %arg2[%c448, %c0_18] : memref<576x128xbf16, #tpu.memory_space<vmem>>, vector<64x128xbf16>
    %cst_19 = arith.constant dense<0.000000e+00> : vector<128x128xf32>
    %136 = tpu.matmul %134, %135, %cst_19 {dimension_numbers = #tpu.dot_dimension_numbers<[1], [0], [0], [1], [0, 0, 1, 1], [], []>} : vector<128x64xbf16>, vector<64x128xbf16>, vector<128x128xf32> -> vector<128x128xf32>
    %137 = arith.addf %120, %136 : vector<128x128xf32>
    %138 = vector.extract_strided_slice %0 {offsets = [0, 1, 4, 0], sizes = [2, 1, 16, 64], strides = [1, 1, 1, 1]} : vector<2x8x20x64xbf16> to vector<2x1x16x64xbf16>
    %139 = vector.shape_cast %138 : vector<2x1x16x64xbf16> to vector<2x16x64xbf16>
    %140 = vector.extract_strided_slice %0 {offsets = [0, 3, 4, 0], sizes = [2, 1, 16, 64], strides = [1, 1, 1, 1]} : vector<2x8x20x64xbf16> to vector<2x1x16x64xbf16>
    %141 = vector.shape_cast %140 : vector<2x1x16x64xbf16> to vector<2x16x64xbf16>
    %142 = vector.extract_strided_slice %0 {offsets = [0, 5, 4, 0], sizes = [2, 1, 16, 64], strides = [1, 1, 1, 1]} : vector<2x8x20x64xbf16> to vector<2x1x16x64xbf16>
    %143 = vector.shape_cast %142 : vector<2x1x16x64xbf16> to vector<2x16x64xbf16>
    %144 = vector.extract_strided_slice %0 {offsets = [0, 7, 4, 0], sizes = [2, 1, 16, 64], strides = [1, 1, 1, 1]} : vector<2x8x20x64xbf16> to vector<2x1x16x64xbf16>
    %145 = vector.shape_cast %144 : vector<2x1x16x64xbf16> to vector<2x16x64xbf16>
    %146 = vector.shape_cast %139 : vector<2x16x64xbf16> to vector<2x1x16x64xbf16>
    %147 = vector.shape_cast %141 : vector<2x16x64xbf16> to vector<2x1x16x64xbf16>
    %148 = vector.shape_cast %143 : vector<2x16x64xbf16> to vector<2x1x16x64xbf16>
    %149 = vector.shape_cast %145 : vector<2x16x64xbf16> to vector<2x1x16x64xbf16>
    %150 = tpu.concatenate %146, %147, %148, %149 in 1 : vector<2x1x16x64xbf16>, vector<2x1x16x64xbf16>, vector<2x1x16x64xbf16>, vector<2x1x16x64xbf16> -> vector<2x4x16x64xbf16>
    %151 = vector.shape_cast %150 : vector<2x4x16x64xbf16> to vector<128x64xbf16>
    %c512 = arith.constant 512 : index
    %c0_20 = arith.constant 0 : index
    %152 = vector.load %arg2[%c512, %c0_20] : memref<576x128xbf16, #tpu.memory_space<vmem>>, vector<64x128xbf16>
    %cst_21 = arith.constant dense<0.000000e+00> : vector<128x128xf32>
    %153 = tpu.matmul %151, %152, %cst_21 {dimension_numbers = #tpu.dot_dimension_numbers<[1], [0], [0], [1], [0, 0, 1, 1], [], []>} : vector<128x64xbf16>, vector<64x128xbf16>, vector<128x128xf32> -> vector<128x128xf32>
    %154 = arith.addf %137, %153 : vector<128x128xf32>
    %155 = vector.shape_cast %154 : vector<128x128xf32> to vector<2x4x16x128xf32>
    %c0_22 = arith.constant 0 : index
    %c0_23 = arith.constant 0 : index
    %c0_24 = arith.constant 0 : index
    %c0_25 = arith.constant 0 : index
    %156 = vector.load %arg3[%c0_22, %c0_23, %c0_24, %c0_25] : memref<2x4x16x128xf32, #tpu.memory_space<vmem>>, vector<2x4x16x128xf32>
    tpu.vector_store %arg3[%c0_22, %c0_23, %c0_24, %c0_25], %155 {strides = array<i32>} : memref<2x4x16x128xf32, #tpu.memory_space<vmem>>, vector<2x4x16x128xf32>,
    %cst_26 = arith.constant dense<0.000000e+00> : vector<128xf32>
    %157 = vector.multi_reduction <add>, %154, %cst_26 [0] : vector<128x128xf32> to vector<128xf32>
    %158 = vector.shape_cast %157 : vector<128xf32> to vector<1x128xf32>
    %159 = arith.mulf %154, %154 : vector<128x128xf32>
    %cst_27 = arith.constant dense<0.000000e+00> : vector<128xf32>
    %160 = vector.multi_reduction <add>, %159, %cst_27 [0] : vector<128x128xf32> to vector<128xf32>
    %161 = vector.shape_cast %160 : vector<128xf32> to vector<1x128xf32>
    %162 = tpu.concatenate %158, %161 in 0 : vector<1x128xf32>, vector<1x128xf32> -> vector<2x128xf32>
    %163 = vector.shape_cast %162 : vector<2x128xf32> to vector<1x2x128xf32>
    %c0_28 = arith.constant 0 : index
    %c0_29 = arith.constant 0 : index
    %c0_30 = arith.constant 0 : index
    %164 = vector.load %arg4[%c0_28, %c0_29, %c0_30] : memref<1x2x128xf32, #tpu.memory_space<vmem>>, vector<1x2x128xf32>
    tpu.vector_store %arg4[%c0_28, %c0_29, %c0_30], %163 {strides = array<i32>} : memref<1x2x128xf32, #tpu.memory_space<vmem>>, vector<1x2x128xf32>,
    return
  }
  func.func @transform_0(%arg0: i32) -> (i32, i32, i32, i32) {
    %c0_i32 = arith.constant 0 : i32
    %c0_i32_0 = arith.constant 0 : i32
    %c0_i32_1 = arith.constant 0 : i32
    %c0_i32_2 = arith.constant 0 : i32
    return %arg0, %c0_i32, %c0_i32_0, %c0_i32_1 : i32, i32, i32, i32
  }
  func.func @transform_1(%arg0: i32) -> (i32, i32) {
    %c0_i32 = arith.constant 0 : i32
    %c0_i32_0 = arith.constant 0 : i32
    %c0_i32_1 = arith.constant 0 : i32
    return %c0_i32, %c0_i32_0 : i32, i32
  }
  func.func @transform_2(%arg0: i32) -> (i32, i32, i32, i32) {
    %c0_i32 = arith.constant 0 : i32
    %c0_i32_0 = arith.constant 0 : i32
    %c0_i32_1 = arith.constant 0 : i32
    %c0_i32_2 = arith.constant 0 : i32
    return %arg0, %c0_i32, %c0_i32_0, %c0_i32_1 : i32, i32, i32, i32
  }
  func.func @transform_3(%arg0: i32) -> (i32, i32, i32) {
    %c0_i32 = arith.constant 0 : i32
    %c0_i32_0 = arith.constant 0 : i32
    %c0_i32_1 = arith.constant 0 : i32
    return %arg0, %c0_i32, %c0_i32_0 : i32, i32, i32
  }
}

module attributes {stable_mosaic.version = 11 : i64} {
  func.func @_conv_stats_split_kernel(%arg0: i32, %arg1: memref<2x8x6x128xbf16, #tpu.memory_space<vmem>>, %arg2: memref<1152x256xbf16, #tpu.memory_space<vmem>>, %arg3: memref<2x4x4x256xf32, #tpu.memory_space<vmem>>, %arg4: memref<1x2x256xf32, #tpu.memory_space<vmem>>) attributes {dimension_semantics = [#tpu.dimension_semantics<parallel>], iteration_bounds = array<i64: 1>, scalar_prefetch = 0 : i64, scratch_operands = 0 : i64, tpu.core_type = #tpu.core_type<tc>, window_params = [{transform_indices = @transform_0, window_bounds = array<i64: 2, 8, 6, 128>}, {pipeline_mode = #tpu.pipeline_mode<synchronous>, transform_indices = @transform_1, window_bounds = array<i64: 1152, 256>}, {transform_indices = @transform_2, window_bounds = array<i64: 2, 4, 4, 256>}, {transform_indices = @transform_3, window_bounds = array<i64: 1, 2, 256>}]} {
    %c0 = arith.constant 0 : index
    %c0_0 = arith.constant 0 : index
    %c0_1 = arith.constant 0 : index
    %c0_2 = arith.constant 0 : index
    %0 = vector.load %arg1[%c0, %c0_0, %c0_1, %c0_2] : memref<2x8x6x128xbf16, #tpu.memory_space<vmem>>, vector<2x8x6x128xbf16>
    %cst = arith.constant 0.000000e+00 : f32
    %1 = vector.broadcast %cst : f32 to vector<32x256xf32>
    %2 = vector.extract_strided_slice %0 {offsets = [0, 0, 0, 0], sizes = [2, 1, 4, 128], strides = [1, 1, 1, 1]} : vector<2x8x6x128xbf16> to vector<2x1x4x128xbf16>
    %3 = vector.shape_cast %2 : vector<2x1x4x128xbf16> to vector<2x4x128xbf16>
    %4 = vector.extract_strided_slice %0 {offsets = [0, 2, 0, 0], sizes = [2, 1, 4, 128], strides = [1, 1, 1, 1]} : vector<2x8x6x128xbf16> to vector<2x1x4x128xbf16>
    %5 = vector.shape_cast %4 : vector<2x1x4x128xbf16> to vector<2x4x128xbf16>
    %6 = vector.extract_strided_slice %0 {offsets = [0, 4, 0, 0], sizes = [2, 1, 4, 128], strides = [1, 1, 1, 1]} : vector<2x8x6x128xbf16> to vector<2x1x4x128xbf16>
    %7 = vector.shape_cast %6 : vector<2x1x4x128xbf16> to vector<2x4x128xbf16>
    %8 = vector.extract_strided_slice %0 {offsets = [0, 6, 0, 0], sizes = [2, 1, 4, 128], strides = [1, 1, 1, 1]} : vector<2x8x6x128xbf16> to vector<2x1x4x128xbf16>
    %9 = vector.shape_cast %8 : vector<2x1x4x128xbf16> to vector<2x4x128xbf16>
    %10 = vector.shape_cast %3 : vector<2x4x128xbf16> to vector<2x1x4x128xbf16>
    %11 = vector.shape_cast %5 : vector<2x4x128xbf16> to vector<2x1x4x128xbf16>
    %12 = vector.shape_cast %7 : vector<2x4x128xbf16> to vector<2x1x4x128xbf16>
    %13 = vector.shape_cast %9 : vector<2x4x128xbf16> to vector<2x1x4x128xbf16>
    %14 = tpu.concatenate %10, %11, %12, %13 in 1 : vector<2x1x4x128xbf16>, vector<2x1x4x128xbf16>, vector<2x1x4x128xbf16>, vector<2x1x4x128xbf16> -> vector<2x4x4x128xbf16>
    %15 = vector.shape_cast %14 : vector<2x4x4x128xbf16> to vector<32x128xbf16>
    %c0_3 = arith.constant 0 : index
    %c0_4 = arith.constant 0 : index
    %16 = vector.load %arg2[%c0_3, %c0_4] : memref<1152x256xbf16, #tpu.memory_space<vmem>>, vector<128x256xbf16>
    %cst_5 = arith.constant dense<0.000000e+00> : vector<32x256xf32>
    %17 = tpu.matmul %15, %16, %cst_5 {dimension_numbers = #tpu.dot_dimension_numbers<[1], [0], [0], [1], [0, 0, 1, 1], [], []>} : vector<32x128xbf16>, vector<128x256xbf16>, vector<32x256xf32> -> vector<32x256xf32>
    %18 = arith.addf %1, %17 : vector<32x256xf32>
    %19 = vector.extract_strided_slice %0 {offsets = [0, 2, 0, 0], sizes = [2, 1, 4, 128], strides = [1, 1, 1, 1]} : vector<2x8x6x128xbf16> to vector<2x1x4x128xbf16>
    %20 = vector.shape_cast %19 : vector<2x1x4x128xbf16> to vector<2x4x128xbf16>
    %21 = vector.extract_strided_slice %0 {offsets = [0, 1, 0, 0], sizes = [2, 1, 4, 128], strides = [1, 1, 1, 1]} : vector<2x8x6x128xbf16> to vector<2x1x4x128xbf16>
    %22 = vector.shape_cast %21 : vector<2x1x4x128xbf16> to vector<2x4x128xbf16>
    %23 = vector.extract_strided_slice %0 {offsets = [0, 6, 0, 0], sizes = [2, 1, 4, 128], strides = [1, 1, 1, 1]} : vector<2x8x6x128xbf16> to vector<2x1x4x128xbf16>
    %24 = vector.shape_cast %23 : vector<2x1x4x128xbf16> to vector<2x4x128xbf16>
    %25 = vector.extract_strided_slice %0 {offsets = [0, 5, 0, 0], sizes = [2, 1, 4, 128], strides = [1, 1, 1, 1]} : vector<2x8x6x128xbf16> to vector<2x1x4x128xbf16>
    %26 = vector.shape_cast %25 : vector<2x1x4x128xbf16> to vector<2x4x128xbf16>
    %27 = vector.shape_cast %20 : vector<2x4x128xbf16> to vector<2x1x4x128xbf16>
    %28 = vector.shape_cast %22 : vector<2x4x128xbf16> to vector<2x1x4x128xbf16>
    %29 = vector.shape_cast %24 : vector<2x4x128xbf16> to vector<2x1x4x128xbf16>
    %30 = vector.shape_cast %26 : vector<2x4x128xbf16> to vector<2x1x4x128xbf16>
    %31 = tpu.concatenate %27, %28, %29, %30 in 1 : vector<2x1x4x128xbf16>, vector<2x1x4x128xbf16>, vector<2x1x4x128xbf16>, vector<2x1x4x128xbf16> -> vector<2x4x4x128xbf16>
    %32 = vector.shape_cast %31 : vector<2x4x4x128xbf16> to vector<32x128xbf16>
    %c128 = arith.constant 128 : index
    %c0_6 = arith.constant 0 : index
    %33 = vector.load %arg2[%c128, %c0_6] : memref<1152x256xbf16, #tpu.memory_space<vmem>>, vector<128x256xbf16>
    %cst_7 = arith.constant dense<0.000000e+00> : vector<32x256xf32>
    %34 = tpu.matmul %32, %33, %cst_7 {dimension_numbers = #tpu.dot_dimension_numbers<[1], [0], [0], [1], [0, 0, 1, 1], [], []>} : vector<32x128xbf16>, vector<128x256xbf16>, vector<32x256xf32> -> vector<32x256xf32>
    %35 = arith.addf %18, %34 : vector<32x256xf32>
    %36 = vector.extract_strided_slice %0 {offsets = [0, 1, 0, 0], sizes = [2, 1, 4, 128], strides = [1, 1, 1, 1]} : vector<2x8x6x128xbf16> to vector<2x1x4x128xbf16>
    %37 = vector.shape_cast %36 : vector<2x1x4x128xbf16> to vector<2x4x128xbf16>
    %38 = vector.extract_strided_slice %0 {offsets = [0, 3, 0, 0], sizes = [2, 1, 4, 128], strides = [1, 1, 1, 1]} : vector<2x8x6x128xbf16> to vector<2x1x4x128xbf16>
    %39 = vector.shape_cast %38 : vector<2x1x4x128xbf16> to vector<2x4x128xbf16>
    %40 = vector.extract_strided_slice %0 {offsets = [0, 5, 0, 0], sizes = [2, 1, 4, 128], strides = [1, 1, 1, 1]} : vector<2x8x6x128xbf16> to vector<2x1x4x128xbf16>
    %41 = vector.shape_cast %40 : vector<2x1x4x128xbf16> to vector<2x4x128xbf16>
    %42 = vector.extract_strided_slice %0 {offsets = [0, 7, 0, 0], sizes = [2, 1, 4, 128], strides = [1, 1, 1, 1]} : vector<2x8x6x128xbf16> to vector<2x1x4x128xbf16>
    %43 = vector.shape_cast %42 : vector<2x1x4x128xbf16> to vector<2x4x128xbf16>
    %44 = vector.shape_cast %37 : vector<2x4x128xbf16> to vector<2x1x4x128xbf16>
    %45 = vector.shape_cast %39 : vector<2x4x128xbf16> to vector<2x1x4x128xbf16>
    %46 = vector.shape_cast %41 : vector<2x4x128xbf16> to vector<2x1x4x128xbf16>
    %47 = vector.shape_cast %43 : vector<2x4x128xbf16> to vector<2x1x4x128xbf16>
    %48 = tpu.concatenate %44, %45, %46, %47 in 1 : vector<2x1x4x128xbf16>, vector<2x1x4x128xbf16>, vector<2x1x4x128xbf16>, vector<2x1x4x128xbf16> -> vector<2x4x4x128xbf16>
    %49 = vector.shape_cast %48 : vector<2x4x4x128xbf16> to vector<32x128xbf16>
    %c256 = arith.constant 256 : index
    %c0_8 = arith.constant 0 : index
    %50 = vector.load %arg2[%c256, %c0_8] : memref<1152x256xbf16, #tpu.memory_space<vmem>>, vector<128x256xbf16>
    %cst_9 = arith.constant dense<0.000000e+00> : vector<32x256xf32>
    %51 = tpu.matmul %49, %50, %cst_9 {dimension_numbers = #tpu.dot_dimension_numbers<[1], [0], [0], [1], [0, 0, 1, 1], [], []>} : vector<32x128xbf16>, vector<128x256xbf16>, vector<32x256xf32> -> vector<32x256xf32>
    %52 = arith.addf %35, %51 : vector<32x256xf32>
    %53 = vector.extract_strided_slice %0 {offsets = [0, 4, 0, 0], sizes = [2, 1, 4, 128], strides = [1, 1, 1, 1]} : vector<2x8x6x128xbf16> to vector<2x1x4x128xbf16>
    %54 = vector.shape_cast %53 : vector<2x1x4x128xbf16> to vector<2x4x128xbf16>
    %55 = vector.extract_strided_slice %0 {offsets = [0, 6, 0, 0], sizes = [2, 1, 4, 128], strides = [1, 1, 1, 1]} : vector<2x8x6x128xbf16> to vector<2x1x4x128xbf16>
    %56 = vector.shape_cast %55 : vector<2x1x4x128xbf16> to vector<2x4x128xbf16>
    %57 = vector.extract_strided_slice %0 {offsets = [0, 0, 2, 0], sizes = [2, 1, 4, 128], strides = [1, 1, 1, 1]} : vector<2x8x6x128xbf16> to vector<2x1x4x128xbf16>
    %58 = vector.shape_cast %57 : vector<2x1x4x128xbf16> to vector<2x4x128xbf16>
    %59 = vector.extract_strided_slice %0 {offsets = [0, 2, 2, 0], sizes = [2, 1, 4, 128], strides = [1, 1, 1, 1]} : vector<2x8x6x128xbf16> to vector<2x1x4x128xbf16>
    %60 = vector.shape_cast %59 : vector<2x1x4x128xbf16> to vector<2x4x128xbf16>
    %61 = vector.shape_cast %54 : vector<2x4x128xbf16> to vector<2x1x4x128xbf16>
    %62 = vector.shape_cast %56 : vector<2x4x128xbf16> to vector<2x1x4x128xbf16>
    %63 = vector.shape_cast %58 : vector<2x4x128xbf16> to vector<2x1x4x128xbf16>
    %64 = vector.shape_cast %60 : vector<2x4x128xbf16> to vector<2x1x4x128xbf16>
    %65 = tpu.concatenate %61, %62, %63, %64 in 1 : vector<2x1x4x128xbf16>, vector<2x1x4x128xbf16>, vector<2x1x4x128xbf16>, vector<2x1x4x128xbf16> -> vector<2x4x4x128xbf16>
    %66 = vector.shape_cast %65 : vector<2x4x4x128xbf16> to vector<32x128xbf16>
    %c384 = arith.constant 384 : index
    %c0_10 = arith.constant 0 : index
    %67 = vector.load %arg2[%c384, %c0_10] : memref<1152x256xbf16, #tpu.memory_space<vmem>>, vector<128x256xbf16>
    %cst_11 = arith.constant dense<0.000000e+00> : vector<32x256xf32>
    %68 = tpu.matmul %66, %67, %cst_11 {dimension_numbers = #tpu.dot_dimension_numbers<[1], [0], [0], [1], [0, 0, 1, 1], [], []>} : vector<32x128xbf16>, vector<128x256xbf16>, vector<32x256xf32> -> vector<32x256xf32>
    %69 = arith.addf %52, %68 : vector<32x256xf32>
    %70 = vector.extract_strided_slice %0 {offsets = [0, 6, 0, 0], sizes = [2, 1, 4, 128], strides = [1, 1, 1, 1]} : vector<2x8x6x128xbf16> to vector<2x1x4x128xbf16>
    %71 = vector.shape_cast %70 : vector<2x1x4x128xbf16> to vector<2x4x128xbf16>
    %72 = vector.extract_strided_slice %0 {offsets = [0, 5, 0, 0], sizes = [2, 1, 4, 128], strides = [1, 1, 1, 1]} : vector<2x8x6x128xbf16> to vector<2x1x4x128xbf16>
    %73 = vector.shape_cast %72 : vector<2x1x4x128xbf16> to vector<2x4x128xbf16>
    %74 = vector.extract_strided_slice %0 {offsets = [0, 2, 2, 0], sizes = [2, 1, 4, 128], strides = [1, 1, 1, 1]} : vector<2x8x6x128xbf16> to vector<2x1x4x128xbf16>
    %75 = vector.shape_cast %74 : vector<2x1x4x128xbf16> to vector<2x4x128xbf16>
    %76 = vector.extract_strided_slice %0 {offsets = [0, 1, 2, 0], sizes = [2, 1, 4, 128], strides = [1, 1, 1, 1]} : vector<2x8x6x128xbf16> to vector<2x1x4x128xbf16>
    %77 = vector.shape_cast %76 : vector<2x1x4x128xbf16> to vector<2x4x128xbf16>
    %78 = vector.shape_cast %71 : vector<2x4x128xbf16> to vector<2x1x4x128xbf16>
    %79 = vector.shape_cast %73 : vector<2x4x128xbf16> to vector<2x1x4x128xbf16>
    %80 = vector.shape_cast %75 : vector<2x4x128xbf16> to vector<2x1x4x128xbf16>
    %81 = vector.shape_cast %77 : vector<2x4x128xbf16> to vector<2x1x4x128xbf16>
    %82 = tpu.concatenate %78, %79, %80, %81 in 1 : vector<2x1x4x128xbf16>, vector<2x1x4x128xbf16>, vector<2x1x4x128xbf16>, vector<2x1x4x128xbf16> -> vector<2x4x4x128xbf16>
    %83 = vector.shape_cast %82 : vector<2x4x4x128xbf16> to vector<32x128xbf16>
    %c512 = arith.constant 512 : index
    %c0_12 = arith.constant 0 : index
    %84 = vector.load %arg2[%c512, %c0_12] : memref<1152x256xbf16, #tpu.memory_space<vmem>>, vector<128x256xbf16>
    %cst_13 = arith.constant dense<0.000000e+00> : vector<32x256xf32>
    %85 = tpu.matmul %83, %84, %cst_13 {dimension_numbers = #tpu.dot_dimension_numbers<[1], [0], [0], [1], [0, 0, 1, 1], [], []>} : vector<32x128xbf16>, vector<128x256xbf16>, vector<32x256xf32> -> vector<32x256xf32>
    %86 = arith.addf %69, %85 : vector<32x256xf32>
    %87 = vector.extract_strided_slice %0 {offsets = [0, 5, 0, 0], sizes = [2, 1, 4, 128], strides = [1, 1, 1, 1]} : vector<2x8x6x128xbf16> to vector<2x1x4x128xbf16>
    %88 = vector.shape_cast %87 : vector<2x1x4x128xbf16> to vector<2x4x128xbf16>
    %89 = vector.extract_strided_slice %0 {offsets = [0, 7, 0, 0], sizes = [2, 1, 4, 128], strides = [1, 1, 1, 1]} : vector<2x8x6x128xbf16> to vector<2x1x4x128xbf16>
    %90 = vector.shape_cast %89 : vector<2x1x4x128xbf16> to vector<2x4x128xbf16>
    %91 = vector.extract_strided_slice %0 {offsets = [0, 1, 2, 0], sizes = [2, 1, 4, 128], strides = [1, 1, 1, 1]} : vector<2x8x6x128xbf16> to vector<2x1x4x128xbf16>
    %92 = vector.shape_cast %91 : vector<2x1x4x128xbf16> to vector<2x4x128xbf16>
    %93 = vector.extract_strided_slice %0 {offsets = [0, 3, 2, 0], sizes = [2, 1, 4, 128], strides = [1, 1, 1, 1]} : vector<2x8x6x128xbf16> to vector<2x1x4x128xbf16>
    %94 = vector.shape_cast %93 : vector<2x1x4x128xbf16> to vector<2x4x128xbf16>
    %95 = vector.shape_cast %88 : vector<2x4x128xbf16> to vector<2x1x4x128xbf16>
    %96 = vector.shape_cast %90 : vector<2x4x128xbf16> to vector<2x1x4x128xbf16>
    %97 = vector.shape_cast %92 : vector<2x4x128xbf16> to vector<2x1x4x128xbf16>
    %98 = vector.shape_cast %94 : vector<2x4x128xbf16> to vector<2x1x4x128xbf16>
    %99 = tpu.concatenate %95, %96, %97, %98 in 1 : vector<2x1x4x128xbf16>, vector<2x1x4x128xbf16>, vector<2x1x4x128xbf16>, vector<2x1x4x128xbf16> -> vector<2x4x4x128xbf16>
    %100 = vector.shape_cast %99 : vector<2x4x4x128xbf16> to vector<32x128xbf16>
    %c640 = arith.constant 640 : index
    %c0_14 = arith.constant 0 : index
    %101 = vector.load %arg2[%c640, %c0_14] : memref<1152x256xbf16, #tpu.memory_space<vmem>>, vector<128x256xbf16>
    %cst_15 = arith.constant dense<0.000000e+00> : vector<32x256xf32>
    %102 = tpu.matmul %100, %101, %cst_15 {dimension_numbers = #tpu.dot_dimension_numbers<[1], [0], [0], [1], [0, 0, 1, 1], [], []>} : vector<32x128xbf16>, vector<128x256xbf16>, vector<32x256xf32> -> vector<32x256xf32>
    %103 = arith.addf %86, %102 : vector<32x256xf32>
    %104 = vector.extract_strided_slice %0 {offsets = [0, 0, 2, 0], sizes = [2, 1, 4, 128], strides = [1, 1, 1, 1]} : vector<2x8x6x128xbf16> to vector<2x1x4x128xbf16>
    %105 = vector.shape_cast %104 : vector<2x1x4x128xbf16> to vector<2x4x128xbf16>
    %106 = vector.extract_strided_slice %0 {offsets = [0, 2, 2, 0], sizes = [2, 1, 4, 128], strides = [1, 1, 1, 1]} : vector<2x8x6x128xbf16> to vector<2x1x4x128xbf16>
    %107 = vector.shape_cast %106 : vector<2x1x4x128xbf16> to vector<2x4x128xbf16>
    %108 = vector.extract_strided_slice %0 {offsets = [0, 4, 2, 0], sizes = [2, 1, 4, 128], strides = [1, 1, 1, 1]} : vector<2x8x6x128xbf16> to vector<2x1x4x128xbf16>
    %109 = vector.shape_cast %108 : vector<2x1x4x128xbf16> to vector<2x4x128xbf16>
    %110 = vector.extract_strided_slice %0 {offsets = [0, 6, 2, 0], sizes = [2, 1, 4, 128], strides = [1, 1, 1, 1]} : vector<2x8x6x128xbf16> to vector<2x1x4x128xbf16>
    %111 = vector.shape_cast %110 : vector<2x1x4x128xbf16> to vector<2x4x128xbf16>
    %112 = vector.shape_cast %105 : vector<2x4x128xbf16> to vector<2x1x4x128xbf16>
    %113 = vector.shape_cast %107 : vector<2x4x128xbf16> to vector<2x1x4x128xbf16>
    %114 = vector.shape_cast %109 : vector<2x4x128xbf16> to vector<2x1x4x128xbf16>
    %115 = vector.shape_cast %111 : vector<2x4x128xbf16> to vector<2x1x4x128xbf16>
    %116 = tpu.concatenate %112, %113, %114, %115 in 1 : vector<2x1x4x128xbf16>, vector<2x1x4x128xbf16>, vector<2x1x4x128xbf16>, vector<2x1x4x128xbf16> -> vector<2x4x4x128xbf16>
    %117 = vector.shape_cast %116 : vector<2x4x4x128xbf16> to vector<32x128xbf16>
    %c768 = arith.constant 768 : index
    %c0_16 = arith.constant 0 : index
    %118 = vector.load %arg2[%c768, %c0_16] : memref<1152x256xbf16, #tpu.memory_space<vmem>>, vector<128x256xbf16>
    %cst_17 = arith.constant dense<0.000000e+00> : vector<32x256xf32>
    %119 = tpu.matmul %117, %118, %cst_17 {dimension_numbers = #tpu.dot_dimension_numbers<[1], [0], [0], [1], [0, 0, 1, 1], [], []>} : vector<32x128xbf16>, vector<128x256xbf16>, vector<32x256xf32> -> vector<32x256xf32>
    %120 = arith.addf %103, %119 : vector<32x256xf32>
    %121 = vector.extract_strided_slice %0 {offsets = [0, 2, 2, 0], sizes = [2, 1, 4, 128], strides = [1, 1, 1, 1]} : vector<2x8x6x128xbf16> to vector<2x1x4x128xbf16>
    %122 = vector.shape_cast %121 : vector<2x1x4x128xbf16> to vector<2x4x128xbf16>
    %123 = vector.extract_strided_slice %0 {offsets = [0, 1, 2, 0], sizes = [2, 1, 4, 128], strides = [1, 1, 1, 1]} : vector<2x8x6x128xbf16> to vector<2x1x4x128xbf16>
    %124 = vector.shape_cast %123 : vector<2x1x4x128xbf16> to vector<2x4x128xbf16>
    %125 = vector.extract_strided_slice %0 {offsets = [0, 6, 2, 0], sizes = [2, 1, 4, 128], strides = [1, 1, 1, 1]} : vector<2x8x6x128xbf16> to vector<2x1x4x128xbf16>
    %126 = vector.shape_cast %125 : vector<2x1x4x128xbf16> to vector<2x4x128xbf16>
    %127 = vector.extract_strided_slice %0 {offsets = [0, 5, 2, 0], sizes = [2, 1, 4, 128], strides = [1, 1, 1, 1]} : vector<2x8x6x128xbf16> to vector<2x1x4x128xbf16>
    %128 = vector.shape_cast %127 : vector<2x1x4x128xbf16> to vector<2x4x128xbf16>
    %129 = vector.shape_cast %122 : vector<2x4x128xbf16> to vector<2x1x4x128xbf16>
    %130 = vector.shape_cast %124 : vector<2x4x128xbf16> to vector<2x1x4x128xbf16>
    %131 = vector.shape_cast %126 : vector<2x4x128xbf16> to vector<2x1x4x128xbf16>
    %132 = vector.shape_cast %128 : vector<2x4x128xbf16> to vector<2x1x4x128xbf16>
    %133 = tpu.concatenate %129, %130, %131, %132 in 1 : vector<2x1x4x128xbf16>, vector<2x1x4x128xbf16>, vector<2x1x4x128xbf16>, vector<2x1x4x128xbf16> -> vector<2x4x4x128xbf16>
    %134 = vector.shape_cast %133 : vector<2x4x4x128xbf16> to vector<32x128xbf16>
    %c896 = arith.constant 896 : index
    %c0_18 = arith.constant 0 : index
    %135 = vector.load %arg2[%c896, %c0_18] : memref<1152x256xbf16, #tpu.memory_space<vmem>>, vector<128x256xbf16>
    %cst_19 = arith.constant dense<0.000000e+00> : vector<32x256xf32>
    %136 = tpu.matmul %134, %135, %cst_19 {dimension_numbers = #tpu.dot_dimension_numbers<[1], [0], [0], [1], [0, 0, 1, 1], [], []>} : vector<32x128xbf16>, vector<128x256xbf16>, vector<32x256xf32> -> vector<32x256xf32>
    %137 = arith.addf %120, %136 : vector<32x256xf32>
    %138 = vector.extract_strided_slice %0 {offsets = [0, 1, 2, 0], sizes = [2, 1, 4, 128], strides = [1, 1, 1, 1]} : vector<2x8x6x128xbf16> to vector<2x1x4x128xbf16>
    %139 = vector.shape_cast %138 : vector<2x1x4x128xbf16> to vector<2x4x128xbf16>
    %140 = vector.extract_strided_slice %0 {offsets = [0, 3, 2, 0], sizes = [2, 1, 4, 128], strides = [1, 1, 1, 1]} : vector<2x8x6x128xbf16> to vector<2x1x4x128xbf16>
    %141 = vector.shape_cast %140 : vector<2x1x4x128xbf16> to vector<2x4x128xbf16>
    %142 = vector.extract_strided_slice %0 {offsets = [0, 5, 2, 0], sizes = [2, 1, 4, 128], strides = [1, 1, 1, 1]} : vector<2x8x6x128xbf16> to vector<2x1x4x128xbf16>
    %143 = vector.shape_cast %142 : vector<2x1x4x128xbf16> to vector<2x4x128xbf16>
    %144 = vector.extract_strided_slice %0 {offsets = [0, 7, 2, 0], sizes = [2, 1, 4, 128], strides = [1, 1, 1, 1]} : vector<2x8x6x128xbf16> to vector<2x1x4x128xbf16>
    %145 = vector.shape_cast %144 : vector<2x1x4x128xbf16> to vector<2x4x128xbf16>
    %146 = vector.shape_cast %139 : vector<2x4x128xbf16> to vector<2x1x4x128xbf16>
    %147 = vector.shape_cast %141 : vector<2x4x128xbf16> to vector<2x1x4x128xbf16>
    %148 = vector.shape_cast %143 : vector<2x4x128xbf16> to vector<2x1x4x128xbf16>
    %149 = vector.shape_cast %145 : vector<2x4x128xbf16> to vector<2x1x4x128xbf16>
    %150 = tpu.concatenate %146, %147, %148, %149 in 1 : vector<2x1x4x128xbf16>, vector<2x1x4x128xbf16>, vector<2x1x4x128xbf16>, vector<2x1x4x128xbf16> -> vector<2x4x4x128xbf16>
    %151 = vector.shape_cast %150 : vector<2x4x4x128xbf16> to vector<32x128xbf16>
    %c1024 = arith.constant 1024 : index
    %c0_20 = arith.constant 0 : index
    %152 = vector.load %arg2[%c1024, %c0_20] : memref<1152x256xbf16, #tpu.memory_space<vmem>>, vector<128x256xbf16>
    %cst_21 = arith.constant dense<0.000000e+00> : vector<32x256xf32>
    %153 = tpu.matmul %151, %152, %cst_21 {dimension_numbers = #tpu.dot_dimension_numbers<[1], [0], [0], [1], [0, 0, 1, 1], [], []>} : vector<32x128xbf16>, vector<128x256xbf16>, vector<32x256xf32> -> vector<32x256xf32>
    %154 = arith.addf %137, %153 : vector<32x256xf32>
    %155 = vector.shape_cast %154 : vector<32x256xf32> to vector<2x4x4x256xf32>
    %c0_22 = arith.constant 0 : index
    %c0_23 = arith.constant 0 : index
    %c0_24 = arith.constant 0 : index
    %c0_25 = arith.constant 0 : index
    %156 = vector.load %arg3[%c0_22, %c0_23, %c0_24, %c0_25] : memref<2x4x4x256xf32, #tpu.memory_space<vmem>>, vector<2x4x4x256xf32>
    tpu.vector_store %arg3[%c0_22, %c0_23, %c0_24, %c0_25], %155 {strides = array<i32>} : memref<2x4x4x256xf32, #tpu.memory_space<vmem>>, vector<2x4x4x256xf32>,
    %cst_26 = arith.constant dense<0.000000e+00> : vector<256xf32>
    %157 = vector.multi_reduction <add>, %154, %cst_26 [0] : vector<32x256xf32> to vector<256xf32>
    %158 = vector.shape_cast %157 : vector<256xf32> to vector<1x256xf32>
    %159 = arith.mulf %154, %154 : vector<32x256xf32>
    %cst_27 = arith.constant dense<0.000000e+00> : vector<256xf32>
    %160 = vector.multi_reduction <add>, %159, %cst_27 [0] : vector<32x256xf32> to vector<256xf32>
    %161 = vector.shape_cast %160 : vector<256xf32> to vector<1x256xf32>
    %162 = tpu.concatenate %158, %161 in 0 : vector<1x256xf32>, vector<1x256xf32> -> vector<2x256xf32>
    %163 = vector.shape_cast %162 : vector<2x256xf32> to vector<1x2x256xf32>
    %c0_28 = arith.constant 0 : index
    %c0_29 = arith.constant 0 : index
    %c0_30 = arith.constant 0 : index
    %164 = vector.load %arg4[%c0_28, %c0_29, %c0_30] : memref<1x2x256xf32, #tpu.memory_space<vmem>>, vector<1x2x256xf32>
    tpu.vector_store %arg4[%c0_28, %c0_29, %c0_30], %163 {strides = array<i32>} : memref<1x2x256xf32, #tpu.memory_space<vmem>>, vector<1x2x256xf32>,
    return
  }
  func.func @transform_0(%arg0: i32) -> (i32, i32, i32, i32) {
    %c0_i32 = arith.constant 0 : i32
    %c0_i32_0 = arith.constant 0 : i32
    %c0_i32_1 = arith.constant 0 : i32
    %c0_i32_2 = arith.constant 0 : i32
    return %arg0, %c0_i32, %c0_i32_0, %c0_i32_1 : i32, i32, i32, i32
  }
  func.func @transform_1(%arg0: i32) -> (i32, i32) {
    %c0_i32 = arith.constant 0 : i32
    %c0_i32_0 = arith.constant 0 : i32
    %c0_i32_1 = arith.constant 0 : i32
    return %c0_i32, %c0_i32_0 : i32, i32
  }
  func.func @transform_2(%arg0: i32) -> (i32, i32, i32, i32) {
    %c0_i32 = arith.constant 0 : i32
    %c0_i32_0 = arith.constant 0 : i32
    %c0_i32_1 = arith.constant 0 : i32
    %c0_i32_2 = arith.constant 0 : i32
    return %arg0, %c0_i32, %c0_i32_0, %c0_i32_1 : i32, i32, i32, i32
  }
  func.func @transform_3(%arg0: i32) -> (i32, i32, i32) {
    %c0_i32 = arith.constant 0 : i32
    %c0_i32_0 = arith.constant 0 : i32
    %c0_i32_1 = arith.constant 0 : i32
    return %arg0, %c0_i32, %c0_i32_0 : i32, i32, i32
  }
}

module attributes {stable_mosaic.version = 11 : i64} {
  func.func @_bn_relu_pool_kernel(%arg0: i32, %arg1: memref<2x4x4x256xf32, #tpu.memory_space<vmem>>, %arg2: memref<1x256xf32, #tpu.memory_space<vmem>>, %arg3: memref<1x256xf32, #tpu.memory_space<vmem>>, %arg4: memref<2x4x256xf32, #tpu.memory_space<vmem>>) attributes {dimension_semantics = [#tpu.dimension_semantics<parallel>], iteration_bounds = array<i64: 1>, scalar_prefetch = 0 : i64, scratch_operands = 0 : i64, tpu.core_type = #tpu.core_type<tc>, window_params = [{transform_indices = @transform_0, window_bounds = array<i64: 2, 4, 4, 256>}, {pipeline_mode = #tpu.pipeline_mode<synchronous>, transform_indices = @transform_1, window_bounds = array<i64: 1, 256>}, {pipeline_mode = #tpu.pipeline_mode<synchronous>, transform_indices = @transform_2, window_bounds = array<i64: 1, 256>}, {transform_indices = @transform_3, window_bounds = array<i64: 2, 4, 256>}]} {
    %c0 = arith.constant 0 : index
    %c0_0 = arith.constant 0 : index
    %c0_1 = arith.constant 0 : index
    %c0_2 = arith.constant 0 : index
    %0 = vector.load %arg1[%c0, %c0_0, %c0_1, %c0_2] : memref<2x4x4x256xf32, #tpu.memory_space<vmem>>, vector<2x4x4x256xf32>
    %c0_3 = arith.constant 0 : index
    %c0_4 = arith.constant 0 : index
    %1 = vector.load %arg2[%c0_3, %c0_4] : memref<1x256xf32, #tpu.memory_space<vmem>>, vector<1x256xf32>
    %2 = vector.shape_cast %1 : vector<1x256xf32> to vector<1x1x1x256xf32>
    %3 = vector.broadcast %2 : vector<1x1x1x256xf32> to vector<2x4x4x256xf32>
    %4 = arith.mulf %0, %3 : vector<2x4x4x256xf32>
    %c0_5 = arith.constant 0 : index
    %c0_6 = arith.constant 0 : index
    %5 = vector.load %arg3[%c0_5, %c0_6] : memref<1x256xf32, #tpu.memory_space<vmem>>, vector<1x256xf32>
    %6 = vector.shape_cast %5 : vector<1x256xf32> to vector<1x1x1x256xf32>
    %7 = vector.broadcast %6 : vector<1x1x1x256xf32> to vector<2x4x4x256xf32>
    %8 = arith.addf %4, %7 : vector<2x4x4x256xf32>
    %cst = arith.constant 0.000000e+00 : f32
    %9 = vector.broadcast %cst : f32 to vector<2x4x4x256xf32>
    %10 = arith.maximumf %8, %9 : vector<2x4x4x256xf32>
    %cst_7 = arith.constant dense<0xFF800000> : vector<2x4x256xf32>
    %11 = vector.multi_reduction <maximumf>, %10, %cst_7 [1] : vector<2x4x4x256xf32> to vector<2x4x256xf32>
    %c0_8 = arith.constant 0 : index
    %c0_9 = arith.constant 0 : index
    %c0_10 = arith.constant 0 : index
    %12 = vector.load %arg4[%c0_8, %c0_9, %c0_10] : memref<2x4x256xf32, #tpu.memory_space<vmem>>, vector<2x4x256xf32>
    tpu.vector_store %arg4[%c0_8, %c0_9, %c0_10], %11 {strides = array<i32>} : memref<2x4x256xf32, #tpu.memory_space<vmem>>, vector<2x4x256xf32>,
    return
  }
  func.func @transform_0(%arg0: i32) -> (i32, i32, i32, i32) {
    %c0_i32 = arith.constant 0 : i32
    %c0_i32_0 = arith.constant 0 : i32
    %c0_i32_1 = arith.constant 0 : i32
    %c0_i32_2 = arith.constant 0 : i32
    return %arg0, %c0_i32, %c0_i32_0, %c0_i32_1 : i32, i32, i32, i32
  }
  func.func @transform_1(%arg0: i32) -> (i32, i32) {
    %c0_i32 = arith.constant 0 : i32
    %c0_i32_0 = arith.constant 0 : i32
    %c0_i32_1 = arith.constant 0 : i32
    return %c0_i32, %c0_i32_0 : i32, i32
  }
  func.func @transform_2(%arg0: i32) -> (i32, i32) {
    %c0_i32 = arith.constant 0 : i32
    %c0_i32_0 = arith.constant 0 : i32
    %c0_i32_1 = arith.constant 0 : i32
    return %c0_i32, %c0_i32_0 : i32, i32
  }
  func.func @transform_3(%arg0: i32) -> (i32, i32, i32) {
    %c0_i32 = arith.constant 0 : i32
    %c0_i32_0 = arith.constant 0 : i32
    %c0_i32_1 = arith.constant 0 : i32
    return %arg0, %c0_i32, %c0_i32_0 : i32, i32, i32
  }
}

</mosaic_0001>

<llo_original>
// kernel: conv_etal_forward.7
$region0: #{conv_etal_forward.7}
  #allocation0 [shape = 'u32[]', space=smem, size = 0x4, offset = 0x4, fixed_abs, tag = 'smem constant byte address 0x4 - core index']
  #allocation1 [shape = 'u32[144,128]{1,0:T(1,128)}', space=vmem, size = 0x12000, scoped, tag = 'internal scratch']
  %s0 = inlined_call_operand.vmem [shape: f32[2,4,64,128], index: 0, kind: input, shape index: {}]
  %s1 = inlined_call_operand.vmem [shape: f32[1,128], index: 1, kind: input, shape index: {}]
  %s2 = inlined_call_operand.vmem [shape: f32[1,128], index: 2, kind: input, shape index: {}]
  %s3 = inlined_call_operand.vmem [shape: f32[2,64,128], index: 3, kind: output, shape index: {}]
  %s4 = sld [smem:[#allocation0]]
  $region22: #{conv_etal_forward.7} parent=0
    _
  %s6 = ssub.s32 1, %s4
  %s7 = scalar_select 0, %s6, %s4
  // Predicated region
  $region2: #{conv_etal_forward.7} parent=0 // pred_check
    _
  $region3: #{conv_etal_forward.7} parent=0 // pred_check_branch
    %9 = sbr.rel (0) target = $region5
  $region4: #{conv_etal_forward.7} parent=0 // pred_region
    _
  $region5: #{conv_etal_forward.7} parent=0 // pred_fallthru
    _
  // Predicated region
  $region6: #{conv_etal_forward.7} parent=0 // pred_check
    _
  $region7: #{conv_etal_forward.7} parent=0 // pred_check_branch
    %11 = sbr.rel (0) target = $region9
  $region8: #{conv_etal_forward.7} parent=0 // pred_region
    _
  $region9: #{conv_etal_forward.7} parent=0 // pred_fallthru
    _
  // Predicated region
  $region10: #{conv_etal_forward.7} parent=0 // pred_check
    _
  $region11: #{conv_etal_forward.7} parent=0 // pred_check_branch
    %13 = sbr.rel (0) target = $region13
  $region12: #{conv_etal_forward.7} parent=0 // pred_region
    _
  $region13: #{conv_etal_forward.7} parent=0 // pred_fallthru
    _
  %v14 = vld [vmem:[%s0] sm:$0xff]
  %v15 = vld [vmem:[%s0 + $0x8] sm:$0xff]
  %v16 = vld [vmem:[%s0 + $0x10] sm:$0xff]
  %v17 = vld [vmem:[%s0 + $0x18] sm:$0xff]
  %v18 = vld [vmem:[%s0 + $0x20] sm:$0xff]
  %v19 = vld [vmem:[%s0 + $0x28] sm:$0xff]
  %v20 = vld [vmem:[%s0 + $0x30] sm:$0xff]
  %v21 = vld [vmem:[%s0 + $0x38] sm:$0xff]
  %v22 = vld [vmem:[%s0 + $0x40] sm:$0xff]
  %v23 = vld [vmem:[%s0 + $0x48] sm:$0xff]
  %v24 = vld [vmem:[%s0 + $0x50] sm:$0xff]
  %v25 = vld [vmem:[%s0 + $0x58] sm:$0xff]
  %v26 = vld [vmem:[%s0 + $0x60] sm:$0xff]
  %v27 = vld [vmem:[%s0 + $0x68] sm:$0xff]
  %v28 = vld [vmem:[%s0 + $0x70] sm:$0xff]
  %v29 = vld [vmem:[%s0 + $0x78] sm:$0xff]
  %v30 = vld [vmem:[%s0 + $0x80] sm:$0xff]
  %v31 = vld [vmem:[%s0 + $0x88] sm:$0xff]
  %v32 = vld [vmem:[%s0 + $0x90] sm:$0xff]
  %v33 = vld [vmem:[%s0 + $0x98] sm:$0xff]
  %v34 = vld [vmem:[%s0 + $0xa0] sm:$0xff]
  %v35 = vld [vmem:[%s0 + $0xa8] sm:$0xff]
  %v36 = vld [vmem:[%s0 + $0xb0] sm:$0xff]
  %v37 = vld [vmem:[%s0 + $0xb8] sm:$0xff]
  %v38 = vld [vmem:[%s0 + $0xc0] sm:$0xff]
  %v39 = vld [vmem:[%s0 + $0xc8] sm:$0xff]
  %v40 = vld [vmem:[%s0 + $0xd0] sm:$0xff]
  %v41 = vld [vmem:[%s0 + $0xd8] sm:$0xff]
  %v42 = vld [vmem:[%s0 + $0xe0] sm:$0xff]
  %v43 = vld [vmem:[%s0 + $0xe8] sm:$0xff]
  %v44 = vld [vmem:[%s0 + $0xf0] sm:$0xff]
  %v45 = vld [vmem:[%s0 + $0xf8] sm:$0xff]
  %v46 = vld [vmem:[%s0 + $0x100] sm:$0xff]
  %v47 = vld [vmem:[%s0 + $0x108] sm:$0xff]
  %v48 = vld [vmem:[%s0 + $0x110] sm:$0xff]
  %v49 = vld [vmem:[%s0 + $0x118] sm:$0xff]
  %v50 = vld [vmem:[%s0 + $0x120] sm:$0xff]
  %v51 = vld [vmem:[%s0 + $0x128] sm:$0xff]
  %v52 = vld [vmem:[%s0 + $0x130] sm:$0xff]
  %v53 = vld [vmem:[%s0 + $0x138] sm:$0xff]
  %v54 = vld [vmem:[%s0 + $0x140] sm:$0xff]
  %v55 = vld [vmem:[%s0 + $0x148] sm:$0xff]
  %v56 = vld [vmem:[%s0 + $0x150] sm:$0xff]
  %v57 = vld [vmem:[%s0 + $0x158] sm:$0xff]
  %v58 = vld [vmem:[%s0 + $0x160] sm:$0xff]
  %v59 = vld [vmem:[%s0 + $0x168] sm:$0xff]
  %v60 = vld [vmem:[%s0 + $0x170] sm:$0xff]
  %v61 = vld [vmem:[%s0 + $0x178] sm:$0xff]
  %v62 = vld [vmem:[%s0 + $0x180] sm:$0xff]
  %v63 = vld [vmem:[%s0 + $0x188] sm:$0xff]
  %v64 = vld [vmem:[%s0 + $0x190] sm:$0xff]
  %v65 = vld [vmem:[%s0 + $0x198] sm:$0xff]
  %v66 = vld [vmem:[%s0 + $0x1a0] sm:$0xff]
  %v67 = vld [vmem:[%s0 + $0x1a8] sm:$0xff]
  %v68 = vld [vmem:[%s0 + $0x1b0] sm:$0xff]
  %v69 = vld [vmem:[%s0 + $0x1b8] sm:$0xff]
  %v70 = vld [vmem:[%s0 + $0x1c0] sm:$0xff]
  %v71 = vld [vmem:[%s0 + $0x1c8] sm:$0xff]
  %v72 = vld [vmem:[%s0 + $0x1d0] sm:$0xff]
  %v73 = vld [vmem:[%s0 + $0x1d8] sm:$0xff]
  %v74 = vld [vmem:[%s0 + $0x1e0] sm:$0xff]
  %v75 = vld [vmem:[%s0 + $0x1e8] sm:$0xff]
  %v76 = vld [vmem:[%s0 + $0x1f0] sm:$0xff]
  %v77 = vld [vmem:[%s0 + $0x1f8] sm:$0xff]
  %v78 = vld [vmem:[%s1] sm:$0x1]
  %v80 = vlaneseq
  %v81 = vshrl.u32 %v80, 7
  %v82 = vsub.s32 0, %v81
  %v83 = vrot.slane %v78, %v82
  %v85 = vmul.f32 %v14, %v83
  %v86 = vmul.f32 %v15, %v83
  %v87 = vmul.f32 %v16, %v83
  %v88 = vmul.f32 %v17, %v83
  %v89 = vmul.f32 %v18, %v83
  %v90 = vmul.f32 %v19, %v83
  %v91 = vmul.f32 %v20, %v83
  %v92 = vmul.f32 %v21, %v83
  %v93 = vmul.f32 %v22, %v83
  %v94 = vmul.f32 %v23, %v83
  %v95 = vmul.f32 %v24, %v83
  %v96 = vmul.f32 %v25, %v83
  %v97 = vmul.f32 %v26, %v83
  %v98 = vmul.f32 %v27, %v83
  %v99 = vmul.f32 %v28, %v83
  %v100 = vmul.f32 %v29, %v83
  %v101 = vmul.f32 %v30, %v83
  %v102 = vmul.f32 %v31, %v83
  %v103 = vmul.f32 %v32, %v83
  %v104 = vmul.f32 %v33, %v83
  %v105 = vmul.f32 %v34, %v83
  %v106 = vmul.f32 %v35, %v83
  %v107 = vmul.f32 %v36, %v83
  %v108 = vmul.f32 %v37, %v83
  %v109 = vmul.f32 %v38, %v83
  %v110 = vmul.f32 %v39, %v83
  %v111 = vmul.f32 %v40, %v83
  %v112 = vmul.f32 %v41, %v83
  %v113 = vmul.f32 %v42, %v83
  %v114 = vmul.f32 %v43, %v83
  %v115 = vmul.f32 %v44, %v83
  %v116 = vmul.f32 %v45, %v83
  %v117 = vmul.f32 %v46, %v83
  %v118 = vmul.f32 %v47, %v83
  %v119 = vmul.f32 %v48, %v83
  %v120 = vmul.f32 %v49, %v83
  %v121 = vmul.f32 %v50, %v83
  %v122 = vmul.f32 %v51, %v83
  %v123 = vmul.f32 %v52, %v83
  %v124 = vmul.f32 %v53, %v83
  %v125 = vmul.f32 %v54, %v83
  %v126 = vmul.f32 %v55, %v83
  %v127 = vmul.f32 %v56, %v83
  %v128 = vmul.f32 %v57, %v83
  %v129 = vmul.f32 %v58, %v83
  %v130 = vmul.f32 %v59, %v83
  %v131 = vmul.f32 %v60, %v83
  %v132 = vmul.f32 %v61, %v83
  %v133 = vmul.f32 %v62, %v83
  %v134 = vmul.f32 %v63, %v83
  %v135 = vmul.f32 %v64, %v83
  %v136 = vmul.f32 %v65, %v83
  %v137 = vmul.f32 %v66, %v83
  %v138 = vmul.f32 %v67, %v83
  %v139 = vmul.f32 %v68, %v83
  %v140 = vmul.f32 %v69, %v83
  %v141 = vmul.f32 %v70, %v83
  %v142 = vmul.f32 %v71, %v83
  %v143 = vmul.f32 %v72, %v83
  %v144 = vmul.f32 %v73, %v83
  %v145 = vmul.f32 %v74, %v83
  %v146 = vmul.f32 %v75, %v83
  %v147 = vmul.f32 %v76, %v83
  %v148 = vmul.f32 %v77, %v83
  %v149 = vld [vmem:[%s2] sm:$0x1]
  %v151 = vlaneseq
  %v152 = vshrl.u32 %v151, 7
  %v153 = vsub.s32 0, %v152
  %v154 = vrot.slane %v149, %v153
  %v156 = vadd.f32 %v85, %v154
  %v157 = vadd.f32 %v86, %v154
  %v158 = vadd.f32 %v87, %v154
  %v159 = vadd.f32 %v88, %v154
  %v160 = vadd.f32 %v89, %v154
  %v161 = vadd.f32 %v90, %v154
  %v162 = vadd.f32 %v91, %v154
  %v163 = vadd.f32 %v92, %v154
  %v164 = vadd.f32 %v93, %v154
  %v165 = vadd.f32 %v94, %v154
  %v166 = vadd.f32 %v95, %v154
  %v167 = vadd.f32 %v96, %v154
  %v168 = vadd.f32 %v97, %v154
  %v169 = vadd.f32 %v98, %v154
  %v170 = vadd.f32 %v99, %v154
  %v171 = vadd.f32 %v100, %v154
  %v172 = vadd.f32 %v101, %v154
  %v173 = vadd.f32 %v102, %v154
  %v174 = vadd.f32 %v103, %v154
  %v175 = vadd.f32 %v104, %v154
  %v176 = vadd.f32 %v105, %v154
  %v177 = vadd.f32 %v106, %v154
  %v178 = vadd.f32 %v107, %v154
  %v179 = vadd.f32 %v108, %v154
  %v180 = vadd.f32 %v109, %v154
  %v181 = vadd.f32 %v110, %v154
  %v182 = vadd.f32 %v111, %v154
  %v183 = vadd.f32 %v112, %v154
  %v184 = vadd.f32 %v113, %v154
  %v185 = vadd.f32 %v114, %v154
  %v186 = vadd.f32 %v115, %v154
  %v187 = vadd.f32 %v116, %v154
  %v188 = vadd.f32 %v117, %v154
  %v189 = vadd.f32 %v118, %v154
  %v190 = vadd.f32 %v119, %v154
  %v191 = vadd.f32 %v120, %v154
  %v192 = vadd.f32 %v121, %v154
  %v193 = vadd.f32 %v122, %v154
  %v194 = vadd.f32 %v123, %v154
  %v195 = vadd.f32 %v124, %v154
  %v196 = vadd.f32 %v125, %v154
  %v197 = vadd.f32 %v126, %v154
  %v198 = vadd.f32 %v127, %v154
  %v199 = vadd.f32 %v128, %v154
  %v200 = vadd.f32 %v129, %v154
  %v201 = vadd.f32 %v130, %v154
  %v202 = vadd.f32 %v131, %v154
  %v203 = vadd.f32 %v132, %v154
  %v204 = vadd.f32 %v133, %v154
  %v205 = vadd.f32 %v134, %v154
  %v206 = vadd.f32 %v135, %v154
  %v207 = vadd.f32 %v136, %v154
  %v208 = vadd.f32 %v137, %v154
  %v209 = vadd.f32 %v138, %v154
  %v210 = vadd.f32 %v139, %v154
  %v211 = vadd.f32 %v140, %v154
  %v212 = vadd.f32 %v141, %v154
  %v213 = vadd.f32 %v142, %v154
  %v214 = vadd.f32 %v143, %v154
  %v215 = vadd.f32 %v144, %v154
  %v216 = vadd.f32 %v145, %v154
  %v217 = vadd.f32 %v146, %v154
  %v218 = vadd.f32 %v147, %v154
  %v219 = vadd.f32 %v148, %v154
  %v220 = vmax.f32 %v156, 0.0
  %v221 = vmax.f32 %v157, 0.0
  %v222 = vmax.f32 %v158, 0.0
  %v223 = vmax.f32 %v159, 0.0
  %v224 = vmax.f32 %v160, 0.0
  %v225 = vmax.f32 %v161, 0.0
  %v226 = vmax.f32 %v162, 0.0
  %v227 = vmax.f32 %v163, 0.0
  %v228 = vmax.f32 %v164, 0.0
  %v229 = vmax.f32 %v165, 0.0
  %v230 = vmax.f32 %v166, 0.0
  %v231 = vmax.f32 %v167, 0.0
  %v232 = vmax.f32 %v168, 0.0
  %v233 = vmax.f32 %v169, 0.0
  %v234 = vmax.f32 %v170, 0.0
  %v235 = vmax.f32 %v171, 0.0
  %v236 = vmax.f32 %v172, 0.0
  %v237 = vmax.f32 %v173, 0.0
  %v238 = vmax.f32 %v174, 0.0
  %v239 = vmax.f32 %v175, 0.0
  %v240 = vmax.f32 %v176, 0.0
  %v241 = vmax.f32 %v177, 0.0
  %v242 = vmax.f32 %v178, 0.0
  %v243 = vmax.f32 %v179, 0.0
  %v244 = vmax.f32 %v180, 0.0
  %v245 = vmax.f32 %v181, 0.0
  %v246 = vmax.f32 %v182, 0.0
  %v247 = vmax.f32 %v183, 0.0
  %v248 = vmax.f32 %v184, 0.0
  %v249 = vmax.f32 %v185, 0.0
  %v250 = vmax.f32 %v186, 0.0
  %v251 = vmax.f32 %v187, 0.0
  %v252 = vmax.f32 %v188, 0.0
  %v253 = vmax.f32 %v189, 0.0
  %v254 = vmax.f32 %v190, 0.0
  %v255 = vmax.f32 %v191, 0.0
  %v256 = vmax.f32 %v192, 0.0
  %v257 = vmax.f32 %v193, 0.0
  %v258 = vmax.f32 %v194, 0.0
  %v259 = vmax.f32 %v195, 0.0
  %v260 = vmax.f32 %v196, 0.0
  %v261 = vmax.f32 %v197, 0.0
  %v262 = vmax.f32 %v198, 0.0
  %v263 = vmax.f32 %v199, 0.0
  %v264 = vmax.f32 %v200, 0.0
  %v265 = vmax.f32 %v201, 0.0
  %v266 = vmax.f32 %v202, 0.0
  %v267 = vmax.f32 %v203, 0.0
  %v268 = vmax.f32 %v204, 0.0
  %v269 = vmax.f32 %v205, 0.0
  %v270 = vmax.f32 %v206, 0.0
  %v271 = vmax.f32 %v207, 0.0
  %v272 = vmax.f32 %v208, 0.0
  %v273 = vmax.f32 %v209, 0.0
  %v274 = vmax.f32 %v210, 0.0
  %v275 = vmax.f32 %v211, 0.0
  %v276 = vmax.f32 %v212, 0.0
  %v277 = vmax.f32 %v213, 0.0
  %v278 = vmax.f32 %v214, 0.0
  %v279 = vmax.f32 %v215, 0.0
  %v280 = vmax.f32 %v216, 0.0
  %v281 = vmax.f32 %v217, 0.0
  %v282 = vmax.f32 %v218, 0.0
  %v283 = vmax.f32 %v219, 0.0
  %v284 = vmax.f32 %v220, %v228
  %v285 = vmax.f32 %v284, %v236
  %v286 = vmax.f32 %v285, %v244
  %v287 = vmax.f32 %v221, %v229
  %v288 = vmax.f32 %v287, %v237
  %v289 = vmax.f32 %v288, %v245
  %v290 = vmax.f32 %v222, %v230
  %v291 = vmax.f32 %v290, %v238
  %v292 = vmax.f32 %v291, %v246
  %v293 = vmax.f32 %v223, %v231
  %v294 = vmax.f32 %v293, %v239
  %v295 = vmax.f32 %v294, %v247
  %v296 = vmax.f32 %v224, %v232
  %v297 = vmax.f32 %v296, %v240
  %v298 = vmax.f32 %v297, %v248
  %v299 = vmax.f32 %v225, %v233
  %v300 = vmax.f32 %v299, %v241
  %v301 = vmax.f32 %v300, %v249
  %v302 = vmax.f32 %v226, %v234
  %v303 = vmax.f32 %v302, %v242
  %v304 = vmax.f32 %v303, %v250
  %v305 = vmax.f32 %v227, %v235
  %v306 = vmax.f32 %v305, %v243
  %v307 = vmax.f32 %v306, %v251
  %v308 = vmax.f32 %v252, %v260
  %v309 = vmax.f32 %v308, %v268
  %v310 = vmax.f32 %v309, %v276
  %v311 = vmax.f32 %v253, %v261
  %v312 = vmax.f32 %v311, %v269
  %v313 = vmax.f32 %v312, %v277
  %v314 = vmax.f32 %v254, %v262
  %v315 = vmax.f32 %v314, %v270
  %v316 = vmax.f32 %v315, %v278
  %v317 = vmax.f32 %v255, %v263
  %v318 = vmax.f32 %v317, %v271
  %v319 = vmax.f32 %v318, %v279
  %v320 = vmax.f32 %v256, %v264
  %v321 = vmax.f32 %v320, %v272
  %v322 = vmax.f32 %v321, %v280
  %v323 = vmax.f32 %v257, %v265
  %v324 = vmax.f32 %v323, %v273
  %v325 = vmax.f32 %v324, %v281
  %v326 = vmax.f32 %v258, %v266
  %v327 = vmax.f32 %v326, %v274
  %v328 = vmax.f32 %v327, %v282
  %v329 = vmax.f32 %v259, %v267
  %v330 = vmax.f32 %v329, %v275
  %v331 = vmax.f32 %v330, %v283
  %332 = vst [vmem:[%s3] sm:$0xff] %v286
  %333 = vst [vmem:[%s3 + $0x8] sm:$0xff] %v289
  %334 = vst [vmem:[%s3 + $0x10] sm:$0xff] %v292
  %335 = vst [vmem:[%s3 + $0x18] sm:$0xff] %v295
  %336 = vst [vmem:[%s3 + $0x20] sm:$0xff] %v298
  %337 = vst [vmem:[%s3 + $0x28] sm:$0xff] %v301
  %338 = vst [vmem:[%s3 + $0x30] sm:$0xff] %v304
  %339 = vst [vmem:[%s3 + $0x38] sm:$0xff] %v307
  %340 = vst [vmem:[%s3 + $0x40] sm:$0xff] %v310
  %341 = vst [vmem:[%s3 + $0x48] sm:$0xff] %v313
  %342 = vst [vmem:[%s3 + $0x50] sm:$0xff] %v316
  %343 = vst [vmem:[%s3 + $0x58] sm:$0xff] %v319
  %344 = vst [vmem:[%s3 + $0x60] sm:$0xff] %v322
  %345 = vst [vmem:[%s3 + $0x68] sm:$0xff] %v325
  %346 = vst [vmem:[%s3 + $0x70] sm:$0xff] %v328
  %347 = vst [vmem:[%s3 + $0x78] sm:$0xff] %v331
  // Predicated region
  $region14: #{conv_etal_forward.7} parent=0 // pred_check
    _
  $region15: #{conv_etal_forward.7} parent=0 // pred_check_branch
    %349 = sbr.rel (0) target = $region17
  $region16: #{conv_etal_forward.7} parent=0 // pred_region
    _
  $region17: #{conv_etal_forward.7} parent=0 // pred_fallthru
    _
  // Predicated region
  $region18: #{conv_etal_forward.7} parent=0 // pred_check
    _
  $region19: #{conv_etal_forward.7} parent=0 // pred_check_branch
    %351 = sbr.rel (0) target = $region21
  $region20: #{conv_etal_forward.7} parent=0 // pred_region
    _
  $region21: #{conv_etal_forward.7} parent=0 // pred_fallthru
    _

// kernel: conv_etal_forward.6
$region0: #{conv_etal_forward.6}
  #allocation0 [shape = 'u32[]', space=smem, size = 0x4, offset = 0x4, fixed_abs, tag = 'smem constant byte address 0x4 - core index']
  #allocation1 [shape = 'u32[144,128]{1,0:T(1,128)}', space=vmem, size = 0x12000, scoped, tag = 'internal scratch']
  %s0 = inlined_call_operand.vmem [shape: bf16[2,4,64,36], index: 0, kind: input, shape index: {}]
  %s1 = inlined_call_operand.vmem [shape: bf16[36,128], index: 1, kind: input, shape index: {}]
  %s2 = inlined_call_operand.vmem [shape: f32[2,4,64,128], index: 2, kind: output, shape index: {0}]
  %s3 = inlined_call_operand.vmem [shape: f32[1,2,128], index: 3, kind: output, shape index: {1}]
  %4 = xla_tuple %s2, %s3
  %s5 = sld [smem:[#allocation0]]
  $region26: #{conv_etal_forward.6} parent=0
    _
  %s7 = ssub.s32 1, %s5
  %s8 = scalar_select 0, %s7, %s5
  // Predicated region
  $region2: #{conv_etal_forward.6} parent=0 // pred_check
    _
  $region3: #{conv_etal_forward.6} parent=0 // pred_check_branch
    %10 = sbr.rel (0) target = $region5
  $region4: #{conv_etal_forward.6} parent=0 // pred_region
    _
  $region5: #{conv_etal_forward.6} parent=0 // pred_fallthru
    _
  // Predicated region
  $region6: #{conv_etal_forward.6} parent=0 // pred_check
    _
  $region7: #{conv_etal_forward.6} parent=0 // pred_check_branch
    %12 = sbr.rel (0) target = $region9
  $region8: #{conv_etal_forward.6} parent=0 // pred_region
    _
  $region9: #{conv_etal_forward.6} parent=0 // pred_fallthru
    _
  %v14 = vld [vmem:[%s0] sm:$0xf]
  %v15 = vld [vmem:[%s0 + $0x4] sm:$0xf]
  %v16 = vld [vmem:[%s0 + $0x8] sm:$0xf]
  %v17 = vld [vmem:[%s0 + $0xc] sm:$0xf]
  %v18 = vld [vmem:[%s0 + $0x10] sm:$0xf]
  %v19 = vld [vmem:[%s0 + $0x14] sm:$0xf]
  %v20 = vld [vmem:[%s0 + $0x18] sm:$0xf]
  %v21 = vld [vmem:[%s0 + $0x1c] sm:$0xf]
  %v22 = vld [vmem:[%s0 + $0x20] sm:$0xf]
  %v23 = vld [vmem:[%s0 + $0x24] sm:$0xf]
  %v24 = vld [vmem:[%s0 + $0x28] sm:$0xf]
  %v25 = vld [vmem:[%s0 + $0x2c] sm:$0xf]
  %v26 = vld [vmem:[%s0 + $0x30] sm:$0xf]
  %v27 = vld [vmem:[%s0 + $0x34] sm:$0xf]
  %v28 = vld [vmem:[%s0 + $0x38] sm:$0xf]
  %v29 = vld [vmem:[%s0 + $0x3c] sm:$0xf]
  %v30 = vld [vmem:[%s0 + $0x40] sm:$0xf]
  %v31 = vld [vmem:[%s0 + $0x44] sm:$0xf]
  %v32 = vld [vmem:[%s0 + $0x48] sm:$0xf]
  %v33 = vld [vmem:[%s0 + $0x4c] sm:$0xf]
  %v34 = vld [vmem:[%s0 + $0x50] sm:$0xf]
  %v35 = vld [vmem:[%s0 + $0x54] sm:$0xf]
  %v36 = vld [vmem:[%s0 + $0x58] sm:$0xf]
  %v37 = vld [vmem:[%s0 + $0x5c] sm:$0xf]
  %v38 = vld [vmem:[%s0 + $0x60] sm:$0xf]
  %v39 = vld [vmem:[%s0 + $0x64] sm:$0xf]
  %v40 = vld [vmem:[%s0 + $0x68] sm:$0xf]
  %v41 = vld [vmem:[%s0 + $0x6c] sm:$0xf]
  %v42 = vld [vmem:[%s0 + $0x70] sm:$0xf]
  %v43 = vld [vmem:[%s0 + $0x74] sm:$0xf]
  %v44 = vld [vmem:[%s0 + $0x78] sm:$0xf]
  %v45 = vld [vmem:[%s0 + $0x7c] sm:$0xf]
  %v46 = vld [vmem:[%s0 + $0x80] sm:$0xf]
  %v47 = vld [vmem:[%s0 + $0x84] sm:$0xf]
  %v48 = vld [vmem:[%s0 + $0x88] sm:$0xf]
  %v49 = vld [vmem:[%s0 + $0x8c] sm:$0xf]
  %v50 = vld [vmem:[%s0 + $0x90] sm:$0xf]
  %v51 = vld [vmem:[%s0 + $0x94] sm:$0xf]
  %v52 = vld [vmem:[%s0 + $0x98] sm:$0xf]
  %v53 = vld [vmem:[%s0 + $0x9c] sm:$0xf]
  %v54 = vld [vmem:[%s0 + $0xa0] sm:$0xf]
  %v55 = vld [vmem:[%s0 + $0xa4] sm:$0xf]
  %v56 = vld [vmem:[%s0 + $0xa8] sm:$0xf]
  %v57 = vld [vmem:[%s0 + $0xac] sm:$0xf]
  %v58 = vld [vmem:[%s0 + $0xb0] sm:$0xf]
  %v59 = vld [vmem:[%s0 + $0xb4] sm:$0xf]
  %v60 = vld [vmem:[%s0 + $0xb8] sm:$0xf]
  %v61 = vld [vmem:[%s0 + $0xbc] sm:$0xf]
  %v62 = vld [vmem:[%s0 + $0xc0] sm:$0xf]
  %v63 = vld [vmem:[%s0 + $0xc4] sm:$0xf]
  %v64 = vld [vmem:[%s0 + $0xc8] sm:$0xf]
  %v65 = vld [vmem:[%s0 + $0xcc] sm:$0xf]
  %v66 = vld [vmem:[%s0 + $0xd0] sm:$0xf]
  %v67 = vld [vmem:[%s0 + $0xd4] sm:$0xf]
  %v68 = vld [vmem:[%s0 + $0xd8] sm:$0xf]
  %v69 = vld [vmem:[%s0 + $0xdc] sm:$0xf]
  %v70 = vld [vmem:[%s0 + $0xe0] sm:$0xf]
  %v71 = vld [vmem:[%s0 + $0xe4] sm:$0xf]
  %v72 = vld [vmem:[%s0 + $0xe8] sm:$0xf]
  %v73 = vld [vmem:[%s0 + $0xec] sm:$0xf]
  %v74 = vld [vmem:[%s0 + $0xf0] sm:$0xf]
  %v75 = vld [vmem:[%s0 + $0xf4] sm:$0xf]
  %v76 = vld [vmem:[%s0 + $0xf8] sm:$0xf]
  %v77 = vld [vmem:[%s0 + $0xfc] sm:$0xf]
  %v78 = vld [vmem:[%s1] sm:$0xf]
  %v79 = vld [vmem:[%s1 + $0x4] sm:$0xf]
  %v80 = vld [vmem:[%s1 + $0x8] sm:$0xf]
  %v81 = vld [vmem:[%s1 + $0xc] sm:$0xf]
  %v82 = vld [vmem:[%s1 + $0x10] sm:$0x3]
  %v147 = vunpack.c.l.b16 %v14
  %v148 = vunpack.c.l.b16 %v15
  %v149 = vunpack.c.l.b16 %v16
  %v150 = vunpack.c.l.b16 %v17
  %v151 = vunpack.c.l.b16 %v18
  %v152 = vunpack.c.l.b16 %v19
  %v153 = vunpack.c.l.b16 %v20
  %v154 = vunpack.c.l.b16 %v21
  %v155 = vunpack.c.l.b16 %v22
  %v156 = vunpack.c.l.b16 %v23
  %v157 = vunpack.c.l.b16 %v24
  %v158 = vunpack.c.l.b16 %v25
  %v159 = vunpack.c.l.b16 %v26
  %v160 = vunpack.c.l.b16 %v27
  %v161 = vunpack.c.l.b16 %v28
  %v162 = vunpack.c.l.b16 %v29
  %v163 = vunpack.c.l.b16 %v30
  %v164 = vunpack.c.l.b16 %v31
  %v165 = vunpack.c.l.b16 %v32
  %v166 = vunpack.c.l.b16 %v33
  %v167 = vunpack.c.l.b16 %v34
  %v168 = vunpack.c.l.b16 %v35
  %v169 = vunpack.c.l.b16 %v36
  %v170 = vunpack.c.l.b16 %v37
  %v171 = vunpack.c.l.b16 %v38
  %v172 = vunpack.c.l.b16 %v39
  %v173 = vunpack.c.l.b16 %v40
  %v174 = vunpack.c.l.b16 %v41
  %v175 = vunpack.c.l.b16 %v42
  %v176 = vunpack.c.l.b16 %v43
  %v177 = vunpack.c.l.b16 %v44
  %v178 = vunpack.c.l.b16 %v45
  %v179 = vunpack.c.l.b16 %v46
  %v180 = vunpack.c.l.b16 %v47
  %v181 = vunpack.c.l.b16 %v48
  %v182 = vunpack.c.l.b16 %v49
  %v183 = vunpack.c.l.b16 %v50
  %v184 = vunpack.c.l.b16 %v51
  %v185 = vunpack.c.l.b16 %v52
  %v186 = vunpack.c.l.b16 %v53
  %v187 = vunpack.c.l.b16 %v54
  %v188 = vunpack.c.l.b16 %v55
  %v189 = vunpack.c.l.b16 %v56
  %v190 = vunpack.c.l.b16 %v57
  %v191 = vunpack.c.l.b16 %v58
  %v192 = vunpack.c.l.b16 %v59
  %v193 = vunpack.c.l.b16 %v60
  %v194 = vunpack.c.l.b16 %v61
  %v195 = vunpack.c.l.b16 %v62
  %v196 = vunpack.c.l.b16 %v63
  %v197 = vunpack.c.l.b16 %v64
  %v198 = vunpack.c.l.b16 %v65
  %v199 = vunpack.c.l.b16 %v66
  %v200 = vunpack.c.l.b16 %v67
  %v201 = vunpack.c.l.b16 %v68
  %v202 = vunpack.c.l.b16 %v69
  %v203 = vunpack.c.l.b16 %v70
  %v204 = vunpack.c.l.b16 %v71
  %v205 = vunpack.c.l.b16 %v72
  %v206 = vunpack.c.l.b16 %v73
  %v207 = vunpack.c.l.b16 %v74
  %v208 = vunpack.c.l.b16 %v75
  %v209 = vunpack.c.l.b16 %v76
  %v210 = vunpack.c.l.b16 %v77
  %v211 = vpack.c.b16 %v148, %v147
  %v212 = vpack.c.b16 %v150, %v149
  %v213 = vpack.c.b16 %v152, %v151
  %v214 = vpack.c.b16 %v154, %v153
  %v215 = vpack.c.b16 %v156, %v155
  %v216 = vpack.c.b16 %v158, %v157
  %v217 = vpack.c.b16 %v160, %v159
  %v218 = vpack.c.b16 %v162, %v161
  %v219 = vpack.c.b16 %v164, %v163
  %v220 = vpack.c.b16 %v166, %v165
  %v221 = vpack.c.b16 %v168, %v167
  %v222 = vpack.c.b16 %v170, %v169
  %v223 = vpack.c.b16 %v172, %v171
  %v224 = vpack.c.b16 %v174, %v173
  %v225 = vpack.c.b16 %v176, %v175
  %v226 = vpack.c.b16 %v178, %v177
  %v227 = vpack.c.b16 %v180, %v179
  %v228 = vpack.c.b16 %v182, %v181
  %v229 = vpack.c.b16 %v184, %v183
  %v230 = vpack.c.b16 %v186, %v185
  %v231 = vpack.c.b16 %v188, %v187
  %v232 = vpack.c.b16 %v190, %v189
  %v233 = vpack.c.b16 %v192, %v191
  %v234 = vpack.c.b16 %v194, %v193
  %v235 = vpack.c.b16 %v196, %v195
  %v236 = vpack.c.b16 %v198, %v197
  %v237 = vpack.c.b16 %v200, %v199
  %v238 = vpack.c.b16 %v202, %v201
  %v239 = vpack.c.b16 %v204, %v203
  %v240 = vpack.c.b16 %v206, %v205
  %v241 = vpack.c.b16 %v208, %v207
  %v242 = vpack.c.b16 %v210, %v209
  %v248 = vunpack.c.l.b16 %v78
  %v249 = vunpack.c.l.b16 %v79
  %v250 = vunpack.c.l.b16 %v80
  %v251 = vunpack.c.l.b16 %v81
  %v252 = vunpack.c.l.b16 %v82
  %v253 = vpack.c.b16 %v249, %v248
  %v254 = vpack.c.b16 %v251, %v250
  %v255 = vpack.c.b16 %v252, %v252
  %vm258 = vcmask 293888
  %v260 = vsel %vm258, %v211, 0
  %v263 = vsel %vm258, %v212, 0
  %v266 = vsel %vm258, %v213, 0
  %v269 = vsel %vm258, %v214, 0
  %v272 = vsel %vm258, %v215, 0
  %v275 = vsel %vm258, %v216, 0
  %v278 = vsel %vm258, %v217, 0
  %v281 = vsel %vm258, %v218, 0
  %v284 = vsel %vm258, %v219, 0
  %v287 = vsel %vm258, %v220, 0
  %v290 = vsel %vm258, %v221, 0
  %v293 = vsel %vm258, %v222, 0
  %v296 = vsel %vm258, %v223, 0
  %v299 = vsel %vm258, %v224, 0
  %v302 = vsel %vm258, %v225, 0
  %v305 = vsel %vm258, %v226, 0
  %v308 = vsel %vm258, %v227, 0
  %v311 = vsel %vm258, %v228, 0
  %v314 = vsel %vm258, %v229, 0
  %v317 = vsel %vm258, %v230, 0
  %v320 = vsel %vm258, %v231, 0
  %v323 = vsel %vm258, %v232, 0
  %v326 = vsel %vm258, %v233, 0
  %v329 = vsel %vm258, %v234, 0
  %v332 = vsel %vm258, %v235, 0
  %v335 = vsel %vm258, %v236, 0
  %v338 = vsel %vm258, %v237, 0
  %v341 = vsel %vm258, %v238, 0
  %v344 = vsel %vm258, %v239, 0
  %v347 = vsel %vm258, %v240, 0
  %v350 = vsel %vm258, %v241, 0
  %v353 = vsel %vm258, %v242, 0
  %vm355 = vcmask 1041408
  %v357 = vsel %vm355, %v255, 0
  %359 = vmatprep.subr.bf16.mxu0 0
  %360 = vmatpush1.bf16.msra.mxu0 0
  %361 = vmatprep.subr.bf16.mxu0 0
  %362 = vmatpush1.bf16.msra.mxu0 0
  %363 = vmatprep.subr.bf16.mxu0 0
  %364 = vmatpush1.bf16.msra.mxu0 0
  %365 = vmatprep.subr.bf16.mxu0 0
  %366 = vmatpush1.bf16.msra.mxu0 0
  %367 = vmatprep.subr.bf16.mxu0 0
  %368 = vmatpush1.bf16.msra.mxu0 0
  %369 = vmatprep.subr.bf16.mxu0 0
  %370 = vmatpush1.bf16.msra.mxu0 %v357
  %371 = vmatprep.subr.bf16.mxu0 0
  %372 = vmatpush1.bf16.msra.mxu0 %v254
  %373 = vmatprep.subr.bf16.mxu0 0
  %374 = vmatpush1.bf16.msra.mxu0 %v253
  %375 = vmatprep.subr.bf16.mxu0 0
  %376 = vmatpush2.bf16.msra.mxu0 0
  %377 = vmatprep.subr.bf16.mxu0 0
  %378 = vmatpush2.bf16.msra.mxu0 0
  %379 = vmatprep.subr.bf16.mxu0 0
  %380 = vmatpush2.bf16.msra.mxu0 0
  %381 = vmatprep.subr.bf16.mxu0 0
  %382 = vmatpush2.bf16.msra.mxu0 0
  %383 = vmatprep.subr.bf16.mxu0 0
  %384 = vmatpush2.bf16.msra.mxu0 0
  %385 = vmatprep.subr.bf16.mxu0 0
  %386 = vmatpush2.bf16.msra.mxu0 0
  %387 = vmatprep.subr.bf16.mxu0 0
  %388 = vmatpush2.bf16.msra.mxu0 0
  %389 = vmatprep.subr.bf16.mxu0 0
  %390 = vmatpush2.bf16.msra.mxu0 0
  %391 = vmatprep.mubr.bf16.mxu0 0
  %392 = vmatmul.mubr.bf16.gmra.mxu0 %v260
  %v393 = vpop.f32.mrf.mxu0
  %v394 = vadd.f32 0.0, %v393
  %v395 = vpop.f32.mrf.mxu0
  %v396 = vpop.f32.mrf.mxu0
  %v397 = vadd.f32 0.0, %v396
  %v398 = vpop.f32.mrf.mxu0
  %399 = vmatprep.mubr.bf16.mxu0 0
  %400 = vmatmul.mubr.bf16.gmra.mxu0 %v263
  %v401 = vpop.f32.mrf.mxu0
  %v402 = vadd.f32 0.0, %v401
  %v403 = vpop.f32.mrf.mxu0
  %v404 = vpop.f32.mrf.mxu0
  %v405 = vadd.f32 0.0, %v404
  %v406 = vpop.f32.mrf.mxu0
  %407 = vmatprep.mubr.bf16.mxu0 0
  %408 = vmatmul.mubr.bf16.gmra.mxu0 %v266
  %v409 = vpop.f32.mrf.mxu0
  %v410 = vadd.f32 0.0, %v409
  %v411 = vpop.f32.mrf.mxu0
  %v412 = vpop.f32.mrf.mxu0
  %v413 = vadd.f32 0.0, %v412
  %v414 = vpop.f32.mrf.mxu0
  %415 = vmatprep.mubr.bf16.mxu0 0
  %416 = vmatmul.mubr.bf16.gmra.mxu0 %v269
  %v417 = vpop.f32.mrf.mxu0
  %v418 = vadd.f32 0.0, %v417
  %v419 = vpop.f32.mrf.mxu0
  %v420 = vpop.f32.mrf.mxu0
  %v421 = vadd.f32 0.0, %v420
  %v422 = vpop.f32.mrf.mxu0
  %423 = vmatprep.mubr.bf16.mxu0 0
  %424 = vmatmul.mubr.bf16.gmra.mxu0 %v272
  %v425 = vpop.f32.mrf.mxu0
  %v426 = vadd.f32 0.0, %v425
  %v427 = vpop.f32.mrf.mxu0
  %v428 = vpop.f32.mrf.mxu0
  %v429 = vadd.f32 0.0, %v428
  %v430 = vpop.f32.mrf.mxu0
  %431 = vmatprep.mubr.bf16.mxu0 0
  %432 = vmatmul.mubr.bf16.gmra.mxu0 %v275
  %v433 = vpop.f32.mrf.mxu0
  %v434 = vadd.f32 0.0, %v433
  %v435 = vpop.f32.mrf.mxu0
  %v436 = vpop.f32.mrf.mxu0
  %v437 = vadd.f32 0.0, %v436
  %v438 = vpop.f32.mrf.mxu0
  %439 = vmatprep.mubr.bf16.mxu0 0
  %440 = vmatmul.mubr.bf16.gmra.mxu0 %v278
  %v441 = vpop.f32.mrf.mxu0
  %v442 = vadd.f32 0.0, %v441
  %v443 = vpop.f32.mrf.mxu0
  %v444 = vpop.f32.mrf.mxu0
  %v445 = vadd.f32 0.0, %v444
  %v446 = vpop.f32.mrf.mxu0
  %447 = vmatprep.mubr.bf16.mxu0 0
  %448 = vmatmul.mubr.bf16.gmra.mxu0 %v281
  %v449 = vpop.f32.mrf.mxu0
  %v450 = vadd.f32 0.0, %v449
  %v451 = vpop.f32.mrf.mxu0
  %v452 = vpop.f32.mrf.mxu0
  %v453 = vadd.f32 0.0, %v452
  %v454 = vpop.f32.mrf.mxu0
  %455 = vmatprep.mubr.bf16.mxu0 0
  %456 = vmatmul.mubr.bf16.gmra.mxu0 %v284
  %v457 = vpop.f32.mrf.mxu0
  %v458 = vadd.f32 0.0, %v457
  %v459 = vpop.f32.mrf.mxu0
  %v460 = vpop.f32.mrf.mxu0
  %v461 = vadd.f32 0.0, %v460
  %v462 = vpop.f32.mrf.mxu0
  %463 = vmatprep.mubr.bf16.mxu0 0
  %464 = vmatmul.mubr.bf16.gmra.mxu0 %v287
  %v465 = vpop.f32.mrf.mxu0
  %v466 = vadd.f32 0.0, %v465
  %v467 = vpop.f32.mrf.mxu0
  %v468 = vpop.f32.mrf.mxu0
  %v469 = vadd.f32 0.0, %v468
  %v470 = vpop.f32.mrf.mxu0
  %471 = vmatprep.mubr.bf16.mxu0 0
  %472 = vmatmul.mubr.bf16.gmra.mxu0 %v290
  %v473 = vpop.f32.mrf.mxu0
  %v474 = vadd.f32 0.0, %v473
  %v475 = vpop.f32.mrf.mxu0
  %v476 = vpop.f32.mrf.mxu0
  %v477 = vadd.f32 0.0, %v476
  %v478 = vpop.f32.mrf.mxu0
  %479 = vmatprep.mubr.bf16.mxu0 0
  %480 = vmatmul.mubr.bf16.gmra.mxu0 %v293
  %v481 = vpop.f32.mrf.mxu0
  %v482 = vadd.f32 0.0, %v481
  %v483 = vpop.f32.mrf.mxu0
  %v484 = vpop.f32.mrf.mxu0
  %v485 = vadd.f32 0.0, %v484
  %v486 = vpop.f32.mrf.mxu0
  %487 = vmatprep.mubr.bf16.mxu0 0
  %488 = vmatmul.mubr.bf16.gmra.mxu0 %v296
  %v489 = vpop.f32.mrf.mxu0
  %v490 = vadd.f32 0.0, %v489
  %v491 = vpop.f32.mrf.mxu0
  %v492 = vpop.f32.mrf.mxu0
  %v493 = vadd.f32 0.0, %v492
  %v494 = vpop.f32.mrf.mxu0
  %495 = vmatprep.mubr.bf16.mxu0 0
  %496 = vmatmul.mubr.bf16.gmra.mxu0 %v299
  %v497 = vpop.f32.mrf.mxu0
  %v498 = vadd.f32 0.0, %v497
  %v499 = vpop.f32.mrf.mxu0
  %v500 = vpop.f32.mrf.mxu0
  %v501 = vadd.f32 0.0, %v500
  %v502 = vpop.f32.mrf.mxu0
  %503 = vmatprep.mubr.bf16.mxu0 0
  %504 = vmatmul.mubr.bf16.gmra.mxu0 %v302
  %v505 = vpop.f32.mrf.mxu0
  %v506 = vadd.f32 0.0, %v505
  %v507 = vpop.f32.mrf.mxu0
  %v508 = vpop.f32.mrf.mxu0
  %v509 = vadd.f32 0.0, %v508
  %v510 = vpop.f32.mrf.mxu0
  %511 = vmatprep.mubr.bf16.mxu0 0
  %512 = vmatmul.mubr.bf16.gmra.mxu0 %v305
  %v513 = vpop.f32.mrf.mxu0
  %v514 = vadd.f32 0.0, %v513
  %v515 = vpop.f32.mrf.mxu0
  %v516 = vpop.f32.mrf.mxu0
  %v517 = vadd.f32 0.0, %v516
  %v518 = vpop.f32.mrf.mxu0
  %519 = vmatprep.mubr.bf16.mxu0 0
  %520 = vmatmul.mubr.bf16.gmra.mxu0 %v308
  %v521 = vpop.f32.mrf.mxu0
  %v522 = vadd.f32 0.0, %v521
  %v523 = vpop.f32.mrf.mxu0
  %v524 = vpop.f32.mrf.mxu0
  %v525 = vadd.f32 0.0, %v524
  %v526 = vpop.f32.mrf.mxu0
  %527 = vmatprep.mubr.bf16.mxu0 0
  %528 = vmatmul.mubr.bf16.gmra.mxu0 %v311
  %v529 = vpop.f32.mrf.mxu0
  %v530 = vadd.f32 0.0, %v529
  %v531 = vpop.f32.mrf.mxu0
  %v532 = vpop.f32.mrf.mxu0
  %v533 = vadd.f32 0.0, %v532
  %v534 = vpop.f32.mrf.mxu0
  %535 = vmatprep.mubr.bf16.mxu0 0
  %536 = vmatmul.mubr.bf16.gmra.mxu0 %v314
  %v537 = vpop.f32.mrf.mxu0
  %v538 = vadd.f32 0.0, %v537
  %v539 = vpop.f32.mrf.mxu0
  %v540 = vpop.f32.mrf.mxu0
  %v541 = vadd.f32 0.0, %v540
  %v542 = vpop.f32.mrf.mxu0
  %543 = vmatprep.mubr.bf16.mxu0 0
  %544 = vmatmul.mubr.bf16.gmra.mxu0 %v317
  %v545 = vpop.f32.mrf.mxu0
  %v546 = vadd.f32 0.0, %v545
  %v547 = vpop.f32.mrf.mxu0
  %v548 = vpop.f32.mrf.mxu0
  %v549 = vadd.f32 0.0, %v548
  %v550 = vpop.f32.mrf.mxu0
  %551 = vmatprep.mubr.bf16.mxu0 0
  %552 = vmatmul.mubr.bf16.gmra.mxu0 %v320
  %v553 = vpop.f32.mrf.mxu0
  %v554 = vadd.f32 0.0, %v553
  %v555 = vpop.f32.mrf.mxu0
  %v556 = vpop.f32.mrf.mxu0
  %v557 = vadd.f32 0.0, %v556
  %v558 = vpop.f32.mrf.mxu0
  %559 = vmatprep.mubr.bf16.mxu0 0
  %560 = vmatmul.mubr.bf16.gmra.mxu0 %v323
  %v561 = vpop.f32.mrf.mxu0
  %v562 = vadd.f32 0.0, %v561
  %v563 = vpop.f32.mrf.mxu0
  %v564 = vpop.f32.mrf.mxu0
  %v565 = vadd.f32 0.0, %v564
  %v566 = vpop.f32.mrf.mxu0
  %567 = vmatprep.mubr.bf16.mxu0 0
  %568 = vmatmul.mubr.bf16.gmra.mxu0 %v326
  %v569 = vpop.f32.mrf.mxu0
  %v570 = vadd.f32 0.0, %v569
  %v571 = vpop.f32.mrf.mxu0
  %v572 = vpop.f32.mrf.mxu0
  %v573 = vadd.f32 0.0, %v572
  %v574 = vpop.f32.mrf.mxu0
  %575 = vmatprep.mubr.bf16.mxu0 0
  %576 = vmatmul.mubr.bf16.gmra.mxu0 %v329
  %v577 = vpop.f32.mrf.mxu0
  %v578 = vadd.f32 0.0, %v577
  %v579 = vpop.f32.mrf.mxu0
  %v580 = vpop.f32.mrf.mxu0
  %v581 = vadd.f32 0.0, %v580
  %v582 = vpop.f32.mrf.mxu0
  %583 = vmatprep.mubr.bf16.mxu0 0
  %584 = vmatmul.mubr.bf16.gmra.mxu0 %v332
  %v585 = vpop.f32.mrf.mxu0
  %v586 = vadd.f32 0.0, %v585
  %v587 = vpop.f32.mrf.mxu0
  %v588 = vpop.f32.mrf.mxu0
  %v589 = vadd.f32 0.0, %v588
  %v590 = vpop.f32.mrf.mxu0
  %591 = vmatprep.mubr.bf16.mxu0 0
  %592 = vmatmul.mubr.bf16.gmra.mxu0 %v335
  %v593 = vpop.f32.mrf.mxu0
  %v594 = vadd.f32 0.0, %v593
  %v595 = vpop.f32.mrf.mxu0
  %v596 = vpop.f32.mrf.mxu0
  %v597 = vadd.f32 0.0, %v596
  %v598 = vpop.f32.mrf.mxu0
  %599 = vmatprep.mubr.bf16.mxu0 0
  %600 = vmatmul.mubr.bf16.gmra.mxu0 %v338
  %v601 = vpop.f32.mrf.mxu0
  %v602 = vadd.f32 0.0, %v601
  %v603 = vpop.f32.mrf.mxu0
  %v604 = vpop.f32.mrf.mxu0
  %v605 = vadd.f32 0.0, %v604
  %v606 = vpop.f32.mrf.mxu0
  %607 = vmatprep.mubr.bf16.mxu0 0
  %608 = vmatmul.mubr.bf16.gmra.mxu0 %v341
  %v609 = vpop.f32.mrf.mxu0
  %v610 = vadd.f32 0.0, %v609
  %v611 = vpop.f32.mrf.mxu0
  %v612 = vpop.f32.mrf.mxu0
  %v613 = vadd.f32 0.0, %v612
  %v614 = vpop.f32.mrf.mxu0
  %615 = vmatprep.mubr.bf16.mxu0 0
  %616 = vmatmul.mubr.bf16.gmra.mxu0 %v344
  %v617 = vpop.f32.mrf.mxu0
  %v618 = vadd.f32 0.0, %v617
  %v619 = vpop.f32.mrf.mxu0
  %v620 = vpop.f32.mrf.mxu0
  %v621 = vadd.f32 0.0, %v620
  %v622 = vpop.f32.mrf.mxu0
  %623 = vmatprep.mubr.bf16.mxu0 0
  %624 = vmatmul.mubr.bf16.gmra.mxu0 %v347
  %v625 = vpop.f32.mrf.mxu0
  %v626 = vadd.f32 0.0, %v625
  %v627 = vpop.f32.mrf.mxu0
  %v628 = vpop.f32.mrf.mxu0
  %v629 = vadd.f32 0.0, %v628
  %v630 = vpop.f32.mrf.mxu0
  %631 = vmatprep.mubr.bf16.mxu0 0
  %632 = vmatmul.mubr.bf16.gmra.mxu0 %v350
  %v633 = vpop.f32.mrf.mxu0
  %v634 = vadd.f32 0.0, %v633
  %v635 = vpop.f32.mrf.mxu0
  %v636 = vpop.f32.mrf.mxu0
  %v637 = vadd.f32 0.0, %v636
  %v638 = vpop.f32.mrf.mxu0
  %639 = vmatprep.mubr.bf16.mxu0 0
  %640 = vmatmul.mubr.bf16.gmra.mxu0 %v353
  %v641 = vpop.f32.mrf.mxu0
  %v642 = vadd.f32 0.0, %v641
  %v643 = vpop.f32.mrf.mxu0
  %v644 = vpop.f32.mrf.mxu0
  %v645 = vadd.f32 0.0, %v644
  %v646 = vpop.f32.mrf.mxu0
  %647 = vdwg.mxu0
  %648 = vst [vmem:[%s2] sm:$0xff] %v394
  %649 = vst [vmem:[%s2 + $0x8] sm:$0xff] %v397
  %650 = vst [vmem:[%s2 + $0x10] sm:$0xff] %v402
  %651 = vst [vmem:[%s2 + $0x18] sm:$0xff] %v405
  %652 = vst [vmem:[%s2 + $0x20] sm:$0xff] %v410
  %653 = vst [vmem:[%s2 + $0x28] sm:$0xff] %v413
  %654 = vst [vmem:[%s2 + $0x30] sm:$0xff] %v418
  %655 = vst [vmem:[%s2 + $0x38] sm:$0xff] %v421
  %656 = vst [vmem:[%s2 + $0x40] sm:$0xff] %v426
  %657 = vst [vmem:[%s2 + $0x48] sm:$0xff] %v429
  %658 = vst [vmem:[%s2 + $0x50] sm:$0xff] %v434
  %659 = vst [vmem:[%s2 + $0x58] sm:$0xff] %v437
  %660 = vst [vmem:[%s2 + $0x60] sm:$0xff] %v442
  %661 = vst [vmem:[%s2 + $0x68] sm:$0xff] %v445
  %662 = vst [vmem:[%s2 + $0x70] sm:$0xff] %v450
  %663 = vst [vmem:[%s2 + $0x78] sm:$0xff] %v453
  %664 = vst [vmem:[%s2 + $0x80] sm:$0xff] %v458
  %665 = vst [vmem:[%s2 + $0x88] sm:$0xff] %v461
  %666 = vst [vmem:[%s2 + $0x90] sm:$0xff] %v466
  %667 = vst [vmem:[%s2 + $0x98] sm:$0xff] %v469
  %668 = vst [vmem:[%s2 + $0xa0] sm:$0xff] %v474
  %669 = vst [vmem:[%s2 + $0xa8] sm:$0xff] %v477
  %670 = vst [vmem:[%s2 + $0xb0] sm:$0xff] %v482
  %671 = vst [vmem:[%s2 + $0xb8] sm:$0xff] %v485
  %672 = vst [vmem:[%s2 + $0xc0] sm:$0xff] %v490
  %673 = vst [vmem:[%s2 + $0xc8] sm:$0xff] %v493
  %674 = vst [vmem:[%s2 + $0xd0] sm:$0xff] %v498
  %675 = vst [vmem:[%s2 + $0xd8] sm:$0xff] %v501
  %676 = vst [vmem:[%s2 + $0xe0] sm:$0xff] %v506
  %677 = vst [vmem:[%s2 + $0xe8] sm:$0xff] %v509
  %678 = vst [vmem:[%s2 + $0xf0] sm:$0xff] %v514
  %679 = vst [vmem:[%s2 + $0xf8] sm:$0xff] %v517
  %680 = vst [vmem:[%s2 + $0x100] sm:$0xff] %v522
  %681 = vst [vmem:[%s2 + $0x108] sm:$0xff] %v525
  %682 = vst [vmem:[%s2 + $0x110] sm:$0xff] %v530
  %683 = vst [vmem:[%s2 + $0x118] sm:$0xff] %v533
  %684 = vst [vmem:[%s2 + $0x120] sm:$0xff] %v538
  %685 = vst [vmem:[%s2 + $0x128] sm:$0xff] %v541
  %686 = vst [vmem:[%s2 + $0x130] sm:$0xff] %v546
  %687 = vst [vmem:[%s2 + $0x138] sm:$0xff] %v549
  %688 = vst [vmem:[%s2 + $0x140] sm:$0xff] %v554
  %689 = vst [vmem:[%s2 + $0x148] sm:$0xff] %v557
  %690 = vst [vmem:[%s2 + $0x150] sm:$0xff] %v562
  %691 = vst [vmem:[%s2 + $0x158] sm:$0xff] %v565
  %692 = vst [vmem:[%s2 + $0x160] sm:$0xff] %v570
  %693 = vst [vmem:[%s2 + $0x168] sm:$0xff] %v573
  %694 = vst [vmem:[%s2 + $0x170] sm:$0xff] %v578
  %695 = vst [vmem:[%s2 + $0x178] sm:$0xff] %v581
  %696 = vst [vmem:[%s2 + $0x180] sm:$0xff] %v586
  %697 = vst [vmem:[%s2 + $0x188] sm:$0xff] %v589
  %698 = vst [vmem:[%s2 + $0x190] sm:$0xff] %v594
  %699 = vst [vmem:[%s2 + $0x198] sm:$0xff] %v597
  %700 = vst [vmem:[%s2 + $0x1a0] sm:$0xff] %v602
  %701 = vst [vmem:[%s2 + $0x1a8] sm:$0xff] %v605
  %702 = vst [vmem:[%s2 + $0x1b0] sm:$0xff] %v610
  %703 = vst [vmem:[%s2 + $0x1b8] sm:$0xff] %v613
  %704 = vst [vmem:[%s2 + $0x1c0] sm:$0xff] %v618
  %705 = vst [vmem:[%s2 + $0x1c8] sm:$0xff] %v621
  %706 = vst [vmem:[%s2 + $0x1d0] sm:$0xff] %v626
  %707 = vst [vmem:[%s2 + $0x1d8] sm:$0xff] %v629
  %708 = vst [vmem:[%s2 + $0x1e0] sm:$0xff] %v634
  %709 = vst [vmem:[%s2 + $0x1e8] sm:$0xff] %v637
  %710 = vst [vmem:[%s2 + $0x1f0] sm:$0xff] %v642
  %711 = vst [vmem:[%s2 + $0x1f8] sm:$0xff] %v645
  %v712 = vadd.f32 %v394, %v397
  %v713 = vadd.f32 %v712, %v402
  %v714 = vadd.f32 %v713, %v405
  %v715 = vadd.f32 %v714, %v410
  %v716 = vadd.f32 %v715, %v413
  %v717 = vadd.f32 %v716, %v418
  %v718 = vadd.f32 %v717, %v421
  %v719 = vadd.f32 %v718, %v426
  %v720 = vadd.f32 %v719, %v429
  %v721 = vadd.f32 %v720, %v434
  %v722 = vadd.f32 %v721, %v437
  %v723 = vadd.f32 %v722, %v442
  %v724 = vadd.f32 %v723, %v445
  %v725 = vadd.f32 %v724, %v450
  %v726 = vadd.f32 %v725, %v453
  %v727 = vadd.f32 %v726, %v458
  %v728 = vadd.f32 %v727, %v461
  %v729 = vadd.f32 %v728, %v466
  %v730 = vadd.f32 %v729, %v469
  %v731 = vadd.f32 %v730, %v474
  %v732 = vadd.f32 %v731, %v477
  %v733 = vadd.f32 %v732, %v482
  %v734 = vadd.f32 %v733, %v485
  %v735 = vadd.f32 %v734, %v490
  %v736 = vadd.f32 %v735, %v493
  %v737 = vadd.f32 %v736, %v498
  %v738 = vadd.f32 %v737, %v501
  %v739 = vadd.f32 %v738, %v506
  %v740 = vadd.f32 %v739, %v509
  %v741 = vadd.f32 %v740, %v514
  %v742 = vadd.f32 %v741, %v517
  %v743 = vadd.f32 %v742, %v522
  %v744 = vadd.f32 %v743, %v525
  %v745 = vadd.f32 %v744, %v530
  %v746 = vadd.f32 %v745, %v533
  %v747 = vadd.f32 %v746, %v538
  %v748 = vadd.f32 %v747, %v541
  %v749 = vadd.f32 %v748, %v546
  %v750 = vadd.f32 %v749, %v549
  %v751 = vadd.f32 %v750, %v554
  %v752 = vadd.f32 %v751, %v557
  %v753 = vadd.f32 %v752, %v562
  %v754 = vadd.f32 %v753, %v565
  %v755 = vadd.f32 %v754, %v570
  %v756 = vadd.f32 %v755, %v573
  %v757 = vadd.f32 %v756, %v578
  %v758 = vadd.f32 %v757, %v581
  %v759 = vadd.f32 %v758, %v586
  %v760 = vadd.f32 %v759, %v589
  %v761 = vadd.f32 %v760, %v594
  %v762 = vadd.f32 %v761, %v597
  %v763 = vadd.f32 %v762, %v602
  %v764 = vadd.f32 %v763, %v605
  %v765 = vadd.f32 %v764, %v610
  %v766 = vadd.f32 %v765, %v613
  %v767 = vadd.f32 %v766, %v618
  %v768 = vadd.f32 %v767, %v621
  %v769 = vadd.f32 %v768, %v626
  %v770 = vadd.f32 %v769, %v629
  %v771 = vadd.f32 %v770, %v634
  %v772 = vadd.f32 %v771, %v637
  %v773 = vadd.f32 %v772, %v642
  %v774 = vadd.f32 %v773, %v645
  %v775 = vrot.slane %v774, 4
  %v776 = vadd.f32 %v774, %v775
  %v777 = vrot.slane %v776, 2
  %v778 = vadd.f32 %v776, %v777
  %v779 = vrot.slane %v778, 1
  %v780 = vadd.f32 %v778, %v779
  %v781 = vmul.f32 %v394, %v394
  %v782 = vmul.f32 %v397, %v397
  %v783 = vmul.f32 %v402, %v402
  %v784 = vmul.f32 %v405, %v405
  %v785 = vmul.f32 %v410, %v410
  %v786 = vmul.f32 %v413, %v413
  %v787 = vmul.f32 %v418, %v418
  %v788 = vmul.f32 %v421, %v421
  %v789 = vmul.f32 %v426, %v426
  %v790 = vmul.f32 %v429, %v429
  %v791 = vmul.f32 %v434, %v434
  %v792 = vmul.f32 %v437, %v437
  %v793 = vmul.f32 %v442, %v442
  %v794 = vmul.f32 %v445, %v445
  %v795 = vmul.f32 %v450, %v450
  %v796 = vmul.f32 %v453, %v453
  %v797 = vmul.f32 %v458, %v458
  %v798 = vmul.f32 %v461, %v461
  %v799 = vmul.f32 %v466, %v466
  %v800 = vmul.f32 %v469, %v469
  %v801 = vmul.f32 %v474, %v474
  %v802 = vmul.f32 %v477, %v477
  %v803 = vmul.f32 %v482, %v482
  %v804 = vmul.f32 %v485, %v485
  %v805 = vmul.f32 %v490, %v490
  %v806 = vmul.f32 %v493, %v493
  %v807 = vmul.f32 %v498, %v498
  %v808 = vmul.f32 %v501, %v501
  %v809 = vmul.f32 %v506, %v506
  %v810 = vmul.f32 %v509, %v509
  %v811 = vmul.f32 %v514, %v514
  %v812 = vmul.f32 %v517, %v517
  %v813 = vmul.f32 %v522, %v522
  %v814 = vmul.f32 %v525, %v525
  %v815 = vmul.f32 %v530, %v530
  %v816 = vmul.f32 %v533, %v533
  %v817 = vmul.f32 %v538, %v538
  %v818 = vmul.f32 %v541, %v541
  %v819 = vmul.f32 %v546, %v546
  %v820 = vmul.f32 %v549, %v549
  %v821 = vmul.f32 %v554, %v554
  %v822 = vmul.f32 %v557, %v557
  %v823 = vmul.f32 %v562, %v562
  %v824 = vmul.f32 %v565, %v565
  %v825 = vmul.f32 %v570, %v570
  %v826 = vmul.f32 %v573, %v573
  %v827 = vmul.f32 %v578, %v578
  %v828 = vmul.f32 %v581, %v581
  %v829 = vmul.f32 %v586, %v586
  %v830 = vmul.f32 %v589, %v589
  %v831 = vmul.f32 %v594, %v594
  %v832 = vmul.f32 %v597, %v597
  %v833 = vmul.f32 %v602, %v602
  %v834 = vmul.f32 %v605, %v605
  %v835 = vmul.f32 %v610, %v610
  %v836 = vmul.f32 %v613, %v613
  %v837 = vmul.f32 %v618, %v618
  %v838 = vmul.f32 %v621, %v621
  %v839 = vmul.f32 %v626, %v626
  %v840 = vmul.f32 %v629, %v629
  %v841 = vmul.f32 %v634, %v634
  %v842 = vmul.f32 %v637, %v637
  %v843 = vmul.f32 %v642, %v642
  %v844 = vmul.f32 %v645, %v645
  %v845 = vadd.f32 %v781, %v782
  %v846 = vadd.f32 %v845, %v783
  %v847 = vadd.f32 %v846, %v784
  %v848 = vadd.f32 %v847, %v785
  %v849 = vadd.f32 %v848, %v786
  %v850 = vadd.f32 %v849, %v787
  %v851 = vadd.f32 %v850, %v788
  %v852 = vadd.f32 %v851, %v789
  %v853 = vadd.f32 %v852, %v790
  %v854 = vadd.f32 %v853, %v791
  %v855 = vadd.f32 %v854, %v792
  %v856 = vadd.f32 %v855, %v793
  %v857 = vadd.f32 %v856, %v794
  %v858 = vadd.f32 %v857, %v795
  %v859 = vadd.f32 %v858, %v796
  %v860 = vadd.f32 %v859, %v797
  %v861 = vadd.f32 %v860, %v798
  %v862 = vadd.f32 %v861, %v799
  %v863 = vadd.f32 %v862, %v800
  %v864 = vadd.f32 %v863, %v801
  %v865 = vadd.f32 %v864, %v802
  %v866 = vadd.f32 %v865, %v803
  %v867 = vadd.f32 %v866, %v804
  %v868 = vadd.f32 %v867, %v805
  %v869 = vadd.f32 %v868, %v806
  %v870 = vadd.f32 %v869, %v807
  %v871 = vadd.f32 %v870, %v808
  %v872 = vadd.f32 %v871, %v809
  %v873 = vadd.f32 %v872, %v810
  %v874 = vadd.f32 %v873, %v811
  %v875 = vadd.f32 %v874, %v812
  %v876 = vadd.f32 %v875, %v813
  %v877 = vadd.f32 %v876, %v814
  %v878 = vadd.f32 %v877, %v815
  %v879 = vadd.f32 %v878, %v816
  %v880 = vadd.f32 %v879, %v817
  %v881 = vadd.f32 %v880, %v818
  %v882 = vadd.f32 %v881, %v819
  %v883 = vadd.f32 %v882, %v820
  %v884 = vadd.f32 %v883, %v821
  %v885 = vadd.f32 %v884, %v822
  %v886 = vadd.f32 %v885, %v823
  %v887 = vadd.f32 %v886, %v824
  %v888 = vadd.f32 %v887, %v825
  %v889 = vadd.f32 %v888, %v826
  %v890 = vadd.f32 %v889, %v827
  %v891 = vadd.f32 %v890, %v828
  %v892 = vadd.f32 %v891, %v829
  %v893 = vadd.f32 %v892, %v830
  %v894 = vadd.f32 %v893, %v831
  %v895 = vadd.f32 %v894, %v832
  %v896 = vadd.f32 %v895, %v833
  %v897 = vadd.f32 %v896, %v834
  %v898 = vadd.f32 %v897, %v835
  %v899 = vadd.f32 %v898, %v836
  %v900 = vadd.f32 %v899, %v837
  %v901 = vadd.f32 %v900, %v838
  %v902 = vadd.f32 %v901, %v839
  %v903 = vadd.f32 %v902, %v840
  %v904 = vadd.f32 %v903, %v841
  %v905 = vadd.f32 %v904, %v842
  %v906 = vadd.f32 %v905, %v843
  %v907 = vadd.f32 %v906, %v844
  %v908 = vrot.slane %v907, 4
  %v909 = vadd.f32 %v907, %v908
  %v910 = vrot.slane %v909, 2
  %v911 = vadd.f32 %v909, %v910
  %v912 = vrot.slane %v911, 1
  %v913 = vadd.f32 %v911, %v912
  %vm914 = vcmask 1040384
  %v915 = vsel %vm914, %v780, %v913
  %916 = vst [vmem:[%s3] sm:$0x3] %v915
  // Predicated region
  $region10: #{conv_etal_forward.6} parent=0 // pred_check
    _
  $region11: #{conv_etal_forward.6} parent=0 // pred_check_branch
    %918 = sbr.rel (0) target = $region13
  $region12: #{conv_etal_forward.6} parent=0 // pred_region
    _
  $region13: #{conv_etal_forward.6} parent=0 // pred_fallthru
    _
  // Predicated region
  $region14: #{conv_etal_forward.6} parent=0 // pred_check
    _
  $region15: #{conv_etal_forward.6} parent=0 // pred_check_branch
    %920 = sbr.rel (0) target = $region17
  $region16: #{conv_etal_forward.6} parent=0 // pred_region
    _
  $region17: #{conv_etal_forward.6} parent=0 // pred_fallthru
    _
  // Predicated region
  $region18: #{conv_etal_forward.6} parent=0 // pred_check
    _
  $region19: #{conv_etal_forward.6} parent=0 // pred_check_branch
    %922 = sbr.rel (0) target = $region21
  $region20: #{conv_etal_forward.6} parent=0 // pred_region
    _
  $region21: #{conv_etal_forward.6} parent=0 // pred_fallthru
    _
  // Predicated region
  $region22: #{conv_etal_forward.6} parent=0 // pred_check
    _
  $region23: #{conv_etal_forward.6} parent=0 // pred_check_branch
    %924 = sbr.rel (0) target = $region25
  $region24: #{conv_etal_forward.6} parent=0 // pred_region
    _
  $region25: #{conv_etal_forward.6} parent=0 // pred_fallthru
    _

// kernel: conv_etal_forward.9
$region0: #{conv_etal_forward.9}
  #allocation0 [shape = 'u32[]', space=smem, size = 0x4, offset = 0x4, fixed_abs, tag = 'smem constant byte address 0x4 - core index']
  #allocation1 [shape = 'u32[144,128]{1,0:T(1,128)}', space=vmem, size = 0x12000, scoped, tag = 'internal scratch']
  %s0 = inlined_call_operand.vmem [shape: f32[2,4,16,128], index: 0, kind: input, shape index: {}]
  %s1 = inlined_call_operand.vmem [shape: f32[1,128], index: 1, kind: input, shape index: {}]
  %s2 = inlined_call_operand.vmem [shape: f32[1,128], index: 2, kind: input, shape index: {}]
  %s3 = inlined_call_operand.vmem [shape: f32[2,16,128], index: 3, kind: output, shape index: {}]
  %s4 = sld [smem:[#allocation0]]
  $region22: #{conv_etal_forward.9} parent=0
    _
  %s6 = ssub.s32 1, %s4
  %s7 = scalar_select 0, %s6, %s4
  // Predicated region
  $region2: #{conv_etal_forward.9} parent=0 // pred_check
    _
  $region3: #{conv_etal_forward.9} parent=0 // pred_check_branch
    %9 = sbr.rel (0) target = $region5
  $region4: #{conv_etal_forward.9} parent=0 // pred_region
    _
  $region5: #{conv_etal_forward.9} parent=0 // pred_fallthru
    _
  // Predicated region
  $region6: #{conv_etal_forward.9} parent=0 // pred_check
    _
  $region7: #{conv_etal_forward.9} parent=0 // pred_check_branch
    %11 = sbr.rel (0) target = $region9
  $region8: #{conv_etal_forward.9} parent=0 // pred_region
    _
  $region9: #{conv_etal_forward.9} parent=0 // pred_fallthru
    _
  // Predicated region
  $region10: #{conv_etal_forward.9} parent=0 // pred_check
    _
  $region11: #{conv_etal_forward.9} parent=0 // pred_check_branch
    %13 = sbr.rel (0) target = $region13
  $region12: #{conv_etal_forward.9} parent=0 // pred_region
    _
  $region13: #{conv_etal_forward.9} parent=0 // pred_fallthru
    _
  %v14 = vld [vmem:[%s0] sm:$0xff]
  %v15 = vld [vmem:[%s0 + $0x8] sm:$0xff]
  %v16 = vld [vmem:[%s0 + $0x10] sm:$0xff]
  %v17 = vld [vmem:[%s0 + $0x18] sm:$0xff]
  %v18 = vld [vmem:[%s0 + $0x20] sm:$0xff]
  %v19 = vld [vmem:[%s0 + $0x28] sm:$0xff]
  %v20 = vld [vmem:[%s0 + $0x30] sm:$0xff]
  %v21 = vld [vmem:[%s0 + $0x38] sm:$0xff]
  %v22 = vld [vmem:[%s0 + $0x40] sm:$0xff]
  %v23 = vld [vmem:[%s0 + $0x48] sm:$0xff]
  %v24 = vld [vmem:[%s0 + $0x50] sm:$0xff]
  %v25 = vld [vmem:[%s0 + $0x58] sm:$0xff]
  %v26 = vld [vmem:[%s0 + $0x60] sm:$0xff]
  %v27 = vld [vmem:[%s0 + $0x68] sm:$0xff]
  %v28 = vld [vmem:[%s0 + $0x70] sm:$0xff]
  %v29 = vld [vmem:[%s0 + $0x78] sm:$0xff]
  %v30 = vld [vmem:[%s1] sm:$0x1]
  %v32 = vlaneseq
  %v33 = vshrl.u32 %v32, 7
  %v34 = vsub.s32 0, %v33
  %v35 = vrot.slane %v30, %v34
  %v37 = vmul.f32 %v14, %v35
  %v38 = vmul.f32 %v15, %v35
  %v39 = vmul.f32 %v16, %v35
  %v40 = vmul.f32 %v17, %v35
  %v41 = vmul.f32 %v18, %v35
  %v42 = vmul.f32 %v19, %v35
  %v43 = vmul.f32 %v20, %v35
  %v44 = vmul.f32 %v21, %v35
  %v45 = vmul.f32 %v22, %v35
  %v46 = vmul.f32 %v23, %v35
  %v47 = vmul.f32 %v24, %v35
  %v48 = vmul.f32 %v25, %v35
  %v49 = vmul.f32 %v26, %v35
  %v50 = vmul.f32 %v27, %v35
  %v51 = vmul.f32 %v28, %v35
  %v52 = vmul.f32 %v29, %v35
  %v53 = vld [vmem:[%s2] sm:$0x1]
  %v55 = vlaneseq
  %v56 = vshrl.u32 %v55, 7
  %v57 = vsub.s32 0, %v56
  %v58 = vrot.slane %v53, %v57
  %v60 = vadd.f32 %v37, %v58
  %v61 = vadd.f32 %v38, %v58
  %v62 = vadd.f32 %v39, %v58
  %v63 = vadd.f32 %v40, %v58
  %v64 = vadd.f32 %v41, %v58
  %v65 = vadd.f32 %v42, %v58
  %v66 = vadd.f32 %v43, %v58
  %v67 = vadd.f32 %v44, %v58
  %v68 = vadd.f32 %v45, %v58
  %v69 = vadd.f32 %v46, %v58
  %v70 = vadd.f32 %v47, %v58
  %v71 = vadd.f32 %v48, %v58
  %v72 = vadd.f32 %v49, %v58
  %v73 = vadd.f32 %v50, %v58
  %v74 = vadd.f32 %v51, %v58
  %v75 = vadd.f32 %v52, %v58
  %v76 = vmax.f32 %v60, 0.0
  %v77 = vmax.f32 %v61, 0.0
  %v78 = vmax.f32 %v62, 0.0
  %v79 = vmax.f32 %v63, 0.0
  %v80 = vmax.f32 %v64, 0.0
  %v81 = vmax.f32 %v65, 0.0
  %v82 = vmax.f32 %v66, 0.0
  %v83 = vmax.f32 %v67, 0.0
  %v84 = vmax.f32 %v68, 0.0
  %v85 = vmax.f32 %v69, 0.0
  %v86 = vmax.f32 %v70, 0.0
  %v87 = vmax.f32 %v71, 0.0
  %v88 = vmax.f32 %v72, 0.0
  %v89 = vmax.f32 %v73, 0.0
  %v90 = vmax.f32 %v74, 0.0
  %v91 = vmax.f32 %v75, 0.0
  %v92 = vmax.f32 %v76, %v78
  %v93 = vmax.f32 %v92, %v80
  %v94 = vmax.f32 %v93, %v82
  %v95 = vmax.f32 %v77, %v79
  %v96 = vmax.f32 %v95, %v81
  %v97 = vmax.f32 %v96, %v83
  %v98 = vmax.f32 %v84, %v86
  %v99 = vmax.f32 %v98, %v88
  %v100 = vmax.f32 %v99, %v90
  %v101 = vmax.f32 %v85, %v87
  %v102 = vmax.f32 %v101, %v89
  %v103 = vmax.f32 %v102, %v91
  %104 = vst [vmem:[%s3] sm:$0xff] %v94
  %105 = vst [vmem:[%s3 + $0x8] sm:$0xff] %v97
  %106 = vst [vmem:[%s3 + $0x10] sm:$0xff] %v100
  %107 = vst [vmem:[%s3 + $0x18] sm:$0xff] %v103
  // Predicated region
  $region14: #{conv_etal_forward.9} parent=0 // pred_check
    _
  $region15: #{conv_etal_forward.9} parent=0 // pred_check_branch
    %109 = sbr.rel (0) target = $region17
  $region16: #{conv_etal_forward.9} parent=0 // pred_region
    _
  $region17: #{conv_etal_forward.9} parent=0 // pred_fallthru
    _
  // Predicated region
  $region18: #{conv_etal_forward.9} parent=0 // pred_check
    _
  $region19: #{conv_etal_forward.9} parent=0 // pred_check_branch
    %111 = sbr.rel (0) target = $region21
  $region20: #{conv_etal_forward.9} parent=0 // pred_region
    _
  $region21: #{conv_etal_forward.9} parent=0 // pred_fallthru
    _

// kernel: conv_etal_forward.8
$region0: #{conv_etal_forward.8}
  #allocation0 [shape = 'u32[]', space=smem, size = 0x4, offset = 0x4, fixed_abs, tag = 'smem constant byte address 0x4 - core index']
  #allocation1 [shape = 'u32[144,128]{1,0:T(1,128)}', space=vmem, size = 0x12000, scoped, tag = 'internal scratch']
  %s0 = inlined_call_operand.vmem [shape: bf16[2,8,20,64], index: 0, kind: input, shape index: {}]
  %s1 = inlined_call_operand.vmem [shape: bf16[576,128], index: 1, kind: input, shape index: {}]
  %s2 = inlined_call_operand.vmem [shape: f32[2,4,16,128], index: 2, kind: output, shape index: {0}]
  %s3 = inlined_call_operand.vmem [shape: f32[1,2,128], index: 3, kind: output, shape index: {1}]
  %4 = xla_tuple %s2, %s3
  %s5 = sld [smem:[#allocation0]]
  $region26: #{conv_etal_forward.8} parent=0
    _
  %s7 = ssub.s32 1, %s5
  %s8 = scalar_select 0, %s7, %s5
  // Predicated region
  $region2: #{conv_etal_forward.8} parent=0 // pred_check
    _
  $region3: #{conv_etal_forward.8} parent=0 // pred_check_branch
    %10 = sbr.rel (0) target = $region5
  $region4: #{conv_etal_forward.8} parent=0 // pred_region
    _
  $region5: #{conv_etal_forward.8} parent=0 // pred_fallthru
    _
  // Predicated region
  $region6: #{conv_etal_forward.8} parent=0 // pred_check
    _
  $region7: #{conv_etal_forward.8} parent=0 // pred_check_branch
    %12 = sbr.rel (0) target = $region9
  $region8: #{conv_etal_forward.8} parent=0 // pred_region
    _
  $region9: #{conv_etal_forward.8} parent=0 // pred_fallthru
    _
  %v14 = vld [vmem:[%s0] sm:$0xf]
  %v15 = vld [vmem:[%s0 + $0x4] sm:$0xf]
  %v16 = vld [vmem:[%s0 + $0x8] sm:$0x3]
  %v17 = vld [vmem:[%s0 + $0xc] sm:$0xf]
  %v18 = vld [vmem:[%s0 + $0x10] sm:$0xf]
  %v19 = vld [vmem:[%s0 + $0x14] sm:$0x3]
  %v20 = vld [vmem:[%s0 + $0x18] sm:$0xf]
  %v21 = vld [vmem:[%s0 + $0x1c] sm:$0xf]
  %v22 = vld [vmem:[%s0 + $0x20] sm:$0x3]
  %v23 = vld [vmem:[%s0 + $0x24] sm:$0xf]
  %v24 = vld [vmem:[%s0 + $0x28] sm:$0xf]
  %v25 = vld [vmem:[%s0 + $0x2c] sm:$0x3]
  %v26 = vld [vmem:[%s0 + $0x30] sm:$0xf]
  %v27 = vld [vmem:[%s0 + $0x34] sm:$0xf]
  %v28 = vld [vmem:[%s0 + $0x38] sm:$0x3]
  %v29 = vld [vmem:[%s0 + $0x3c] sm:$0xf]
  %v30 = vld [vmem:[%s0 + $0x40] sm:$0xf]
  %v31 = vld [vmem:[%s0 + $0x44] sm:$0x3]
  %v32 = vld [vmem:[%s0 + $0x48] sm:$0xf]
  %v33 = vld [vmem:[%s0 + $0x4c] sm:$0xf]
  %v34 = vld [vmem:[%s0 + $0x50] sm:$0x3]
  %v35 = vld [vmem:[%s0 + $0x54] sm:$0xf]
  %v36 = vld [vmem:[%s0 + $0x58] sm:$0xf]
  %v37 = vld [vmem:[%s0 + $0x5c] sm:$0x3]
  %v38 = vld [vmem:[%s0 + $0x60] sm:$0xf]
  %v39 = vld [vmem:[%s0 + $0x64] sm:$0xf]
  %v40 = vld [vmem:[%s0 + $0x68] sm:$0x3]
  %v41 = vld [vmem:[%s0 + $0x6c] sm:$0xf]
  %v42 = vld [vmem:[%s0 + $0x70] sm:$0xf]
  %v43 = vld [vmem:[%s0 + $0x74] sm:$0x3]
  %v44 = vld [vmem:[%s0 + $0x78] sm:$0xf]
  %v45 = vld [vmem:[%s0 + $0x7c] sm:$0xf]
  %v46 = vld [vmem:[%s0 + $0x80] sm:$0x3]
  %v47 = vld [vmem:[%s0 + $0x84] sm:$0xf]
  %v48 = vld [vmem:[%s0 + $0x88] sm:$0xf]
  %v49 = vld [vmem:[%s0 + $0x8c] sm:$0x3]
  %v50 = vld [vmem:[%s0 + $0x90] sm:$0xf]
  %v51 = vld [vmem:[%s0 + $0x94] sm:$0xf]
  %v52 = vld [vmem:[%s0 + $0x98] sm:$0x3]
  %v53 = vld [vmem:[%s0 + $0x9c] sm:$0xf]
  %v54 = vld [vmem:[%s0 + $0xa0] sm:$0xf]
  %v55 = vld [vmem:[%s0 + $0xa4] sm:$0x3]
  %v56 = vld [vmem:[%s0 + $0xa8] sm:$0xf]
  %v57 = vld [vmem:[%s0 + $0xac] sm:$0xf]
  %v58 = vld [vmem:[%s0 + $0xb0] sm:$0x3]
  %v59 = vld [vmem:[%s0 + $0xb4] sm:$0xf]
  %v60 = vld [vmem:[%s0 + $0xb8] sm:$0xf]
  %v61 = vld [vmem:[%s0 + $0xbc] sm:$0x3]
  %v62 = vld [vmem:[%s1] sm:$0xf]
  %v63 = vld [vmem:[%s1 + $0x4] sm:$0xf]
  %v64 = vld [vmem:[%s1 + $0x8] sm:$0xf]
  %v65 = vld [vmem:[%s1 + $0xc] sm:$0xf]
  %v66 = vld [vmem:[%s1 + $0x10] sm:$0xf]
  %v67 = vld [vmem:[%s1 + $0x14] sm:$0xf]
  %v68 = vld [vmem:[%s1 + $0x18] sm:$0xf]
  %v69 = vld [vmem:[%s1 + $0x1c] sm:$0xf]
  %v70 = vld [vmem:[%s1 + $0x20] sm:$0xf]
  %v71 = vld [vmem:[%s1 + $0x24] sm:$0xf]
  %v72 = vld [vmem:[%s1 + $0x28] sm:$0xf]
  %v73 = vld [vmem:[%s1 + $0x2c] sm:$0xf]
  %v74 = vld [vmem:[%s1 + $0x30] sm:$0xf]
  %v75 = vld [vmem:[%s1 + $0x34] sm:$0xf]
  %v76 = vld [vmem:[%s1 + $0x38] sm:$0xf]
  %v77 = vld [vmem:[%s1 + $0x3c] sm:$0xf]
  %v94 = vunpack.c.l.b16 %v20
  %v95 = vunpack.c.l.b16 %v21
  %v96 = vunpack.c.l.b16 %v17
  %v97 = vunpack.c.l.b16 %v18
  %v98 = vunpack.c.l.b16 %v32
  %v99 = vunpack.c.l.b16 %v33
  %v100 = vunpack.c.l.b16 %v29
  %v101 = vunpack.c.l.b16 %v30
  %v102 = vunpack.c.l.b16 %v44
  %v103 = vunpack.c.l.b16 %v45
  %v104 = vunpack.c.l.b16 %v41
  %v105 = vunpack.c.l.b16 %v42
  %v106 = vunpack.c.l.b16 %v56
  %v107 = vunpack.c.l.b16 %v57
  %v108 = vunpack.c.l.b16 %v53
  %v109 = vunpack.c.l.b16 %v54
  %v110 = vpack.c.b16 %v95, %v94
  %v111 = vpack.c.b16 %v97, %v96
  %v112 = vpack.c.b16 %v99, %v98
  %v113 = vpack.c.b16 %v101, %v100
  %v114 = vpack.c.b16 %v103, %v102
  %v115 = vpack.c.b16 %v105, %v104
  %v116 = vpack.c.b16 %v107, %v106
  %v117 = vpack.c.b16 %v109, %v108
  %v126 = vunpack.c.l.b16 %v70
  %v127 = vunpack.c.l.b16 %v71
  %v128 = vunpack.c.l.b16 %v72
  %v129 = vunpack.c.l.b16 %v73
  %v130 = vunpack.c.l.b16 %v74
  %v131 = vunpack.c.l.b16 %v75
  %v132 = vunpack.c.l.b16 %v76
  %v133 = vunpack.c.l.b16 %v77
  %v134 = vpack.c.b16 %v127, %v126
  %v135 = vpack.c.b16 %v129, %v128
  %v136 = vpack.c.b16 %v131, %v130
  %v137 = vpack.c.b16 %v133, %v132
  %vm142 = vcmask 523264
  %v144 = vsel %vm142, %v110, 0
  %v147 = vsel %vm142, %v111, 0
  %v150 = vsel %vm142, %v112, 0
  %v153 = vsel %vm142, %v113, 0
  %v156 = vsel %vm142, %v114, 0
  %v159 = vsel %vm142, %v115, 0
  %v162 = vsel %vm142, %v116, 0
  %v165 = vsel %vm142, %v117, 0
  %167 = vmatprep.subr.bf16.mxu0 0
  %168 = vmatpush1.bf16.msra.mxu0 0
  %169 = vmatprep.subr.bf16.mxu0 0
  %170 = vmatpush1.bf16.msra.mxu0 0
  %171 = vmatprep.subr.bf16.mxu0 0
  %172 = vmatpush1.bf16.msra.mxu0 0
  %173 = vmatprep.subr.bf16.mxu0 0
  %174 = vmatpush1.bf16.msra.mxu0 0
  %175 = vmatprep.subr.bf16.mxu0 0
  %176 = vmatpush1.bf16.msra.mxu0 %v137
  %177 = vmatprep.subr.bf16.mxu0 0
  %178 = vmatpush1.bf16.msra.mxu0 %v136
  %179 = vmatprep.subr.bf16.mxu0 0
  %180 = vmatpush1.bf16.msra.mxu0 %v135
  %181 = vmatprep.subr.bf16.mxu0 0
  %182 = vmatpush1.bf16.msra.mxu0 %v134
  %183 = vmatprep.subr.bf16.mxu0 0
  %184 = vmatpush2.bf16.msra.mxu0 0
  %185 = vmatprep.subr.bf16.mxu0 0
  %186 = vmatpush2.bf16.msra.mxu0 0
  %187 = vmatprep.subr.bf16.mxu0 0
  %188 = vmatpush2.bf16.msra.mxu0 0
  %189 = vmatprep.subr.bf16.mxu0 0
  %190 = vmatpush2.bf16.msra.mxu0 0
  %191 = vmatprep.subr.bf16.mxu0 0
  %192 = vmatpush2.bf16.msra.mxu0 0
  %193 = vmatprep.subr.bf16.mxu0 0
  %194 = vmatpush2.bf16.msra.mxu0 0
  %195 = vmatprep.subr.bf16.mxu0 0
  %196 = vmatpush2.bf16.msra.mxu0 0
  %197 = vmatprep.subr.bf16.mxu0 0
  %198 = vmatpush2.bf16.msra.mxu0 0
  %199 = vmatprep.mubr.bf16.mxu0 0
  %200 = vmatmul.mubr.bf16.gmra.mxu0 %v144
  %v201 = vpop.f32.mrf.mxu0
  %v202 = vadd.f32 0.0, %v201
  %v203 = vpop.f32.mrf.mxu0
  %v204 = vpop.f32.mrf.mxu0
  %v205 = vadd.f32 0.0, %v204
  %v206 = vpop.f32.mrf.mxu0
  %207 = vmatprep.mubr.bf16.mxu0 0
  %208 = vmatmul.mubr.bf16.gmra.mxu0 %v147
  %v209 = vpop.f32.mrf.mxu0
  %v210 = vadd.f32 0.0, %v209
  %v211 = vpop.f32.mrf.mxu0
  %v212 = vpop.f32.mrf.mxu0
  %v213 = vadd.f32 0.0, %v212
  %v214 = vpop.f32.mrf.mxu0
  %215 = vmatprep.mubr.bf16.mxu0 0
  %216 = vmatmul.mubr.bf16.gmra.mxu0 %v150
  %v217 = vpop.f32.mrf.mxu0
  %v218 = vadd.f32 0.0, %v217
  %v219 = vpop.f32.mrf.mxu0
  %v220 = vpop.f32.mrf.mxu0
  %v221 = vadd.f32 0.0, %v220
  %v222 = vpop.f32.mrf.mxu0
  %223 = vmatprep.mubr.bf16.mxu0 0
  %224 = vmatmul.mubr.bf16.gmra.mxu0 %v153
  %v225 = vpop.f32.mrf.mxu0
  %v226 = vadd.f32 0.0, %v225
  %v227 = vpop.f32.mrf.mxu0
  %v228 = vpop.f32.mrf.mxu0
  %v229 = vadd.f32 0.0, %v228
  %v230 = vpop.f32.mrf.mxu0
  %231 = vmatprep.mubr.bf16.mxu0 0
  %232 = vmatmul.mubr.bf16.gmra.mxu0 %v156
  %v233 = vpop.f32.mrf.mxu0
  %v234 = vadd.f32 0.0, %v233
  %v235 = vpop.f32.mrf.mxu0
  %v236 = vpop.f32.mrf.mxu0
  %v237 = vadd.f32 0.0, %v236
  %v238 = vpop.f32.mrf.mxu0
  %239 = vmatprep.mubr.bf16.mxu0 0
  %240 = vmatmul.mubr.bf16.gmra.mxu0 %v159
  %v241 = vpop.f32.mrf.mxu0
  %v242 = vadd.f32 0.0, %v241
  %v243 = vpop.f32.mrf.mxu0
  %v244 = vpop.f32.mrf.mxu0
  %v245 = vadd.f32 0.0, %v244
  %v246 = vpop.f32.mrf.mxu0
  %247 = vmatprep.mubr.bf16.mxu0 0
  %248 = vmatmul.mubr.bf16.gmra.mxu0 %v162
  %v249 = vpop.f32.mrf.mxu0
  %v250 = vadd.f32 0.0, %v249
  %v251 = vpop.f32.mrf.mxu0
  %v252 = vpop.f32.mrf.mxu0
  %v253 = vadd.f32 0.0, %v252
  %v254 = vpop.f32.mrf.mxu0
  %255 = vmatprep.mubr.bf16.mxu0 0
  %256 = vmatmul.mubr.bf16.gmra.mxu0 %v165
  %v257 = vpop.f32.mrf.mxu0
  %v258 = vadd.f32 0.0, %v257
  %v259 = vpop.f32.mrf.mxu0
  %v260 = vpop.f32.mrf.mxu0
  %v261 = vadd.f32 0.0, %v260
  %v262 = vpop.f32.mrf.mxu0
  %263 = vdwg.mxu0
  %v272 = vunpack.c.l.b16 %v14
  %v273 = vunpack.c.l.b16 %v15
  %v274 = vunpack.c.l.b16 %v26
  %v275 = vunpack.c.l.b16 %v27
  %v276 = vunpack.c.l.b16 %v38
  %v277 = vunpack.c.l.b16 %v39
  %v278 = vunpack.c.l.b16 %v50
  %v279 = vunpack.c.l.b16 %v51
  %v280 = vpack.c.b16 %v273, %v272
  %v281 = vpack.c.b16 %v275, %v274
  %v282 = vpack.c.b16 %v277, %v276
  %v283 = vpack.c.b16 %v279, %v278
  %v292 = vunpack.c.l.b16 %v62
  %v293 = vunpack.c.l.b16 %v63
  %v294 = vunpack.c.l.b16 %v64
  %v295 = vunpack.c.l.b16 %v65
  %v296 = vunpack.c.l.b16 %v66
  %v297 = vunpack.c.l.b16 %v67
  %v298 = vunpack.c.l.b16 %v68
  %v299 = vunpack.c.l.b16 %v69
  %v300 = vpack.c.b16 %v293, %v292
  %v301 = vpack.c.b16 %v295, %v294
  %v302 = vpack.c.b16 %v297, %v296
  %v303 = vpack.c.b16 %v299, %v298
  %v309 = vsel %vm142, %v280, 0
  %v312 = vsel %vm142, %v281, 0
  %v315 = vsel %vm142, %v282, 0
  %v318 = vsel %vm142, %v283, 0
  %320 = vmatprep.subr.bf16.mxu0 0
  %321 = vmatpush1.bf16.msra.mxu0 0
  %322 = vmatprep.subr.bf16.mxu0 0
  %323 = vmatpush1.bf16.msra.mxu0 0
  %324 = vmatprep.subr.bf16.mxu0 0
  %325 = vmatpush1.bf16.msra.mxu0 0
  %326 = vmatprep.subr.bf16.mxu0 0
  %327 = vmatpush1.bf16.msra.mxu0 0
  %328 = vmatprep.subr.bf16.mxu0 0
  %329 = vmatpush1.bf16.msra.mxu0 %v303
  %330 = vmatprep.subr.bf16.mxu0 0
  %331 = vmatpush1.bf16.msra.mxu0 %v302
  %332 = vmatprep.subr.bf16.mxu0 0
  %333 = vmatpush1.bf16.msra.mxu0 %v301
  %334 = vmatprep.subr.bf16.mxu0 0
  %335 = vmatpush1.bf16.msra.mxu0 %v300
  %336 = vmatprep.subr.bf16.mxu0 0
  %337 = vmatpush2.bf16.msra.mxu0 0
  %338 = vmatprep.subr.bf16.mxu0 0
  %339 = vmatpush2.bf16.msra.mxu0 0
  %340 = vmatprep.subr.bf16.mxu0 0
  %341 = vmatpush2.bf16.msra.mxu0 0
  %342 = vmatprep.subr.bf16.mxu0 0
  %343 = vmatpush2.bf16.msra.mxu0 0
  %344 = vmatprep.subr.bf16.mxu0 0
  %345 = vmatpush2.bf16.msra.mxu0 0
  %346 = vmatprep.subr.bf16.mxu0 0
  %347 = vmatpush2.bf16.msra.mxu0 0
  %348 = vmatprep.subr.bf16.mxu0 0
  %349 = vmatpush2.bf16.msra.mxu0 0
  %350 = vmatprep.subr.bf16.mxu0 0
  %351 = vmatpush2.bf16.msra.mxu0 0
  %352 = vmatprep.mubr.bf16.mxu0 0
  %353 = vmatmul.mubr.bf16.gmra.mxu0 %v309
  %v354 = vpop.f32.mrf.mxu0
  %v355 = vadd.f32 %v202, %v354
  %v356 = vpop.f32.mrf.mxu0
  %v357 = vpop.f32.mrf.mxu0
  %v358 = vadd.f32 %v205, %v357
  %v359 = vpop.f32.mrf.mxu0
  %360 = vmatprep.mubr.bf16.mxu0 0
  %361 = vmatmul.mubr.bf16.gmra.mxu0 %v144
  %v362 = vpop.f32.mrf.mxu0
  %v363 = vadd.f32 %v210, %v362
  %v364 = vpop.f32.mrf.mxu0
  %v365 = vpop.f32.mrf.mxu0
  %v366 = vadd.f32 %v213, %v365
  %v367 = vpop.f32.mrf.mxu0
  %368 = vmatprep.mubr.bf16.mxu0 0
  %369 = vmatmul.mubr.bf16.gmra.mxu0 %v312
  %v370 = vpop.f32.mrf.mxu0
  %v371 = vadd.f32 %v218, %v370
  %v372 = vpop.f32.mrf.mxu0
  %v373 = vpop.f32.mrf.mxu0
  %v374 = vadd.f32 %v221, %v373
  %v375 = vpop.f32.mrf.mxu0
  %376 = vmatprep.mubr.bf16.mxu0 0
  %377 = vmatmul.mubr.bf16.gmra.mxu0 %v150
  %v378 = vpop.f32.mrf.mxu0
  %v379 = vadd.f32 %v226, %v378
  %v380 = vpop.f32.mrf.mxu0
  %v381 = vpop.f32.mrf.mxu0
  %v382 = vadd.f32 %v229, %v381
  %v383 = vpop.f32.mrf.mxu0
  %384 = vmatprep.mubr.bf16.mxu0 0
  %385 = vmatmul.mubr.bf16.gmra.mxu0 %v315
  %v386 = vpop.f32.mrf.mxu0
  %v387 = vadd.f32 %v234, %v386
  %v388 = vpop.f32.mrf.mxu0
  %v389 = vpop.f32.mrf.mxu0
  %v390 = vadd.f32 %v237, %v389
  %v391 = vpop.f32.mrf.mxu0
  %392 = vmatprep.mubr.bf16.mxu0 0
  %393 = vmatmul.mubr.bf16.gmra.mxu0 %v156
  %v394 = vpop.f32.mrf.mxu0
  %v395 = vadd.f32 %v242, %v394
  %v396 = vpop.f32.mrf.mxu0
  %v397 = vpop.f32.mrf.mxu0
  %v398 = vadd.f32 %v245, %v397
  %v399 = vpop.f32.mrf.mxu0
  %400 = vmatprep.mubr.bf16.mxu0 0
  %401 = vmatmul.mubr.bf16.gmra.mxu0 %v318
  %v402 = vpop.f32.mrf.mxu0
  %v403 = vadd.f32 %v250, %v402
  %v404 = vpop.f32.mrf.mxu0
  %v405 = vpop.f32.mrf.mxu0
  %v406 = vadd.f32 %v253, %v405
  %v407 = vpop.f32.mrf.mxu0
  %408 = vmatprep.mubr.bf16.mxu0 0
  %409 = vmatmul.mubr.bf16.gmra.mxu0 %v162
  %v410 = vpop.f32.mrf.mxu0
  %v411 = vadd.f32 %v258, %v410
  %v412 = vpop.f32.mrf.mxu0
  %v413 = vpop.f32.mrf.mxu0
  %v414 = vadd.f32 %v261, %v413
  %v415 = vpop.f32.mrf.mxu0
  %416 = vdwg.mxu0
  %v417 = vld [vmem:[%s1 + $0x40] sm:$0xf]
  %v418 = vld [vmem:[%s1 + $0x44] sm:$0xf]
  %v419 = vld [vmem:[%s1 + $0x48] sm:$0xf]
  %v420 = vld [vmem:[%s1 + $0x4c] sm:$0xf]
  %v421 = vld [vmem:[%s1 + $0x50] sm:$0xf]
  %v422 = vld [vmem:[%s1 + $0x54] sm:$0xf]
  %v423 = vld [vmem:[%s1 + $0x58] sm:$0xf]
  %v424 = vld [vmem:[%s1 + $0x5c] sm:$0xf]
  %v433 = vunpack.c.l.b16 %v23
  %v434 = vunpack.c.l.b16 %v24
  %v435 = vunpack.c.l.b16 %v35
  %v436 = vunpack.c.l.b16 %v36
  %v437 = vunpack.c.l.b16 %v47
  %v438 = vunpack.c.l.b16 %v48
  %v439 = vunpack.c.l.b16 %v59
  %v440 = vunpack.c.l.b16 %v60
  %v441 = vpack.c.b16 %v434, %v433
  %v442 = vpack.c.b16 %v436, %v435
  %v443 = vpack.c.b16 %v438, %v437
  %v444 = vpack.c.b16 %v440, %v439
  %v453 = vunpack.c.l.b16 %v417
  %v454 = vunpack.c.l.b16 %v418
  %v455 = vunpack.c.l.b16 %v419
  %v456 = vunpack.c.l.b16 %v420
  %v457 = vunpack.c.l.b16 %v421
  %v458 = vunpack.c.l.b16 %v422
  %v459 = vunpack.c.l.b16 %v423
  %v460 = vunpack.c.l.b16 %v424
  %v461 = vpack.c.b16 %v454, %v453
  %v462 = vpack.c.b16 %v456, %v455
  %v463 = vpack.c.b16 %v458, %v457
  %v464 = vpack.c.b16 %v460, %v459
  %v470 = vsel %vm142, %v441, 0
  %v473 = vsel %vm142, %v442, 0
  %v476 = vsel %vm142, %v443, 0
  %v479 = vsel %vm142, %v444, 0
  %481 = vmatprep.subr.bf16.mxu0 0
  %482 = vmatpush1.bf16.msra.mxu0 0
  %483 = vmatprep.subr.bf16.mxu0 0
  %484 = vmatpush1.bf16.msra.mxu0 0
  %485 = vmatprep.subr.bf16.mxu0 0
  %486 = vmatpush1.bf16.msra.mxu0 0
  %487 = vmatprep.subr.bf16.mxu0 0
  %488 = vmatpush1.bf16.msra.mxu0 0
  %489 = vmatprep.subr.bf16.mxu0 0
  %490 = vmatpush1.bf16.msra.mxu0 %v464
  %491 = vmatprep.subr.bf16.mxu0 0
  %492 = vmatpush1.bf16.msra.mxu0 %v463
  %493 = vmatprep.subr.bf16.mxu0 0
  %494 = vmatpush1.bf16.msra.mxu0 %v462
  %495 = vmatprep.subr.bf16.mxu0 0
  %496 = vmatpush1.bf16.msra.mxu0 %v461
  %497 = vmatprep.subr.bf16.mxu0 0
  %498 = vmatpush2.bf16.msra.mxu0 0
  %499 = vmatprep.subr.bf16.mxu0 0
  %500 = vmatpush2.bf16.msra.mxu0 0
  %501 = vmatprep.subr.bf16.mxu0 0
  %502 = vmatpush2.bf16.msra.mxu0 0
  %503 = vmatprep.subr.bf16.mxu0 0
  %504 = vmatpush2.bf16.msra.mxu0 0
  %505 = vmatprep.subr.bf16.mxu0 0
  %506 = vmatpush2.bf16.msra.mxu0 0
  %507 = vmatprep.subr.bf16.mxu0 0
  %508 = vmatpush2.bf16.msra.mxu0 0
  %509 = vmatprep.subr.bf16.mxu0 0
  %510 = vmatpush2.bf16.msra.mxu0 0
  %511 = vmatprep.subr.bf16.mxu0 0
  %512 = vmatpush2.bf16.msra.mxu0 0
  %513 = vmatprep.mubr.bf16.mxu0 0
  %514 = vmatmul.mubr.bf16.gmra.mxu0 %v147
  %v515 = vpop.f32.mrf.mxu0
  %v516 = vadd.f32 0.0, %v515
  %v517 = vpop.f32.mrf.mxu0
  %v518 = vpop.f32.mrf.mxu0
  %v519 = vadd.f32 0.0, %v518
  %v520 = vpop.f32.mrf.mxu0
  %521 = vmatprep.mubr.bf16.mxu0 0
  %522 = vmatmul.mubr.bf16.gmra.mxu0 %v470
  %v523 = vpop.f32.mrf.mxu0
  %v524 = vadd.f32 0.0, %v523
  %v525 = vpop.f32.mrf.mxu0
  %v526 = vpop.f32.mrf.mxu0
  %v527 = vadd.f32 0.0, %v526
  %v528 = vpop.f32.mrf.mxu0
  %529 = vmatprep.mubr.bf16.mxu0 0
  %530 = vmatmul.mubr.bf16.gmra.mxu0 %v153
  %v531 = vpop.f32.mrf.mxu0
  %v532 = vadd.f32 0.0, %v531
  %v533 = vpop.f32.mrf.mxu0
  %v534 = vpop.f32.mrf.mxu0
  %v535 = vadd.f32 0.0, %v534
  %v536 = vpop.f32.mrf.mxu0
  %537 = vmatprep.mubr.bf16.mxu0 0
  %538 = vmatmul.mubr.bf16.gmra.mxu0 %v473
  %v539 = vpop.f32.mrf.mxu0
  %v540 = vadd.f32 0.0, %v539
  %v541 = vpop.f32.mrf.mxu0
  %v542 = vpop.f32.mrf.mxu0
  %v543 = vadd.f32 0.0, %v542
  %v544 = vpop.f32.mrf.mxu0
  %545 = vmatprep.mubr.bf16.mxu0 0
  %546 = vmatmul.mubr.bf16.gmra.mxu0 %v159
  %v547 = vpop.f32.mrf.mxu0
  %v548 = vadd.f32 0.0, %v547
  %v549 = vpop.f32.mrf.mxu0
  %v550 = vpop.f32.mrf.mxu0
  %v551 = vadd.f32 0.0, %v550
  %v552 = vpop.f32.mrf.mxu0
  %553 = vmatprep.mubr.bf16.mxu0 0
  %554 = vmatmul.mubr.bf16.gmra.mxu0 %v476
  %v555 = vpop.f32.mrf.mxu0
  %v556 = vadd.f32 0.0, %v555
  %v557 = vpop.f32.mrf.mxu0
  %v558 = vpop.f32.mrf.mxu0
  %v559 = vadd.f32 0.0, %v558
  %v560 = vpop.f32.mrf.mxu0
  %561 = vmatprep.mubr.bf16.mxu0 0
  %562 = vmatmul.mubr.bf16.gmra.mxu0 %v165
  %v563 = vpop.f32.mrf.mxu0
  %v564 = vadd.f32 0.0, %v563
  %v565 = vpop.f32.mrf.mxu0
  %v566 = vpop.f32.mrf.mxu0
  %v567 = vadd.f32 0.0, %v566
  %v568 = vpop.f32.mrf.mxu0
  %569 = vmatprep.mubr.bf16.mxu0 0
  %570 = vmatmul.mubr.bf16.gmra.mxu0 %v479
  %v571 = vpop.f32.mrf.mxu0
  %v572 = vadd.f32 0.0, %v571
  %v573 = vpop.f32.mrf.mxu0
  %v574 = vpop.f32.mrf.mxu0
  %v575 = vadd.f32 0.0, %v574
  %v576 = vpop.f32.mrf.mxu0
  %577 = vdwg.mxu0
  %v578 = vadd.f32 %v355, %v516
  %v579 = vadd.f32 %v358, %v519
  %v580 = vadd.f32 %v363, %v524
  %v581 = vadd.f32 %v366, %v527
  %v582 = vadd.f32 %v371, %v532
  %v583 = vadd.f32 %v374, %v535
  %v584 = vadd.f32 %v379, %v540
  %v585 = vadd.f32 %v382, %v543
  %v586 = vadd.f32 %v387, %v548
  %v587 = vadd.f32 %v390, %v551
  %v588 = vadd.f32 %v395, %v556
  %v589 = vadd.f32 %v398, %v559
  %v590 = vadd.f32 %v403, %v564
  %v591 = vadd.f32 %v406, %v567
  %v592 = vadd.f32 %v411, %v572
  %v593 = vadd.f32 %v414, %v575
  %vm596 = vcmask 1041408
  %vm597 = vcmask 1045508
  %vm598 = vmor %vm596, %vm597
  %v599 = vrot.slane %v14, 6
  %v600 = vrot.slane %v599, 4
  %v601 = vrot.slane %v15, 6
  %v602 = vsel %vm598, %v600, %v601
  %v603 = vrot.slane %v601, 4
  %v604 = vrot.slane %v16, 6
  %v605 = vsel %vm598, %v603, %v604
  %v606 = vrot.slane %v38, 6
  %v607 = vrot.slane %v606, 4
  %v608 = vrot.slane %v39, 6
  %v609 = vsel %vm598, %v607, %v608
  %v610 = vrot.slane %v608, 4
  %v611 = vrot.slane %v40, 6
  %v612 = vsel %vm598, %v610, %v611
  %v615 = vrot.slane %v20, 6
  %v616 = vrot.slane %v615, 4
  %v617 = vrot.slane %v21, 6
  %v618 = vsel %vm598, %v616, %v617
  %v619 = vrot.slane %v617, 4
  %v620 = vrot.slane %v22, 6
  %v621 = vsel %vm598, %v619, %v620
  %v622 = vrot.slane %v44, 6
  %v623 = vrot.slane %v622, 4
  %v624 = vrot.slane %v45, 6
  %v625 = vsel %vm598, %v623, %v624
  %v626 = vrot.slane %v624, 4
  %v627 = vrot.slane %v46, 6
  %v628 = vsel %vm598, %v626, %v627
  %v629 = vld [vmem:[%s1 + $0x60] sm:$0xf]
  %v630 = vld [vmem:[%s1 + $0x64] sm:$0xf]
  %v631 = vld [vmem:[%s1 + $0x68] sm:$0xf]
  %v632 = vld [vmem:[%s1 + $0x6c] sm:$0xf]
  %v633 = vld [vmem:[%s1 + $0x70] sm:$0xf]
  %v634 = vld [vmem:[%s1 + $0x74] sm:$0xf]
  %v635 = vld [vmem:[%s1 + $0x78] sm:$0xf]
  %v636 = vld [vmem:[%s1 + $0x7c] sm:$0xf]
  %v637 = vunpack.c.l.b16 %v602
  %v638 = vunpack.c.l.b16 %v605
  %v639 = vunpack.c.l.b16 %v618
  %v640 = vunpack.c.l.b16 %v621
  %v641 = vunpack.c.l.b16 %v609
  %v642 = vunpack.c.l.b16 %v612
  %v643 = vunpack.c.l.b16 %v625
  %v644 = vunpack.c.l.b16 %v628
  %v645 = vpack.c.b16 %v638, %v637
  %v646 = vpack.c.b16 %v640, %v639
  %v647 = vpack.c.b16 %v642, %v641
  %v648 = vpack.c.b16 %v644, %v643
  %v657 = vunpack.c.l.b16 %v629
  %v658 = vunpack.c.l.b16 %v630
  %v659 = vunpack.c.l.b16 %v631
  %v660 = vunpack.c.l.b16 %v632
  %v661 = vunpack.c.l.b16 %v633
  %v662 = vunpack.c.l.b16 %v634
  %v663 = vunpack.c.l.b16 %v635
  %v664 = vunpack.c.l.b16 %v636
  %v665 = vpack.c.b16 %v658, %v657
  %v666 = vpack.c.b16 %v660, %v659
  %v667 = vpack.c.b16 %v662, %v661
  %v668 = vpack.c.b16 %v664, %v663
  %v674 = vsel %vm142, %v645, 0
  %v677 = vsel %vm142, %v646, 0
  %v680 = vsel %vm142, %v647, 0
  %v683 = vsel %vm142, %v648, 0
  %685 = vmatprep.subr.bf16.mxu0 0
  %686 = vmatpush1.bf16.msra.mxu0 0
  %687 = vmatprep.subr.bf16.mxu0 0
  %688 = vmatpush1.bf16.msra.mxu0 0
  %689 = vmatprep.subr.bf16.mxu0 0
  %690 = vmatpush1.bf16.msra.mxu0 0
  %691 = vmatprep.subr.bf16.mxu0 0
  %692 = vmatpush1.bf16.msra.mxu0 0
  %693 = vmatprep.subr.bf16.mxu0 0
  %694 = vmatpush1.bf16.msra.mxu0 %v668
  %695 = vmatprep.subr.bf16.mxu0 0
  %696 = vmatpush1.bf16.msra.mxu0 %v667
  %697 = vmatprep.subr.bf16.mxu0 0
  %698 = vmatpush1.bf16.msra.mxu0 %v666
  %699 = vmatprep.subr.bf16.mxu0 0
  %700 = vmatpush1.bf16.msra.mxu0 %v665
  %701 = vmatprep.subr.bf16.mxu0 0
  %702 = vmatpush2.bf16.msra.mxu0 0
  %703 = vmatprep.subr.bf16.mxu0 0
  %704 = vmatpush2.bf16.msra.mxu0 0
  %705 = vmatprep.subr.bf16.mxu0 0
  %706 = vmatpush2.bf16.msra.mxu0 0
  %707 = vmatprep.subr.bf16.mxu0 0
  %708 = vmatpush2.bf16.msra.mxu0 0
  %709 = vmatprep.subr.bf16.mxu0 0
  %710 = vmatpush2.bf16.msra.mxu0 0
  %711 = vmatprep.subr.bf16.mxu0 0
  %712 = vmatpush2.bf16.msra.mxu0 0
  %713 = vmatprep.subr.bf16.mxu0 0
  %714 = vmatpush2.bf16.msra.mxu0 0
  %715 = vmatprep.subr.bf16.mxu0 0
  %716 = vmatpush2.bf16.msra.mxu0 0
  %717 = vmatprep.mubr.bf16.mxu0 0
  %718 = vmatmul.mubr.bf16.gmra.mxu0 %v312
  %v719 = vpop.f32.mrf.mxu0
  %v720 = vadd.f32 0.0, %v719
  %v721 = vpop.f32.mrf.mxu0
  %v722 = vpop.f32.mrf.mxu0
  %v723 = vadd.f32 0.0, %v722
  %v724 = vpop.f32.mrf.mxu0
  %725 = vmatprep.mubr.bf16.mxu0 0
  %726 = vmatmul.mubr.bf16.gmra.mxu0 %v150
  %v727 = vpop.f32.mrf.mxu0
  %v728 = vadd.f32 0.0, %v727
  %v729 = vpop.f32.mrf.mxu0
  %v730 = vpop.f32.mrf.mxu0
  %v731 = vadd.f32 0.0, %v730
  %v732 = vpop.f32.mrf.mxu0
  %733 = vmatprep.mubr.bf16.mxu0 0
  %734 = vmatmul.mubr.bf16.gmra.mxu0 %v674
  %v735 = vpop.f32.mrf.mxu0
  %v736 = vadd.f32 0.0, %v735
  %v737 = vpop.f32.mrf.mxu0
  %v738 = vpop.f32.mrf.mxu0
  %v739 = vadd.f32 0.0, %v738
  %v740 = vpop.f32.mrf.mxu0
  %741 = vmatprep.mubr.bf16.mxu0 0
  %742 = vmatmul.mubr.bf16.gmra.mxu0 %v677
  %v743 = vpop.f32.mrf.mxu0
  %v744 = vadd.f32 0.0, %v743
  %v745 = vpop.f32.mrf.mxu0
  %v746 = vpop.f32.mrf.mxu0
  %v747 = vadd.f32 0.0, %v746
  %v748 = vpop.f32.mrf.mxu0
  %749 = vmatprep.mubr.bf16.mxu0 0
  %750 = vmatmul.mubr.bf16.gmra.mxu0 %v318
  %v751 = vpop.f32.mrf.mxu0
  %v752 = vadd.f32 0.0, %v751
  %v753 = vpop.f32.mrf.mxu0
  %v754 = vpop.f32.mrf.mxu0
  %v755 = vadd.f32 0.0, %v754
  %v756 = vpop.f32.mrf.mxu0
  %757 = vmatprep.mubr.bf16.mxu0 0
  %758 = vmatmul.mubr.bf16.gmra.mxu0 %v162
  %v759 = vpop.f32.mrf.mxu0
  %v760 = vadd.f32 0.0, %v759
  %v761 = vpop.f32.mrf.mxu0
  %v762 = vpop.f32.mrf.mxu0
  %v763 = vadd.f32 0.0, %v762
  %v764 = vpop.f32.mrf.mxu0
  %765 = vmatprep.mubr.bf16.mxu0 0
  %766 = vmatmul.mubr.bf16.gmra.mxu0 %v680
  %v767 = vpop.f32.mrf.mxu0
  %v768 = vadd.f32 0.0, %v767
  %v769 = vpop.f32.mrf.mxu0
  %v770 = vpop.f32.mrf.mxu0
  %v771 = vadd.f32 0.0, %v770
  %v772 = vpop.f32.mrf.mxu0
  %773 = vmatprep.mubr.bf16.mxu0 0
  %774 = vmatmul.mubr.bf16.gmra.mxu0 %v683
  %v775 = vpop.f32.mrf.mxu0
  %v776 = vadd.f32 0.0, %v775
  %v777 = vpop.f32.mrf.mxu0
  %v778 = vpop.f32.mrf.mxu0
  %v779 = vadd.f32 0.0, %v778
  %v780 = vpop.f32.mrf.mxu0
  %781 = vdwg.mxu0
  %v782 = vadd.f32 %v578, %v720
  %v783 = vadd.f32 %v579, %v723
  %v784 = vadd.f32 %v580, %v728
  %v785 = vadd.f32 %v581, %v731
  %v786 = vadd.f32 %v582, %v736
  %v787 = vadd.f32 %v583, %v739
  %v788 = vadd.f32 %v584, %v744
  %v789 = vadd.f32 %v585, %v747
  %v790 = vadd.f32 %v586, %v752
  %v791 = vadd.f32 %v587, %v755
  %v792 = vadd.f32 %v588, %v760
  %v793 = vadd.f32 %v589, %v763
  %v794 = vadd.f32 %v590, %v768
  %v795 = vadd.f32 %v591, %v771
  %v796 = vadd.f32 %v592, %v776
  %v797 = vadd.f32 %v593, %v779
  %v800 = vrot.slane %v17, 6
  %v801 = vrot.slane %v800, 4
  %v802 = vrot.slane %v18, 6
  %v803 = vsel %vm598, %v801, %v802
  %v804 = vrot.slane %v802, 4
  %v805 = vrot.slane %v19, 6
  %v806 = vsel %vm598, %v804, %v805
  %v807 = vrot.slane %v41, 6
  %v808 = vrot.slane %v807, 4
  %v809 = vrot.slane %v42, 6
  %v810 = vsel %vm598, %v808, %v809
  %v811 = vrot.slane %v809, 4
  %v812 = vrot.slane %v43, 6
  %v813 = vsel %vm598, %v811, %v812
  %v814 = vld [vmem:[%s1 + $0x80] sm:$0xf]
  %v815 = vld [vmem:[%s1 + $0x84] sm:$0xf]
  %v816 = vld [vmem:[%s1 + $0x88] sm:$0xf]
  %v817 = vld [vmem:[%s1 + $0x8c] sm:$0xf]
  %v818 = vld [vmem:[%s1 + $0x90] sm:$0xf]
  %v819 = vld [vmem:[%s1 + $0x94] sm:$0xf]
  %v820 = vld [vmem:[%s1 + $0x98] sm:$0xf]
  %v821 = vld [vmem:[%s1 + $0x9c] sm:$0xf]
  %v822 = vunpack.c.l.b16 %v803
  %v823 = vunpack.c.l.b16 %v806
  %v824 = vunpack.c.l.b16 %v810
  %v825 = vunpack.c.l.b16 %v813
  %v826 = vpack.c.b16 %v823, %v822
  %v827 = vpack.c.b16 %v825, %v824
  %v836 = vunpack.c.l.b16 %v814
  %v837 = vunpack.c.l.b16 %v815
  %v838 = vunpack.c.l.b16 %v816
  %v839 = vunpack.c.l.b16 %v817
  %v840 = vunpack.c.l.b16 %v818
  %v841 = vunpack.c.l.b16 %v819
  %v842 = vunpack.c.l.b16 %v820
  %v843 = vunpack.c.l.b16 %v821
  %v844 = vpack.c.b16 %v837, %v836
  %v845 = vpack.c.b16 %v839, %v838
  %v846 = vpack.c.b16 %v841, %v840
  %v847 = vpack.c.b16 %v843, %v842
  %v853 = vsel %vm142, %v826, 0
  %v856 = vsel %vm142, %v827, 0
  %858 = vmatprep.subr.bf16.mxu0 0
  %859 = vmatpush1.bf16.msra.mxu0 0
  %860 = vmatprep.subr.bf16.mxu0 0
  %861 = vmatpush1.bf16.msra.mxu0 0
  %862 = vmatprep.subr.bf16.mxu0 0
  %863 = vmatpush1.bf16.msra.mxu0 0
  %864 = vmatprep.subr.bf16.mxu0 0
  %865 = vmatpush1.bf16.msra.mxu0 0
  %866 = vmatprep.subr.bf16.mxu0 0
  %867 = vmatpush1.bf16.msra.mxu0 %v847
  %868 = vmatprep.subr.bf16.mxu0 0
  %869 = vmatpush1.bf16.msra.mxu0 %v846
  %870 = vmatprep.subr.bf16.mxu0 0
  %871 = vmatpush1.bf16.msra.mxu0 %v845
  %872 = vmatprep.subr.bf16.mxu0 0
  %873 = vmatpush1.bf16.msra.mxu0 %v844
  %874 = vmatprep.subr.bf16.mxu0 0
  %875 = vmatpush2.bf16.msra.mxu0 0
  %876 = vmatprep.subr.bf16.mxu0 0
  %877 = vmatpush2.bf16.msra.mxu0 0
  %878 = vmatprep.subr.bf16.mxu0 0
  %879 = vmatpush2.bf16.msra.mxu0 0
  %880 = vmatprep.subr.bf16.mxu0 0
  %881 = vmatpush2.bf16.msra.mxu0 0
  %882 = vmatprep.subr.bf16.mxu0 0
  %883 = vmatpush2.bf16.msra.mxu0 0
  %884 = vmatprep.subr.bf16.mxu0 0
  %885 = vmatpush2.bf16.msra.mxu0 0
  %886 = vmatprep.subr.bf16.mxu0 0
  %887 = vmatpush2.bf16.msra.mxu0 0
  %888 = vmatprep.subr.bf16.mxu0 0
  %889 = vmatpush2.bf16.msra.mxu0 0
  %890 = vmatprep.mubr.bf16.mxu0 0
  %891 = vmatmul.mubr.bf16.gmra.mxu0 %v150
  %v892 = vpop.f32.mrf.mxu0
  %v893 = vadd.f32 0.0, %v892
  %v894 = vpop.f32.mrf.mxu0
  %v895 = vpop.f32.mrf.mxu0
  %v896 = vadd.f32 0.0, %v895
  %v897 = vpop.f32.mrf.mxu0
  %898 = vmatprep.mubr.bf16.mxu0 0
  %899 = vmatmul.mubr.bf16.gmra.mxu0 %v153
  %v900 = vpop.f32.mrf.mxu0
  %v901 = vadd.f32 0.0, %v900
  %v902 = vpop.f32.mrf.mxu0
  %v903 = vpop.f32.mrf.mxu0
  %v904 = vadd.f32 0.0, %v903
  %v905 = vpop.f32.mrf.mxu0
  %906 = vmatprep.mubr.bf16.mxu0 0
  %907 = vmatmul.mubr.bf16.gmra.mxu0 %v677
  %v908 = vpop.f32.mrf.mxu0
  %v909 = vadd.f32 0.0, %v908
  %v910 = vpop.f32.mrf.mxu0
  %v911 = vpop.f32.mrf.mxu0
  %v912 = vadd.f32 0.0, %v911
  %v913 = vpop.f32.mrf.mxu0
  %914 = vmatprep.mubr.bf16.mxu0 0
  %915 = vmatmul.mubr.bf16.gmra.mxu0 %v853
  %v916 = vpop.f32.mrf.mxu0
  %v917 = vadd.f32 0.0, %v916
  %v918 = vpop.f32.mrf.mxu0
  %v919 = vpop.f32.mrf.mxu0
  %v920 = vadd.f32 0.0, %v919
  %v921 = vpop.f32.mrf.mxu0
  %922 = vmatprep.mubr.bf16.mxu0 0
  %923 = vmatmul.mubr.bf16.gmra.mxu0 %v162
  %v924 = vpop.f32.mrf.mxu0
  %v925 = vadd.f32 0.0, %v924
  %v926 = vpop.f32.mrf.mxu0
  %v927 = vpop.f32.mrf.mxu0
  %v928 = vadd.f32 0.0, %v927
  %v929 = vpop.f32.mrf.mxu0
  %930 = vmatprep.mubr.bf16.mxu0 0
  %931 = vmatmul.mubr.bf16.gmra.mxu0 %v165
  %v932 = vpop.f32.mrf.mxu0
  %v933 = vadd.f32 0.0, %v932
  %v934 = vpop.f32.mrf.mxu0
  %v935 = vpop.f32.mrf.mxu0
  %v936 = vadd.f32 0.0, %v935
  %v937 = vpop.f32.mrf.mxu0
  %938 = vmatprep.mubr.bf16.mxu0 0
  %939 = vmatmul.mubr.bf16.gmra.mxu0 %v683
  %v940 = vpop.f32.mrf.mxu0
  %v941 = vadd.f32 0.0, %v940
  %v942 = vpop.f32.mrf.mxu0
  %v943 = vpop.f32.mrf.mxu0
  %v944 = vadd.f32 0.0, %v943
  %v945 = vpop.f32.mrf.mxu0
  %946 = vmatprep.mubr.bf16.mxu0 0
  %947 = vmatmul.mubr.bf16.gmra.mxu0 %v856
  %v948 = vpop.f32.mrf.mxu0
  %v949 = vadd.f32 0.0, %v948
  %v950 = vpop.f32.mrf.mxu0
  %v951 = vpop.f32.mrf.mxu0
  %v952 = vadd.f32 0.0, %v951
  %v953 = vpop.f32.mrf.mxu0
  %954 = vdwg.mxu0
  %v955 = vadd.f32 %v782, %v893
  %v956 = vadd.f32 %v783, %v896
  %v957 = vadd.f32 %v784, %v901
  %v958 = vadd.f32 %v785, %v904
  %v959 = vadd.f32 %v786, %v909
  %v960 = vadd.f32 %v787, %v912
  %v961 = vadd.f32 %v788, %v917
  %v962 = vadd.f32 %v789, %v920
  %v963 = vadd.f32 %v790, %v925
  %v964 = vadd.f32 %v791, %v928
  %v965 = vadd.f32 %v792, %v933
  %v966 = vadd.f32 %v793, %v936
  %v967 = vadd.f32 %v794, %v941
  %v968 = vadd.f32 %v795, %v944
  %v969 = vadd.f32 %v796, %v949
  %v970 = vadd.f32 %v797, %v952
  %v973 = vrot.slane %v23, 6
  %v974 = vrot.slane %v973, 4
  %v975 = vrot.slane %v24, 6
  %v976 = vsel %vm598, %v974, %v975
  %v977 = vrot.slane %v975, 4
  %v978 = vrot.slane %v25, 6
  %v979 = vsel %vm598, %v977, %v978
  %v980 = vrot.slane %v47, 6
  %v981 = vrot.slane %v980, 4
  %v982 = vrot.slane %v48, 6
  %v983 = vsel %vm598, %v981, %v982
  %v984 = vrot.slane %v982, 4
  %v985 = vrot.slane %v49, 6
  %v986 = vsel %vm598, %v984, %v985
  %v987 = vld [vmem:[%s1 + $0xa0] sm:$0xf]
  %v988 = vld [vmem:[%s1 + $0xa4] sm:$0xf]
  %v989 = vld [vmem:[%s1 + $0xa8] sm:$0xf]
  %v990 = vld [vmem:[%s1 + $0xac] sm:$0xf]
  %v991 = vld [vmem:[%s1 + $0xb0] sm:$0xf]
  %v992 = vld [vmem:[%s1 + $0xb4] sm:$0xf]
  %v993 = vld [vmem:[%s1 + $0xb8] sm:$0xf]
  %v994 = vld [vmem:[%s1 + $0xbc] sm:$0xf]
  %v995 = vunpack.c.l.b16 %v976
  %v996 = vunpack.c.l.b16 %v979
  %v997 = vunpack.c.l.b16 %v983
  %v998 = vunpack.c.l.b16 %v986
  %v999 = vpack.c.b16 %v996, %v995
  %v1000 = vpack.c.b16 %v998, %v997
  %v1009 = vunpack.c.l.b16 %v987
  %v1010 = vunpack.c.l.b16 %v988
  %v1011 = vunpack.c.l.b16 %v989
  %v1012 = vunpack.c.l.b16 %v990
  %v1013 = vunpack.c.l.b16 %v991
  %v1014 = vunpack.c.l.b16 %v992
  %v1015 = vunpack.c.l.b16 %v993
  %v1016 = vunpack.c.l.b16 %v994
  %v1017 = vpack.c.b16 %v1010, %v1009
  %v1018 = vpack.c.b16 %v1012, %v1011
  %v1019 = vpack.c.b16 %v1014, %v1013
  %v1020 = vpack.c.b16 %v1016, %v1015
  %v1026 = vsel %vm142, %v999, 0
  %v1029 = vsel %vm142, %v1000, 0
  %1031 = vmatprep.subr.bf16.mxu0 0
  %1032 = vmatpush1.bf16.msra.mxu0 0
  %1033 = vmatprep.subr.bf16.mxu0 0
  %1034 = vmatpush1.bf16.msra.mxu0 0
  %1035 = vmatprep.subr.bf16.mxu0 0
  %1036 = vmatpush1.bf16.msra.mxu0 0
  %1037 = vmatprep.subr.bf16.mxu0 0
  %1038 = vmatpush1.bf16.msra.mxu0 0
  %1039 = vmatprep.subr.bf16.mxu0 0
  %1040 = vmatpush1.bf16.msra.mxu0 %v1020
  %1041 = vmatprep.subr.bf16.mxu0 0
  %1042 = vmatpush1.bf16.msra.mxu0 %v1019
  %1043 = vmatprep.subr.bf16.mxu0 0
  %1044 = vmatpush1.bf16.msra.mxu0 %v1018
  %1045 = vmatprep.subr.bf16.mxu0 0
  %1046 = vmatpush1.bf16.msra.mxu0 %v1017
  %1047 = vmatprep.subr.bf16.mxu0 0
  %1048 = vmatpush2.bf16.msra.mxu0 0
  %1049 = vmatprep.subr.bf16.mxu0 0
  %1050 = vmatpush2.bf16.msra.mxu0 0
  %1051 = vmatprep.subr.bf16.mxu0 0
  %1052 = vmatpush2.bf16.msra.mxu0 0
  %1053 = vmatprep.subr.bf16.mxu0 0
  %1054 = vmatpush2.bf16.msra.mxu0 0
  %1055 = vmatprep.subr.bf16.mxu0 0
  %1056 = vmatpush2.bf16.msra.mxu0 0
  %1057 = vmatprep.subr.bf16.mxu0 0
  %1058 = vmatpush2.bf16.msra.mxu0 0
  %1059 = vmatprep.subr.bf16.mxu0 0
  %1060 = vmatpush2.bf16.msra.mxu0 0
  %1061 = vmatprep.subr.bf16.mxu0 0
  %1062 = vmatpush2.bf16.msra.mxu0 0
  %1063 = vmatprep.mubr.bf16.mxu0 0
  %1064 = vmatmul.mubr.bf16.gmra.mxu0 %v153
  %v1065 = vpop.f32.mrf.mxu0
  %v1066 = vadd.f32 0.0, %v1065
  %v1067 = vpop.f32.mrf.mxu0
  %v1068 = vpop.f32.mrf.mxu0
  %v1069 = vadd.f32 0.0, %v1068
  %v1070 = vpop.f32.mrf.mxu0
  %1071 = vmatprep.mubr.bf16.mxu0 0
  %1072 = vmatmul.mubr.bf16.gmra.mxu0 %v473
  %v1073 = vpop.f32.mrf.mxu0
  %v1074 = vadd.f32 0.0, %v1073
  %v1075 = vpop.f32.mrf.mxu0
  %v1076 = vpop.f32.mrf.mxu0
  %v1077 = vadd.f32 0.0, %v1076
  %v1078 = vpop.f32.mrf.mxu0
  %1079 = vmatprep.mubr.bf16.mxu0 0
  %1080 = vmatmul.mubr.bf16.gmra.mxu0 %v853
  %v1081 = vpop.f32.mrf.mxu0
  %v1082 = vadd.f32 0.0, %v1081
  %v1083 = vpop.f32.mrf.mxu0
  %v1084 = vpop.f32.mrf.mxu0
  %v1085 = vadd.f32 0.0, %v1084
  %v1086 = vpop.f32.mrf.mxu0
  %1087 = vmatprep.mubr.bf16.mxu0 0
  %1088 = vmatmul.mubr.bf16.gmra.mxu0 %v1026
  %v1089 = vpop.f32.mrf.mxu0
  %v1090 = vadd.f32 0.0, %v1089
  %v1091 = vpop.f32.mrf.mxu0
  %v1092 = vpop.f32.mrf.mxu0
  %v1093 = vadd.f32 0.0, %v1092
  %v1094 = vpop.f32.mrf.mxu0
  %1095 = vmatprep.mubr.bf16.mxu0 0
  %1096 = vmatmul.mubr.bf16.gmra.mxu0 %v165
  %v1097 = vpop.f32.mrf.mxu0
  %v1098 = vadd.f32 0.0, %v1097
  %v1099 = vpop.f32.mrf.mxu0
  %v1100 = vpop.f32.mrf.mxu0
  %v1101 = vadd.f32 0.0, %v1100
  %v1102 = vpop.f32.mrf.mxu0
  %1103 = vmatprep.mubr.bf16.mxu0 0
  %1104 = vmatmul.mubr.bf16.gmra.mxu0 %v479
  %v1105 = vpop.f32.mrf.mxu0
  %v1106 = vadd.f32 0.0, %v1105
  %v1107 = vpop.f32.mrf.mxu0
  %v1108 = vpop.f32.mrf.mxu0
  %v1109 = vadd.f32 0.0, %v1108
  %v1110 = vpop.f32.mrf.mxu0
  %1111 = vmatprep.mubr.bf16.mxu0 0
  %1112 = vmatmul.mubr.bf16.gmra.mxu0 %v856
  %v1113 = vpop.f32.mrf.mxu0
  %v1114 = vadd.f32 0.0, %v1113
  %v1115 = vpop.f32.mrf.mxu0
  %v1116 = vpop.f32.mrf.mxu0
  %v1117 = vadd.f32 0.0, %v1116
  %v1118 = vpop.f32.mrf.mxu0
  %1119 = vmatprep.mubr.bf16.mxu0 0
  %1120 = vmatmul.mubr.bf16.gmra.mxu0 %v1029
  %v1121 = vpop.f32.mrf.mxu0
  %v1122 = vadd.f32 0.0, %v1121
  %v1123 = vpop.f32.mrf.mxu0
  %v1124 = vpop.f32.mrf.mxu0
  %v1125 = vadd.f32 0.0, %v1124
  %v1126 = vpop.f32.mrf.mxu0
  %1127 = vdwg.mxu0
  %v1128 = vadd.f32 %v955, %v1066
  %v1129 = vadd.f32 %v956, %v1069
  %v1130 = vadd.f32 %v957, %v1074
  %v1131 = vadd.f32 %v958, %v1077
  %v1132 = vadd.f32 %v959, %v1082
  %v1133 = vadd.f32 %v960, %v1085
  %v1134 = vadd.f32 %v961, %v1090
  %v1135 = vadd.f32 %v962, %v1093
  %v1136 = vadd.f32 %v963, %v1098
  %v1137 = vadd.f32 %v964, %v1101
  %v1138 = vadd.f32 %v965, %v1106
  %v1139 = vadd.f32 %v966, %v1109
  %v1140 = vadd.f32 %v967, %v1114
  %v1141 = vadd.f32 %v968, %v1117
  %v1142 = vadd.f32 %v969, %v1122
  %v1143 = vadd.f32 %v970, %v1125
  %v1148 = vrot.slane %v26, 6
  %v1149 = vrot.slane %v1148, 4
  %v1150 = vrot.slane %v27, 6
  %v1151 = vsel %vm598, %v1149, %v1150
  %v1152 = vrot.slane %v1150, 4
  %v1153 = vrot.slane %v28, 6
  %v1154 = vsel %vm598, %v1152, %v1153
  %v1155 = vrot.slane %v32, 6
  %v1156 = vrot.slane %v1155, 4
  %v1157 = vrot.slane %v33, 6
  %v1158 = vsel %vm598, %v1156, %v1157
  %v1159 = vrot.slane %v1157, 4
  %v1160 = vrot.slane %v34, 6
  %v1161 = vsel %vm598, %v1159, %v1160
  %v1162 = vrot.slane %v50, 6
  %v1163 = vrot.slane %v1162, 4
  %v1164 = vrot.slane %v51, 6
  %v1165 = vsel %vm598, %v1163, %v1164
  %v1166 = vrot.slane %v1164, 4
  %v1167 = vrot.slane %v52, 6
  %v1168 = vsel %vm598, %v1166, %v1167
  %v1169 = vrot.slane %v56, 6
  %v1170 = vrot.slane %v1169, 4
  %v1171 = vrot.slane %v57, 6
  %v1172 = vsel %vm598, %v1170, %v1171
  %v1173 = vrot.slane %v1171, 4
  %v1174 = vrot.slane %v58, 6
  %v1175 = vsel %vm598, %v1173, %v1174
  %v1176 = vld [vmem:[%s1 + $0xc0] sm:$0xf]
  %v1177 = vld [vmem:[%s1 + $0xc4] sm:$0xf]
  %v1178 = vld [vmem:[%s1 + $0xc8] sm:$0xf]
  %v1179 = vld [vmem:[%s1 + $0xcc] sm:$0xf]
  %v1180 = vld [vmem:[%s1 + $0xd0] sm:$0xf]
  %v1181 = vld [vmem:[%s1 + $0xd4] sm:$0xf]
  %v1182 = vld [vmem:[%s1 + $0xd8] sm:$0xf]
  %v1183 = vld [vmem:[%s1 + $0xdc] sm:$0xf]
  %v1184 = vunpack.c.l.b16 %v1151
  %v1185 = vunpack.c.l.b16 %v1154
  %v1186 = vunpack.c.l.b16 %v1158
  %v1187 = vunpack.c.l.b16 %v1161
  %v1188 = vunpack.c.l.b16 %v1165
  %v1189 = vunpack.c.l.b16 %v1168
  %v1190 = vunpack.c.l.b16 %v1172
  %v1191 = vunpack.c.l.b16 %v1175
  %v1192 = vpack.c.b16 %v1185, %v1184
  %v1193 = vpack.c.b16 %v1187, %v1186
  %v1194 = vpack.c.b16 %v1189, %v1188
  %v1195 = vpack.c.b16 %v1191, %v1190
  %v1204 = vunpack.c.l.b16 %v1176
  %v1205 = vunpack.c.l.b16 %v1177
  %v1206 = vunpack.c.l.b16 %v1178
  %v1207 = vunpack.c.l.b16 %v1179
  %v1208 = vunpack.c.l.b16 %v1180
  %v1209 = vunpack.c.l.b16 %v1181
  %v1210 = vunpack.c.l.b16 %v1182
  %v1211 = vunpack.c.l.b16 %v1183
  %v1212 = vpack.c.b16 %v1205, %v1204
  %v1213 = vpack.c.b16 %v1207, %v1206
  %v1214 = vpack.c.b16 %v1209, %v1208
  %v1215 = vpack.c.b16 %v1211, %v1210
  %v1221 = vsel %vm142, %v1192, 0
  %v1224 = vsel %vm142, %v1193, 0
  %v1227 = vsel %vm142, %v1194, 0
  %v1230 = vsel %vm142, %v1195, 0
  %1232 = vmatprep.subr.bf16.mxu0 0
  %1233 = vmatpush1.bf16.msra.mxu0 0
  %1234 = vmatprep.subr.bf16.mxu0 0
  %1235 = vmatpush1.bf16.msra.mxu0 0
  %1236 = vmatprep.subr.bf16.mxu0 0
  %1237 = vmatpush1.bf16.msra.mxu0 0
  %1238 = vmatprep.subr.bf16.mxu0 0
  %1239 = vmatpush1.bf16.msra.mxu0 0
  %1240 = vmatprep.subr.bf16.mxu0 0
  %1241 = vmatpush1.bf16.msra.mxu0 %v1215
  %1242 = vmatprep.subr.bf16.mxu0 0
  %1243 = vmatpush1.bf16.msra.mxu0 %v1214
  %1244 = vmatprep.subr.bf16.mxu0 0
  %1245 = vmatpush1.bf16.msra.mxu0 %v1213
  %1246 = vmatprep.subr.bf16.mxu0 0
  %1247 = vmatpush1.bf16.msra.mxu0 %v1212
  %1248 = vmatprep.subr.bf16.mxu0 0
  %1249 = vmatpush2.bf16.msra.mxu0 0
  %1250 = vmatprep.subr.bf16.mxu0 0
  %1251 = vmatpush2.bf16.msra.mxu0 0
  %1252 = vmatprep.subr.bf16.mxu0 0
  %1253 = vmatpush2.bf16.msra.mxu0 0
  %1254 = vmatprep.subr.bf16.mxu0 0
  %1255 = vmatpush2.bf16.msra.mxu0 0
  %1256 = vmatprep.subr.bf16.mxu0 0
  %1257 = vmatpush2.bf16.msra.mxu0 0
  %1258 = vmatprep.subr.bf16.mxu0 0
  %1259 = vmatpush2.bf16.msra.mxu0 0
  %1260 = vmatprep.subr.bf16.mxu0 0
  %1261 = vmatpush2.bf16.msra.mxu0 0
  %1262 = vmatprep.subr.bf16.mxu0 0
  %1263 = vmatpush2.bf16.msra.mxu0 0
  %1264 = vmatprep.mubr.bf16.mxu0 0
  %1265 = vmatmul.mubr.bf16.gmra.mxu0 %v674
  %v1266 = vpop.f32.mrf.mxu0
  %v1267 = vadd.f32 0.0, %v1266
  %v1268 = vpop.f32.mrf.mxu0
  %v1269 = vpop.f32.mrf.mxu0
  %v1270 = vadd.f32 0.0, %v1269
  %v1271 = vpop.f32.mrf.mxu0
  %1272 = vmatprep.mubr.bf16.mxu0 0
  %1273 = vmatmul.mubr.bf16.gmra.mxu0 %v677
  %v1274 = vpop.f32.mrf.mxu0
  %v1275 = vadd.f32 0.0, %v1274
  %v1276 = vpop.f32.mrf.mxu0
  %v1277 = vpop.f32.mrf.mxu0
  %v1278 = vadd.f32 0.0, %v1277
  %v1279 = vpop.f32.mrf.mxu0
  %1280 = vmatprep.mubr.bf16.mxu0 0
  %1281 = vmatmul.mubr.bf16.gmra.mxu0 %v1221
  %v1282 = vpop.f32.mrf.mxu0
  %v1283 = vadd.f32 0.0, %v1282
  %v1284 = vpop.f32.mrf.mxu0
  %v1285 = vpop.f32.mrf.mxu0
  %v1286 = vadd.f32 0.0, %v1285
  %v1287 = vpop.f32.mrf.mxu0
  %1288 = vmatprep.mubr.bf16.mxu0 0
  %1289 = vmatmul.mubr.bf16.gmra.mxu0 %v1224
  %v1290 = vpop.f32.mrf.mxu0
  %v1291 = vadd.f32 0.0, %v1290
  %v1292 = vpop.f32.mrf.mxu0
  %v1293 = vpop.f32.mrf.mxu0
  %v1294 = vadd.f32 0.0, %v1293
  %v1295 = vpop.f32.mrf.mxu0
  %1296 = vmatprep.mubr.bf16.mxu0 0
  %1297 = vmatmul.mubr.bf16.gmra.mxu0 %v680
  %v1298 = vpop.f32.mrf.mxu0
  %v1299 = vadd.f32 0.0, %v1298
  %v1300 = vpop.f32.mrf.mxu0
  %v1301 = vpop.f32.mrf.mxu0
  %v1302 = vadd.f32 0.0, %v1301
  %v1303 = vpop.f32.mrf.mxu0
  %1304 = vmatprep.mubr.bf16.mxu0 0
  %1305 = vmatmul.mubr.bf16.gmra.mxu0 %v683
  %v1306 = vpop.f32.mrf.mxu0
  %v1307 = vadd.f32 0.0, %v1306
  %v1308 = vpop.f32.mrf.mxu0
  %v1309 = vpop.f32.mrf.mxu0
  %v1310 = vadd.f32 0.0, %v1309
  %v1311 = vpop.f32.mrf.mxu0
  %1312 = vmatprep.mubr.bf16.mxu0 0
  %1313 = vmatmul.mubr.bf16.gmra.mxu0 %v1227
  %v1314 = vpop.f32.mrf.mxu0
  %v1315 = vadd.f32 0.0, %v1314
  %v1316 = vpop.f32.mrf.mxu0
  %v1317 = vpop.f32.mrf.mxu0
  %v1318 = vadd.f32 0.0, %v1317
  %v1319 = vpop.f32.mrf.mxu0
  %1320 = vmatprep.mubr.bf16.mxu0 0
  %1321 = vmatmul.mubr.bf16.gmra.mxu0 %v1230
  %v1322 = vpop.f32.mrf.mxu0
  %v1323 = vadd.f32 0.0, %v1322
  %v1324 = vpop.f32.mrf.mxu0
  %v1325 = vpop.f32.mrf.mxu0
  %v1326 = vadd.f32 0.0, %v1325
  %v1327 = vpop.f32.mrf.mxu0
  %1328 = vdwg.mxu0
  %v1329 = vadd.f32 %v1128, %v1267
  %v1330 = vadd.f32 %v1129, %v1270
  %v1331 = vadd.f32 %v1130, %v1275
  %v1332 = vadd.f32 %v1131, %v1278
  %v1333 = vadd.f32 %v1132, %v1283
  %v1334 = vadd.f32 %v1133, %v1286
  %v1335 = vadd.f32 %v1134, %v1291
  %v1336 = vadd.f32 %v1135, %v1294
  %v1337 = vadd.f32 %v1136, %v1299
  %v1338 = vadd.f32 %v1137, %v1302
  %v1339 = vadd.f32 %v1138, %v1307
  %v1340 = vadd.f32 %v1139, %v1310
  %v1341 = vadd.f32 %v1140, %v1315
  %v1342 = vadd.f32 %v1141, %v1318
  %v1343 = vadd.f32 %v1142, %v1323
  %v1344 = vadd.f32 %v1143, %v1326
  %v1347 = vrot.slane %v29, 6
  %v1348 = vrot.slane %v1347, 4
  %v1349 = vrot.slane %v30, 6
  %v1350 = vsel %vm598, %v1348, %v1349
  %v1351 = vrot.slane %v1349, 4
  %v1352 = vrot.slane %v31, 6
  %v1353 = vsel %vm598, %v1351, %v1352
  %v1354 = vrot.slane %v53, 6
  %v1355 = vrot.slane %v1354, 4
  %v1356 = vrot.slane %v54, 6
  %v1357 = vsel %vm598, %v1355, %v1356
  %v1358 = vrot.slane %v1356, 4
  %v1359 = vrot.slane %v55, 6
  %v1360 = vsel %vm598, %v1358, %v1359
  %v1361 = vld [vmem:[%s1 + $0xe0] sm:$0xf]
  %v1362 = vld [vmem:[%s1 + $0xe4] sm:$0xf]
  %v1363 = vld [vmem:[%s1 + $0xe8] sm:$0xf]
  %v1364 = vld [vmem:[%s1 + $0xec] sm:$0xf]
  %v1365 = vld [vmem:[%s1 + $0xf0] sm:$0xf]
  %v1366 = vld [vmem:[%s1 + $0xf4] sm:$0xf]
  %v1367 = vld [vmem:[%s1 + $0xf8] sm:$0xf]
  %v1368 = vld [vmem:[%s1 + $0xfc] sm:$0xf]
  %v1369 = vunpack.c.l.b16 %v1350
  %v1370 = vunpack.c.l.b16 %v1353
  %v1371 = vunpack.c.l.b16 %v1357
  %v1372 = vunpack.c.l.b16 %v1360
  %v1373 = vpack.c.b16 %v1370, %v1369
  %v1374 = vpack.c.b16 %v1372, %v1371
  %v1383 = vunpack.c.l.b16 %v1361
  %v1384 = vunpack.c.l.b16 %v1362
  %v1385 = vunpack.c.l.b16 %v1363
  %v1386 = vunpack.c.l.b16 %v1364
  %v1387 = vunpack.c.l.b16 %v1365
  %v1388 = vunpack.c.l.b16 %v1366
  %v1389 = vunpack.c.l.b16 %v1367
  %v1390 = vunpack.c.l.b16 %v1368
  %v1391 = vpack.c.b16 %v1384, %v1383
  %v1392 = vpack.c.b16 %v1386, %v1385
  %v1393 = vpack.c.b16 %v1388, %v1387
  %v1394 = vpack.c.b16 %v1390, %v1389
  %v1400 = vsel %vm142, %v1373, 0
  %v1403 = vsel %vm142, %v1374, 0
  %1405 = vmatprep.subr.bf16.mxu0 0
  %1406 = vmatpush1.bf16.msra.mxu0 0
  %1407 = vmatprep.subr.bf16.mxu0 0
  %1408 = vmatpush1.bf16.msra.mxu0 0
  %1409 = vmatprep.subr.bf16.mxu0 0
  %1410 = vmatpush1.bf16.msra.mxu0 0
  %1411 = vmatprep.subr.bf16.mxu0 0
  %1412 = vmatpush1.bf16.msra.mxu0 0
  %1413 = vmatprep.subr.bf16.mxu0 0
  %1414 = vmatpush1.bf16.msra.mxu0 %v1394
  %1415 = vmatprep.subr.bf16.mxu0 0
  %1416 = vmatpush1.bf16.msra.mxu0 %v1393
  %1417 = vmatprep.subr.bf16.mxu0 0
  %1418 = vmatpush1.bf16.msra.mxu0 %v1392
  %1419 = vmatprep.subr.bf16.mxu0 0
  %1420 = vmatpush1.bf16.msra.mxu0 %v1391
  %1421 = vmatprep.subr.bf16.mxu0 0
  %1422 = vmatpush2.bf16.msra.mxu0 0
  %1423 = vmatprep.subr.bf16.mxu0 0
  %1424 = vmatpush2.bf16.msra.mxu0 0
  %1425 = vmatprep.subr.bf16.mxu0 0
  %1426 = vmatpush2.bf16.msra.mxu0 0
  %1427 = vmatprep.subr.bf16.mxu0 0
  %1428 = vmatpush2.bf16.msra.mxu0 0
  %1429 = vmatprep.subr.bf16.mxu0 0
  %1430 = vmatpush2.bf16.msra.mxu0 0
  %1431 = vmatprep.subr.bf16.mxu0 0
  %1432 = vmatpush2.bf16.msra.mxu0 0
  %1433 = vmatprep.subr.bf16.mxu0 0
  %1434 = vmatpush2.bf16.msra.mxu0 0
  %1435 = vmatprep.subr.bf16.mxu0 0
  %1436 = vmatpush2.bf16.msra.mxu0 0
  %1437 = vmatprep.mubr.bf16.mxu0 0
  %1438 = vmatmul.mubr.bf16.gmra.mxu0 %v677
  %v1439 = vpop.f32.mrf.mxu0
  %v1440 = vadd.f32 0.0, %v1439
  %v1441 = vpop.f32.mrf.mxu0
  %v1442 = vpop.f32.mrf.mxu0
  %v1443 = vadd.f32 0.0, %v1442
  %v1444 = vpop.f32.mrf.mxu0
  %1445 = vmatprep.mubr.bf16.mxu0 0
  %1446 = vmatmul.mubr.bf16.gmra.mxu0 %v853
  %v1447 = vpop.f32.mrf.mxu0
  %v1448 = vadd.f32 0.0, %v1447
  %v1449 = vpop.f32.mrf.mxu0
  %v1450 = vpop.f32.mrf.mxu0
  %v1451 = vadd.f32 0.0, %v1450
  %v1452 = vpop.f32.mrf.mxu0
  %1453 = vmatprep.mubr.bf16.mxu0 0
  %1454 = vmatmul.mubr.bf16.gmra.mxu0 %v1224
  %v1455 = vpop.f32.mrf.mxu0
  %v1456 = vadd.f32 0.0, %v1455
  %v1457 = vpop.f32.mrf.mxu0
  %v1458 = vpop.f32.mrf.mxu0
  %v1459 = vadd.f32 0.0, %v1458
  %v1460 = vpop.f32.mrf.mxu0
  %1461 = vmatprep.mubr.bf16.mxu0 0
  %1462 = vmatmul.mubr.bf16.gmra.mxu0 %v1400
  %v1463 = vpop.f32.mrf.mxu0
  %v1464 = vadd.f32 0.0, %v1463
  %v1465 = vpop.f32.mrf.mxu0
  %v1466 = vpop.f32.mrf.mxu0
  %v1467 = vadd.f32 0.0, %v1466
  %v1468 = vpop.f32.mrf.mxu0
  %1469 = vmatprep.mubr.bf16.mxu0 0
  %1470 = vmatmul.mubr.bf16.gmra.mxu0 %v683
  %v1471 = vpop.f32.mrf.mxu0
  %v1472 = vadd.f32 0.0, %v1471
  %v1473 = vpop.f32.mrf.mxu0
  %v1474 = vpop.f32.mrf.mxu0
  %v1475 = vadd.f32 0.0, %v1474
  %v1476 = vpop.f32.mrf.mxu0
  %1477 = vmatprep.mubr.bf16.mxu0 0
  %1478 = vmatmul.mubr.bf16.gmra.mxu0 %v856
  %v1479 = vpop.f32.mrf.mxu0
  %v1480 = vadd.f32 0.0, %v1479
  %v1481 = vpop.f32.mrf.mxu0
  %v1482 = vpop.f32.mrf.mxu0
  %v1483 = vadd.f32 0.0, %v1482
  %v1484 = vpop.f32.mrf.mxu0
  %1485 = vmatprep.mubr.bf16.mxu0 0
  %1486 = vmatmul.mubr.bf16.gmra.mxu0 %v1230
  %v1487 = vpop.f32.mrf.mxu0
  %v1488 = vadd.f32 0.0, %v1487
  %v1489 = vpop.f32.mrf.mxu0
  %v1490 = vpop.f32.mrf.mxu0
  %v1491 = vadd.f32 0.0, %v1490
  %v1492 = vpop.f32.mrf.mxu0
  %1493 = vmatprep.mubr.bf16.mxu0 0
  %1494 = vmatmul.mubr.bf16.gmra.mxu0 %v1403
  %v1495 = vpop.f32.mrf.mxu0
  %v1496 = vadd.f32 0.0, %v1495
  %v1497 = vpop.f32.mrf.mxu0
  %v1498 = vpop.f32.mrf.mxu0
  %v1499 = vadd.f32 0.0, %v1498
  %v1500 = vpop.f32.mrf.mxu0
  %1501 = vdwg.mxu0
  %v1502 = vadd.f32 %v1329, %v1440
  %v1503 = vadd.f32 %v1330, %v1443
  %v1504 = vadd.f32 %v1331, %v1448
  %v1505 = vadd.f32 %v1332, %v1451
  %v1506 = vadd.f32 %v1333, %v1456
  %v1507 = vadd.f32 %v1334, %v1459
  %v1508 = vadd.f32 %v1335, %v1464
  %v1509 = vadd.f32 %v1336, %v1467
  %v1510 = vadd.f32 %v1337, %v1472
  %v1511 = vadd.f32 %v1338, %v1475
  %v1512 = vadd.f32 %v1339, %v1480
  %v1513 = vadd.f32 %v1340, %v1483
  %v1514 = vadd.f32 %v1341, %v1488
  %v1515 = vadd.f32 %v1342, %v1491
  %v1516 = vadd.f32 %v1343, %v1496
  %v1517 = vadd.f32 %v1344, %v1499
  %v1520 = vrot.slane %v35, 6
  %v1521 = vrot.slane %v1520, 4
  %v1522 = vrot.slane %v36, 6
  %v1523 = vsel %vm598, %v1521, %v1522
  %v1524 = vrot.slane %v1522, 4
  %v1525 = vrot.slane %v37, 6
  %v1526 = vsel %vm598, %v1524, %v1525
  %v1527 = vrot.slane %v59, 6
  %v1528 = vrot.slane %v1527, 4
  %v1529 = vrot.slane %v60, 6
  %v1530 = vsel %vm598, %v1528, %v1529
  %v1531 = vrot.slane %v1529, 4
  %v1532 = vrot.slane %v61, 6
  %v1533 = vsel %vm598, %v1531, %v1532
  %v1534 = vld [vmem:[%s1 + $0x100] sm:$0xf]
  %v1535 = vld [vmem:[%s1 + $0x104] sm:$0xf]
  %v1536 = vld [vmem:[%s1 + $0x108] sm:$0xf]
  %v1537 = vld [vmem:[%s1 + $0x10c] sm:$0xf]
  %v1538 = vld [vmem:[%s1 + $0x110] sm:$0xf]
  %v1539 = vld [vmem:[%s1 + $0x114] sm:$0xf]
  %v1540 = vld [vmem:[%s1 + $0x118] sm:$0xf]
  %v1541 = vld [vmem:[%s1 + $0x11c] sm:$0xf]
  %v1542 = vunpack.c.l.b16 %v1523
  %v1543 = vunpack.c.l.b16 %v1526
  %v1544 = vunpack.c.l.b16 %v1530
  %v1545 = vunpack.c.l.b16 %v1533
  %v1546 = vpack.c.b16 %v1543, %v1542
  %v1547 = vpack.c.b16 %v1545, %v1544
  %v1556 = vunpack.c.l.b16 %v1534
  %v1557 = vunpack.c.l.b16 %v1535
  %v1558 = vunpack.c.l.b16 %v1536
  %v1559 = vunpack.c.l.b16 %v1537
  %v1560 = vunpack.c.l.b16 %v1538
  %v1561 = vunpack.c.l.b16 %v1539
  %v1562 = vunpack.c.l.b16 %v1540
  %v1563 = vunpack.c.l.b16 %v1541
  %v1564 = vpack.c.b16 %v1557, %v1556
  %v1565 = vpack.c.b16 %v1559, %v1558
  %v1566 = vpack.c.b16 %v1561, %v1560
  %v1567 = vpack.c.b16 %v1563, %v1562
  %v1573 = vsel %vm142, %v1546, 0
  %v1576 = vsel %vm142, %v1547, 0
  %1578 = vmatprep.subr.bf16.mxu0 0
  %1579 = vmatpush1.bf16.msra.mxu0 0
  %1580 = vmatprep.subr.bf16.mxu0 0
  %1581 = vmatpush1.bf16.msra.mxu0 0
  %1582 = vmatprep.subr.bf16.mxu0 0
  %1583 = vmatpush1.bf16.msra.mxu0 0
  %1584 = vmatprep.subr.bf16.mxu0 0
  %1585 = vmatpush1.bf16.msra.mxu0 0
  %1586 = vmatprep.subr.bf16.mxu0 0
  %1587 = vmatpush1.bf16.msra.mxu0 %v1567
  %1588 = vmatprep.subr.bf16.mxu0 0
  %1589 = vmatpush1.bf16.msra.mxu0 %v1566
  %1590 = vmatprep.subr.bf16.mxu0 0
  %1591 = vmatpush1.bf16.msra.mxu0 %v1565
  %1592 = vmatprep.subr.bf16.mxu0 0
  %1593 = vmatpush1.bf16.msra.mxu0 %v1564
  %1594 = vmatprep.subr.bf16.mxu0 0
  %1595 = vmatpush2.bf16.msra.mxu0 0
  %1596 = vmatprep.subr.bf16.mxu0 0
  %1597 = vmatpush2.bf16.msra.mxu0 0
  %1598 = vmatprep.subr.bf16.mxu0 0
  %1599 = vmatpush2.bf16.msra.mxu0 0
  %1600 = vmatprep.subr.bf16.mxu0 0
  %1601 = vmatpush2.bf16.msra.mxu0 0
  %1602 = vmatprep.subr.bf16.mxu0 0
  %1603 = vmatpush2.bf16.msra.mxu0 0
  %1604 = vmatprep.subr.bf16.mxu0 0
  %1605 = vmatpush2.bf16.msra.mxu0 0
  %1606 = vmatprep.subr.bf16.mxu0 0
  %1607 = vmatpush2.bf16.msra.mxu0 0
  %1608 = vmatprep.subr.bf16.mxu0 0
  %1609 = vmatpush2.bf16.msra.mxu0 0
  %1610 = vmatprep.mubr.bf16.mxu0 0
  %1611 = vmatmul.mubr.bf16.gmra.mxu0 %v853
  %v1612 = vpop.f32.mrf.mxu0
  %v1613 = vadd.f32 0.0, %v1612
  %v1614 = vpop.f32.mrf.mxu0
  %v1615 = vpop.f32.mrf.mxu0
  %v1616 = vadd.f32 0.0, %v1615
  %v1617 = vpop.f32.mrf.mxu0
  %1618 = vmatprep.mubr.bf16.mxu0 0
  %1619 = vmatmul.mubr.bf16.gmra.mxu0 %v1026
  %v1620 = vpop.f32.mrf.mxu0
  %v1621 = vadd.f32 0.0, %v1620
  %v1622 = vpop.f32.mrf.mxu0
  %v1623 = vpop.f32.mrf.mxu0
  %v1624 = vadd.f32 0.0, %v1623
  %v1625 = vpop.f32.mrf.mxu0
  %1626 = vmatprep.mubr.bf16.mxu0 0
  %1627 = vmatmul.mubr.bf16.gmra.mxu0 %v1400
  %v1628 = vpop.f32.mrf.mxu0
  %v1629 = vadd.f32 0.0, %v1628
  %v1630 = vpop.f32.mrf.mxu0
  %v1631 = vpop.f32.mrf.mxu0
  %v1632 = vadd.f32 0.0, %v1631
  %v1633 = vpop.f32.mrf.mxu0
  %1634 = vmatprep.mubr.bf16.mxu0 0
  %1635 = vmatmul.mubr.bf16.gmra.mxu0 %v1573
  %v1636 = vpop.f32.mrf.mxu0
  %v1637 = vadd.f32 0.0, %v1636
  %v1638 = vpop.f32.mrf.mxu0
  %v1639 = vpop.f32.mrf.mxu0
  %v1640 = vadd.f32 0.0, %v1639
  %v1641 = vpop.f32.mrf.mxu0
  %1642 = vmatprep.mubr.bf16.mxu0 0
  %1643 = vmatmul.mubr.bf16.gmra.mxu0 %v856
  %v1644 = vpop.f32.mrf.mxu0
  %v1645 = vadd.f32 0.0, %v1644
  %v1646 = vpop.f32.mrf.mxu0
  %v1647 = vpop.f32.mrf.mxu0
  %v1648 = vadd.f32 0.0, %v1647
  %v1649 = vpop.f32.mrf.mxu0
  %1650 = vmatprep.mubr.bf16.mxu0 0
  %1651 = vmatmul.mubr.bf16.gmra.mxu0 %v1029
  %v1652 = vpop.f32.mrf.mxu0
  %v1653 = vadd.f32 0.0, %v1652
  %v1654 = vpop.f32.mrf.mxu0
  %v1655 = vpop.f32.mrf.mxu0
  %v1656 = vadd.f32 0.0, %v1655
  %v1657 = vpop.f32.mrf.mxu0
  %1658 = vmatprep.mubr.bf16.mxu0 0
  %1659 = vmatmul.mubr.bf16.gmra.mxu0 %v1403
  %v1660 = vpop.f32.mrf.mxu0
  %v1661 = vadd.f32 0.0, %v1660
  %v1662 = vpop.f32.mrf.mxu0
  %v1663 = vpop.f32.mrf.mxu0
  %v1664 = vadd.f32 0.0, %v1663
  %v1665 = vpop.f32.mrf.mxu0
  %1666 = vmatprep.mubr.bf16.mxu0 0
  %1667 = vmatmul.mubr.bf16.gmra.mxu0 %v1576
  %v1668 = vpop.f32.mrf.mxu0
  %v1669 = vadd.f32 0.0, %v1668
  %v1670 = vpop.f32.mrf.mxu0
  %v1671 = vpop.f32.mrf.mxu0
  %v1672 = vadd.f32 0.0, %v1671
  %v1673 = vpop.f32.mrf.mxu0
  %1674 = vdwg.mxu0
  %v1675 = vadd.f32 %v1502, %v1613
  %v1676 = vadd.f32 %v1503, %v1616
  %v1677 = vadd.f32 %v1504, %v1621
  %v1678 = vadd.f32 %v1505, %v1624
  %v1679 = vadd.f32 %v1506, %v1629
  %v1680 = vadd.f32 %v1507, %v1632
  %v1681 = vadd.f32 %v1508, %v1637
  %v1682 = vadd.f32 %v1509, %v1640
  %v1683 = vadd.f32 %v1510, %v1645
  %v1684 = vadd.f32 %v1511, %v1648
  %v1685 = vadd.f32 %v1512, %v1653
  %v1686 = vadd.f32 %v1513, %v1656
  %v1687 = vadd.f32 %v1514, %v1661
  %v1688 = vadd.f32 %v1515, %v1664
  %v1689 = vadd.f32 %v1516, %v1669
  %v1690 = vadd.f32 %v1517, %v1672
  %1691 = vst [vmem:[%s2] sm:$0xff] %v1675
  %1692 = vst [vmem:[%s2 + $0x8] sm:$0xff] %v1676
  %1693 = vst [vmem:[%s2 + $0x10] sm:$0xff] %v1677
  %1694 = vst [vmem:[%s2 + $0x18] sm:$0xff] %v1678
  %1695 = vst [vmem:[%s2 + $0x20] sm:$0xff] %v1679
  %1696 = vst [vmem:[%s2 + $0x28] sm:$0xff] %v1680
  %1697 = vst [vmem:[%s2 + $0x30] sm:$0xff] %v1681
  %1698 = vst [vmem:[%s2 + $0x38] sm:$0xff] %v1682
  %1699 = vst [vmem:[%s2 + $0x40] sm:$0xff] %v1683
  %1700 = vst [vmem:[%s2 + $0x48] sm:$0xff] %v1684
  %1701 = vst [vmem:[%s2 + $0x50] sm:$0xff] %v1685
  %1702 = vst [vmem:[%s2 + $0x58] sm:$0xff] %v1686
  %1703 = vst [vmem:[%s2 + $0x60] sm:$0xff] %v1687
  %1704 = vst [vmem:[%s2 + $0x68] sm:$0xff] %v1688
  %1705 = vst [vmem:[%s2 + $0x70] sm:$0xff] %v1689
  %1706 = vst [vmem:[%s2 + $0x78] sm:$0xff] %v1690
  %v1707 = vadd.f32 %v1675, %v1676
  %v1708 = vadd.f32 %v1707, %v1677
  %v1709 = vadd.f32 %v1708, %v1678
  %v1710 = vadd.f32 %v1709, %v1679
  %v1711 = vadd.f32 %v1710, %v1680
  %v1712 = vadd.f32 %v1711, %v1681
  %v1713 = vadd.f32 %v1712, %v1682
  %v1714 = vadd.f32 %v1713, %v1683
  %v1715 = vadd.f32 %v1714, %v1684
  %v1716 = vadd.f32 %v1715, %v1685
  %v1717 = vadd.f32 %v1716, %v1686
  %v1718 = vadd.f32 %v1717, %v1687
  %v1719 = vadd.f32 %v1718, %v1688
  %v1720 = vadd.f32 %v1719, %v1689
  %v1721 = vadd.f32 %v1720, %v1690
  %v1722 = vrot.slane %v1721, 4
  %v1723 = vadd.f32 %v1721, %v1722
  %v1724 = vrot.slane %v1723, 2
  %v1725 = vadd.f32 %v1723, %v1724
  %v1726 = vrot.slane %v1725, 1
  %v1727 = vadd.f32 %v1725, %v1726
  %v1728 = vmul.f32 %v1675, %v1675
  %v1729 = vmul.f32 %v1676, %v1676
  %v1730 = vmul.f32 %v1677, %v1677
  %v1731 = vmul.f32 %v1678, %v1678
  %v1732 = vmul.f32 %v1679, %v1679
  %v1733 = vmul.f32 %v1680, %v1680
  %v1734 = vmul.f32 %v1681, %v1681
  %v1735 = vmul.f32 %v1682, %v1682
  %v1736 = vmul.f32 %v1683, %v1683
  %v1737 = vmul.f32 %v1684, %v1684
  %v1738 = vmul.f32 %v1685, %v1685
  %v1739 = vmul.f32 %v1686, %v1686
  %v1740 = vmul.f32 %v1687, %v1687
  %v1741 = vmul.f32 %v1688, %v1688
  %v1742 = vmul.f32 %v1689, %v1689
  %v1743 = vmul.f32 %v1690, %v1690
  %v1744 = vadd.f32 %v1728, %v1729
  %v1745 = vadd.f32 %v1744, %v1730
  %v1746 = vadd.f32 %v1745, %v1731
  %v1747 = vadd.f32 %v1746, %v1732
  %v1748 = vadd.f32 %v1747, %v1733
  %v1749 = vadd.f32 %v1748, %v1734
  %v1750 = vadd.f32 %v1749, %v1735
  %v1751 = vadd.f32 %v1750, %v1736
  %v1752 = vadd.f32 %v1751, %v1737
  %v1753 = vadd.f32 %v1752, %v1738
  %v1754 = vadd.f32 %v1753, %v1739
  %v1755 = vadd.f32 %v1754, %v1740
  %v1756 = vadd.f32 %v1755, %v1741
  %v1757 = vadd.f32 %v1756, %v1742
  %v1758 = vadd.f32 %v1757, %v1743
  %v1759 = vrot.slane %v1758, 4
  %v1760 = vadd.f32 %v1758, %v1759
  %v1761 = vrot.slane %v1760, 2
  %v1762 = vadd.f32 %v1760, %v1761
  %v1763 = vrot.slane %v1762, 1
  %v1764 = vadd.f32 %v1762, %v1763
  %vm1765 = vcmask 1040384
  %v1766 = vsel %vm1765, %v1727, %v1764
  %1767 = vst [vmem:[%s3] sm:$0x3] %v1766
  // Predicated region
  $region10: #{conv_etal_forward.8} parent=0 // pred_check
    _
  $region11: #{conv_etal_forward.8} parent=0 // pred_check_branch
    %1769 = sbr.rel (0) target = $region13
  $region12: #{conv_etal_forward.8} parent=0 // pred_region
    _
  $region13: #{conv_etal_forward.8} parent=0 // pred_fallthru
    _
  // Predicated region
  $region14: #{conv_etal_forward.8} parent=0 // pred_check
    _
  $region15: #{conv_etal_forward.8} parent=0 // pred_check_branch
    %1771 = sbr.rel (0) target = $region17
  $region16: #{conv_etal_forward.8} parent=0 // pred_region
    _
  $region17: #{conv_etal_forward.8} parent=0 // pred_fallthru
    _
  // Predicated region
  $region18: #{conv_etal_forward.8} parent=0 // pred_check
    _
  $region19: #{conv_etal_forward.8} parent=0 // pred_check_branch
    %1773 = sbr.rel (0) target = $region21
  $region20: #{conv_etal_forward.8} parent=0 // pred_region
    _
  $region21: #{conv_etal_forward.8} parent=0 // pred_fallthru
    _
  // Predicated region
  $region22: #{conv_etal_forward.8} parent=0 // pred_check
    _
  $region23: #{conv_etal_forward.8} parent=0 // pred_check_branch
    %1775 = sbr.rel (0) target = $region25
  $region24: #{conv_etal_forward.8} parent=0 // pred_region
    _
  $region25: #{conv_etal_forward.8} parent=0 // pred_fallthru
    _

// kernel: conv_etal_forward.11
$region0: #{conv_etal_forward.11}
  #allocation0 [shape = 'u32[]', space=smem, size = 0x4, offset = 0x4, fixed_abs, tag = 'smem constant byte address 0x4 - core index']
  #allocation1 [shape = 'u32[144,128]{1,0:T(1,128)}', space=vmem, size = 0x12000, scoped, tag = 'internal scratch']
  %s0 = inlined_call_operand.vmem [shape: f32[2,4,4,256], index: 0, kind: input, shape index: {}]
  %s1 = inlined_call_operand.vmem [shape: f32[1,256], index: 1, kind: input, shape index: {}]
  %s2 = inlined_call_operand.vmem [shape: f32[1,256], index: 2, kind: input, shape index: {}]
  %s3 = inlined_call_operand.vmem [shape: f32[2,4,256], index: 3, kind: output, shape index: {}]
  %s4 = sld [smem:[#allocation0]]
  $region22: #{conv_etal_forward.11} parent=0
    _
  %s6 = ssub.s32 1, %s4
  %s7 = scalar_select 0, %s6, %s4
  // Predicated region
  $region2: #{conv_etal_forward.11} parent=0 // pred_check
    _
  $region3: #{conv_etal_forward.11} parent=0 // pred_check_branch
    %9 = sbr.rel (0) target = $region5
  $region4: #{conv_etal_forward.11} parent=0 // pred_region
    _
  $region5: #{conv_etal_forward.11} parent=0 // pred_fallthru
    _
  // Predicated region
  $region6: #{conv_etal_forward.11} parent=0 // pred_check
    _
  $region7: #{conv_etal_forward.11} parent=0 // pred_check_branch
    %11 = sbr.rel (0) target = $region9
  $region8: #{conv_etal_forward.11} parent=0 // pred_region
    _
  $region9: #{conv_etal_forward.11} parent=0 // pred_fallthru
    _
  // Predicated region
  $region10: #{conv_etal_forward.11} parent=0 // pred_check
    _
  $region11: #{conv_etal_forward.11} parent=0 // pred_check_branch
    %13 = sbr.rel (0) target = $region13
  $region12: #{conv_etal_forward.11} parent=0 // pred_region
    _
  $region13: #{conv_etal_forward.11} parent=0 // pred_fallthru
    _
  %v14 = vld [vmem:[%s0] sm:$0xff]
  %v15 = vld [vmem:[%s0 + $0x8] sm:$0xff]
  %v16 = vld [vmem:[%s0 + $0x10] sm:$0xff]
  %v17 = vld [vmem:[%s0 + $0x18] sm:$0xff]
  %v18 = vld [vmem:[%s0 + $0x20] sm:$0xff]
  %v19 = vld [vmem:[%s0 + $0x28] sm:$0xff]
  %v20 = vld [vmem:[%s0 + $0x30] sm:$0xff]
  %v21 = vld [vmem:[%s0 + $0x38] sm:$0xff]
  %v22 = vld [vmem:[%s1] sm:$0x3]
  %v24 = vlaneseq
  %v25 = vshrl.u32 %v24, 7
  %v26 = vsub.s32 0, %v25
  %v27 = vrot.slane %v22, %v26
  %v28 = vlaneseq
  %v29 = vshrl.u32 %v28, 7
  %v30 = vsub.s32 1, %v29
  %v31 = vrot.slane %v22, %v30
  %v32 = vcombine.low %v27, %v31
  %v34 = vmul.f32 %v14, %v32
  %v35 = vmul.f32 %v15, %v32
  %v36 = vmul.f32 %v16, %v32
  %v37 = vmul.f32 %v17, %v32
  %v38 = vmul.f32 %v18, %v32
  %v39 = vmul.f32 %v19, %v32
  %v40 = vmul.f32 %v20, %v32
  %v41 = vmul.f32 %v21, %v32
  %v42 = vld [vmem:[%s2] sm:$0x3]
  %v44 = vlaneseq
  %v45 = vshrl.u32 %v44, 7
  %v46 = vsub.s32 0, %v45
  %v47 = vrot.slane %v42, %v46
  %v48 = vlaneseq
  %v49 = vshrl.u32 %v48, 7
  %v50 = vsub.s32 1, %v49
  %v51 = vrot.slane %v42, %v50
  %v52 = vcombine.low %v47, %v51
  %v54 = vadd.f32 %v34, %v52
  %v55 = vadd.f32 %v35, %v52
  %v56 = vadd.f32 %v36, %v52
  %v57 = vadd.f32 %v37, %v52
  %v58 = vadd.f32 %v38, %v52
  %v59 = vadd.f32 %v39, %v52
  %v60 = vadd.f32 %v40, %v52
  %v61 = vadd.f32 %v41, %v52
  %v62 = vmax.f32 %v54, 0.0
  %v63 = vmax.f32 %v55, 0.0
  %v64 = vmax.f32 %v56, 0.0
  %v65 = vmax.f32 %v57, 0.0
  %v66 = vmax.f32 %v58, 0.0
  %v67 = vmax.f32 %v59, 0.0
  %v68 = vmax.f32 %v60, 0.0
  %v69 = vmax.f32 %v61, 0.0
  %v70 = vmax.f32 %v62, %v64
  %v71 = vmax.f32 %v63, %v65
  %v72 = vmax.f32 %v70, %v71
  %v73 = vmax.f32 %v66, %v68
  %v74 = vmax.f32 %v67, %v69
  %v75 = vmax.f32 %v73, %v74
  %76 = vst [vmem:[%s3] sm:$0xff] %v72
  %77 = vst [vmem:[%s3 + $0x8] sm:$0xff] %v75
  // Predicated region
  $region14: #{conv_etal_forward.11} parent=0 // pred_check
    _
  $region15: #{conv_etal_forward.11} parent=0 // pred_check_branch
    %79 = sbr.rel (0) target = $region17
  $region16: #{conv_etal_forward.11} parent=0 // pred_region
    _
  $region17: #{conv_etal_forward.11} parent=0 // pred_fallthru
    _
  // Predicated region
  $region18: #{conv_etal_forward.11} parent=0 // pred_check
    _
  $region19: #{conv_etal_forward.11} parent=0 // pred_check_branch
    %81 = sbr.rel (0) target = $region21
  $region20: #{conv_etal_forward.11} parent=0 // pred_region
    _
  $region21: #{conv_etal_forward.11} parent=0 // pred_fallthru
    _

// kernel: conv_etal_forward.10
$region0: #{conv_etal_forward.10}
  #allocation0 [shape = 'u32[]', space=smem, size = 0x4, offset = 0x4, fixed_abs, tag = 'smem constant byte address 0x4 - core index']
  #allocation1 [shape = 'u32[144,128]{1,0:T(1,128)}', space=vmem, size = 0x12000, scoped, tag = 'internal scratch']
  %s0 = inlined_call_operand.vmem [shape: bf16[2,8,6,128], index: 0, kind: input, shape index: {}]
  %s1 = inlined_call_operand.vmem [shape: bf16[1152,256], index: 1, kind: input, shape index: {}]
  %s2 = inlined_call_operand.vmem [shape: f32[2,4,4,256], index: 2, kind: output, shape index: {0}]
  %s3 = inlined_call_operand.vmem [shape: f32[1,2,256], index: 3, kind: output, shape index: {1}]
  %4 = xla_tuple %s2, %s3
  %s5 = sld [smem:[#allocation0]]
  $region26: #{conv_etal_forward.10} parent=0
    _
  %s7 = ssub.s32 1, %s5
  %s8 = scalar_select 0, %s7, %s5
  // Predicated region
  $region2: #{conv_etal_forward.10} parent=0 // pred_check
    _
  $region3: #{conv_etal_forward.10} parent=0 // pred_check_branch
    %10 = sbr.rel (0) target = $region5
  $region4: #{conv_etal_forward.10} parent=0 // pred_region
    _
  $region5: #{conv_etal_forward.10} parent=0 // pred_fallthru
    _
  // Predicated region
  $region6: #{conv_etal_forward.10} parent=0 // pred_check
    _
  $region7: #{conv_etal_forward.10} parent=0 // pred_check_branch
    %12 = sbr.rel (0) target = $region9
  $region8: #{conv_etal_forward.10} parent=0 // pred_region
    _
  $region9: #{conv_etal_forward.10} parent=0 // pred_fallthru
    _
  %v14 = vld [vmem:[%s0] sm:$0x7]
  %v15 = vld [vmem:[%s0 + $0x4] sm:$0x7]
  %v16 = vld [vmem:[%s0 + $0x8] sm:$0x7]
  %v17 = vld [vmem:[%s0 + $0xc] sm:$0x7]
  %v18 = vld [vmem:[%s0 + $0x10] sm:$0x7]
  %v19 = vld [vmem:[%s0 + $0x14] sm:$0x7]
  %v20 = vld [vmem:[%s0 + $0x18] sm:$0x7]
  %v21 = vld [vmem:[%s0 + $0x1c] sm:$0x7]
  %v22 = vld [vmem:[%s0 + $0x20] sm:$0x7]
  %v23 = vld [vmem:[%s0 + $0x24] sm:$0x7]
  %v24 = vld [vmem:[%s0 + $0x28] sm:$0x7]
  %v25 = vld [vmem:[%s0 + $0x2c] sm:$0x7]
  %v26 = vld [vmem:[%s0 + $0x30] sm:$0x7]
  %v27 = vld [vmem:[%s0 + $0x34] sm:$0x7]
  %v28 = vld [vmem:[%s0 + $0x38] sm:$0x7]
  %v29 = vld [vmem:[%s0 + $0x3c] sm:$0x7]
  %v30 = vld [vmem:[%s1] sm:$0xff]
  %v31 = vld [vmem:[%s1 + $0x8] sm:$0xff]
  %v32 = vld [vmem:[%s1 + $0x10] sm:$0xff]
  %v33 = vld [vmem:[%s1 + $0x18] sm:$0xff]
  %v34 = vld [vmem:[%s1 + $0x20] sm:$0xff]
  %v35 = vld [vmem:[%s1 + $0x28] sm:$0xff]
  %v36 = vld [vmem:[%s1 + $0x30] sm:$0xff]
  %v37 = vld [vmem:[%s1 + $0x38] sm:$0xff]
  %v38 = vld [vmem:[%s1 + $0x40] sm:$0xff]
  %v39 = vld [vmem:[%s1 + $0x48] sm:$0xff]
  %v40 = vld [vmem:[%s1 + $0x50] sm:$0xff]
  %v41 = vld [vmem:[%s1 + $0x58] sm:$0xff]
  %v42 = vld [vmem:[%s1 + $0x60] sm:$0xff]
  %v43 = vld [vmem:[%s1 + $0x68] sm:$0xff]
  %v44 = vld [vmem:[%s1 + $0x70] sm:$0xff]
  %v45 = vld [vmem:[%s1 + $0x78] sm:$0xff]
  %v46 = vld [vmem:[%s1 + $0x80] sm:$0xff]
  %v47 = vld [vmem:[%s1 + $0x88] sm:$0xff]
  %v48 = vld [vmem:[%s1 + $0x90] sm:$0xff]
  %v49 = vld [vmem:[%s1 + $0x98] sm:$0xff]
  %v50 = vld [vmem:[%s1 + $0xa0] sm:$0xff]
  %v51 = vld [vmem:[%s1 + $0xa8] sm:$0xff]
  %v52 = vld [vmem:[%s1 + $0xb0] sm:$0xff]
  %v53 = vld [vmem:[%s1 + $0xb8] sm:$0xff]
  %v54 = vld [vmem:[%s1 + $0xc0] sm:$0xff]
  %v55 = vld [vmem:[%s1 + $0xc8] sm:$0xff]
  %v56 = vld [vmem:[%s1 + $0xd0] sm:$0xff]
  %v57 = vld [vmem:[%s1 + $0xd8] sm:$0xff]
  %v58 = vld [vmem:[%s1 + $0xe0] sm:$0xff]
  %v59 = vld [vmem:[%s1 + $0xe8] sm:$0xff]
  %v60 = vld [vmem:[%s1 + $0xf0] sm:$0xff]
  %v61 = vld [vmem:[%s1 + $0xf8] sm:$0xff]
  %v70 = vcombine.low %v16, %v15
  %v71 = vcombine.low %v20, %v19
  %v73 = vunpack.c.l.s4 1983009808
  %v74 = vunpack.c.0.s8 %v73
  %v75 = vlaneseq
  %v76 = vshrl.u32 %v75, 7
  %v77 = vsub.s32 %v74, %v76
  %v78 = vrot.slane %v70, %v77
  %v80 = vunpack.c.l.s4 1983009808
  %v81 = vunpack.c.0.s8 %v80
  %v82 = vlaneseq
  %v83 = vshrl.u32 %v82, 7
  %v84 = vsub.s32 %v81, %v83
  %v85 = vrot.slane %v71, %v84
  %v86 = vcombine.low %v78, %v85
  %v87 = vcombine.low %v24, %v23
  %v88 = vcombine.low %v28, %v27
  %v90 = vunpack.c.l.s4 1983009808
  %v91 = vunpack.c.0.s8 %v90
  %v92 = vlaneseq
  %v93 = vshrl.u32 %v92, 7
  %v94 = vsub.s32 %v91, %v93
  %v95 = vrot.slane %v87, %v94
  %v97 = vunpack.c.l.s4 1983009808
  %v98 = vunpack.c.0.s8 %v97
  %v99 = vlaneseq
  %v100 = vshrl.u32 %v99, 7
  %v101 = vsub.s32 %v98, %v100
  %v102 = vrot.slane %v88, %v101
  %v103 = vcombine.low %v95, %v102
  %v122 = vunpack.c.l.b16 %v46
  %v123 = vunpack.c.h.b16 %v46
  %v124 = vunpack.c.l.b16 %v47
  %v125 = vunpack.c.h.b16 %v47
  %v126 = vunpack.c.l.b16 %v48
  %v127 = vunpack.c.h.b16 %v48
  %v128 = vunpack.c.l.b16 %v49
  %v129 = vunpack.c.h.b16 %v49
  %v130 = vunpack.c.l.b16 %v50
  %v131 = vunpack.c.h.b16 %v50
  %v132 = vunpack.c.l.b16 %v51
  %v133 = vunpack.c.h.b16 %v51
  %v134 = vunpack.c.l.b16 %v52
  %v135 = vunpack.c.h.b16 %v52
  %v136 = vunpack.c.l.b16 %v53
  %v137 = vunpack.c.h.b16 %v53
  %v138 = vunpack.c.l.b16 %v54
  %v139 = vunpack.c.h.b16 %v54
  %v140 = vunpack.c.l.b16 %v55
  %v141 = vunpack.c.h.b16 %v55
  %v142 = vunpack.c.l.b16 %v56
  %v143 = vunpack.c.h.b16 %v56
  %v144 = vunpack.c.l.b16 %v57
  %v145 = vunpack.c.h.b16 %v57
  %v146 = vunpack.c.l.b16 %v58
  %v147 = vunpack.c.h.b16 %v58
  %v148 = vunpack.c.l.b16 %v59
  %v149 = vunpack.c.h.b16 %v59
  %v150 = vunpack.c.l.b16 %v60
  %v151 = vunpack.c.h.b16 %v60
  %v152 = vunpack.c.l.b16 %v61
  %v153 = vunpack.c.h.b16 %v61
  %v154 = vpack.c.b16 %v124, %v122
  %v155 = vpack.c.b16 %v125, %v123
  %v156 = vpack.c.b16 %v128, %v126
  %v157 = vpack.c.b16 %v129, %v127
  %v158 = vpack.c.b16 %v132, %v130
  %v159 = vpack.c.b16 %v133, %v131
  %v160 = vpack.c.b16 %v136, %v134
  %v161 = vpack.c.b16 %v137, %v135
  %v162 = vpack.c.b16 %v140, %v138
  %v163 = vpack.c.b16 %v141, %v139
  %v164 = vpack.c.b16 %v144, %v142
  %v165 = vpack.c.b16 %v145, %v143
  %v166 = vpack.c.b16 %v148, %v146
  %v167 = vpack.c.b16 %v149, %v147
  %v168 = vpack.c.b16 %v152, %v150
  %v169 = vpack.c.b16 %v153, %v151
  %186 = vmatprep.subr.bf16.mxu0 %v169
  %187 = vmatpush1.bf16.msra.mxu0 %v168
  %188 = vmatprep.subr.bf16.mxu0 %v167
  %189 = vmatpush1.bf16.msra.mxu0 %v166
  %190 = vmatprep.subr.bf16.mxu0 %v165
  %191 = vmatpush1.bf16.msra.mxu0 %v164
  %192 = vmatprep.subr.bf16.mxu0 %v163
  %193 = vmatpush1.bf16.msra.mxu0 %v162
  %194 = vmatprep.subr.bf16.mxu0 %v161
  %195 = vmatpush1.bf16.msra.mxu0 %v160
  %196 = vmatprep.subr.bf16.mxu0 %v159
  %197 = vmatpush1.bf16.msra.mxu0 %v158
  %198 = vmatprep.subr.bf16.mxu0 %v157
  %199 = vmatpush1.bf16.msra.mxu0 %v156
  %200 = vmatprep.subr.bf16.mxu0 %v155
  %201 = vmatpush1.bf16.msra.mxu0 %v154
  %202 = vmatprep.subr.bf16.mxu0 0
  %203 = vmatpush2.bf16.msra.mxu0 0
  %204 = vmatprep.subr.bf16.mxu0 0
  %205 = vmatpush2.bf16.msra.mxu0 0
  %206 = vmatprep.subr.bf16.mxu0 0
  %207 = vmatpush2.bf16.msra.mxu0 0
  %208 = vmatprep.subr.bf16.mxu0 0
  %209 = vmatpush2.bf16.msra.mxu0 0
  %210 = vmatprep.subr.bf16.mxu0 0
  %211 = vmatpush2.bf16.msra.mxu0 0
  %212 = vmatprep.subr.bf16.mxu0 0
  %213 = vmatpush2.bf16.msra.mxu0 0
  %214 = vmatprep.subr.bf16.mxu0 0
  %215 = vmatpush2.bf16.msra.mxu0 0
  %216 = vmatprep.subr.bf16.mxu0 0
  %217 = vmatpush2.bf16.msra.mxu0 0
  %218 = vmatprep.mubr.bf16.mxu0 0
  %219 = vmatmul.mubr.bf16.gmra.mxu0 %v86
  %v220 = vpop.f32.mrf.mxu0
  %v221 = vadd.f32 0.0, %v220
  %v222 = vpop.f32.mrf.mxu0
  %v223 = vadd.f32 0.0, %v222
  %v224 = vpop.f32.mrf.mxu0
  %v225 = vadd.f32 0.0, %v224
  %v226 = vpop.f32.mrf.mxu0
  %v227 = vadd.f32 0.0, %v226
  %228 = vmatprep.mubr.bf16.mxu0 0
  %229 = vmatmul.mubr.bf16.gmra.mxu0 %v103
  %v230 = vpop.f32.mrf.mxu0
  %v231 = vadd.f32 0.0, %v230
  %v232 = vpop.f32.mrf.mxu0
  %v233 = vadd.f32 0.0, %v232
  %v234 = vpop.f32.mrf.mxu0
  %v235 = vadd.f32 0.0, %v234
  %v236 = vpop.f32.mrf.mxu0
  %v237 = vadd.f32 0.0, %v236
  %238 = vdwg.mxu0
  %v243 = vcombine.low %v14, %v16
  %v244 = vcombine.low %v18, %v20
  %v246 = vunpack.c.l.s4 1983009808
  %v247 = vunpack.c.0.s8 %v246
  %v248 = vlaneseq
  %v249 = vshrl.u32 %v248, 7
  %v250 = vsub.s32 %v247, %v249
  %v251 = vrot.slane %v243, %v250
  %v253 = vunpack.c.l.s4 1983009808
  %v254 = vunpack.c.0.s8 %v253
  %v255 = vlaneseq
  %v256 = vshrl.u32 %v255, 7
  %v257 = vsub.s32 %v254, %v256
  %v258 = vrot.slane %v244, %v257
  %v259 = vcombine.low %v251, %v258
  %v260 = vcombine.low %v22, %v24
  %v261 = vcombine.low %v26, %v28
  %v263 = vunpack.c.l.s4 1983009808
  %v264 = vunpack.c.0.s8 %v263
  %v265 = vlaneseq
  %v266 = vshrl.u32 %v265, 7
  %v267 = vsub.s32 %v264, %v266
  %v268 = vrot.slane %v260, %v267
  %v270 = vunpack.c.l.s4 1983009808
  %v271 = vunpack.c.0.s8 %v270
  %v272 = vlaneseq
  %v273 = vshrl.u32 %v272, 7
  %v274 = vsub.s32 %v271, %v273
  %v275 = vrot.slane %v261, %v274
  %v276 = vcombine.low %v268, %v275
  %v295 = vunpack.c.l.b16 %v30
  %v296 = vunpack.c.h.b16 %v30
  %v297 = vunpack.c.l.b16 %v31
  %v298 = vunpack.c.h.b16 %v31
  %v299 = vunpack.c.l.b16 %v32
  %v300 = vunpack.c.h.b16 %v32
  %v301 = vunpack.c.l.b16 %v33
  %v302 = vunpack.c.h.b16 %v33
  %v303 = vunpack.c.l.b16 %v34
  %v304 = vunpack.c.h.b16 %v34
  %v305 = vunpack.c.l.b16 %v35
  %v306 = vunpack.c.h.b16 %v35
  %v307 = vunpack.c.l.b16 %v36
  %v308 = vunpack.c.h.b16 %v36
  %v309 = vunpack.c.l.b16 %v37
  %v310 = vunpack.c.h.b16 %v37
  %v311 = vunpack.c.l.b16 %v38
  %v312 = vunpack.c.h.b16 %v38
  %v313 = vunpack.c.l.b16 %v39
  %v314 = vunpack.c.h.b16 %v39
  %v315 = vunpack.c.l.b16 %v40
  %v316 = vunpack.c.h.b16 %v40
  %v317 = vunpack.c.l.b16 %v41
  %v318 = vunpack.c.h.b16 %v41
  %v319 = vunpack.c.l.b16 %v42
  %v320 = vunpack.c.h.b16 %v42
  %v321 = vunpack.c.l.b16 %v43
  %v322 = vunpack.c.h.b16 %v43
  %v323 = vunpack.c.l.b16 %v44
  %v324 = vunpack.c.h.b16 %v44
  %v325 = vunpack.c.l.b16 %v45
  %v326 = vunpack.c.h.b16 %v45
  %v327 = vpack.c.b16 %v297, %v295
  %v328 = vpack.c.b16 %v298, %v296
  %v329 = vpack.c.b16 %v301, %v299
  %v330 = vpack.c.b16 %v302, %v300
  %v331 = vpack.c.b16 %v305, %v303
  %v332 = vpack.c.b16 %v306, %v304
  %v333 = vpack.c.b16 %v309, %v307
  %v334 = vpack.c.b16 %v310, %v308
  %v335 = vpack.c.b16 %v313, %v311
  %v336 = vpack.c.b16 %v314, %v312
  %v337 = vpack.c.b16 %v317, %v315
  %v338 = vpack.c.b16 %v318, %v316
  %v339 = vpack.c.b16 %v321, %v319
  %v340 = vpack.c.b16 %v322, %v320
  %v341 = vpack.c.b16 %v325, %v323
  %v342 = vpack.c.b16 %v326, %v324
  %359 = vmatprep.subr.bf16.mxu0 %v342
  %360 = vmatpush1.bf16.msra.mxu0 %v341
  %361 = vmatprep.subr.bf16.mxu0 %v340
  %362 = vmatpush1.bf16.msra.mxu0 %v339
  %363 = vmatprep.subr.bf16.mxu0 %v338
  %364 = vmatpush1.bf16.msra.mxu0 %v337
  %365 = vmatprep.subr.bf16.mxu0 %v336
  %366 = vmatpush1.bf16.msra.mxu0 %v335
  %367 = vmatprep.subr.bf16.mxu0 %v334
  %368 = vmatpush1.bf16.msra.mxu0 %v333
  %369 = vmatprep.subr.bf16.mxu0 %v332
  %370 = vmatpush1.bf16.msra.mxu0 %v331
  %371 = vmatprep.subr.bf16.mxu0 %v330
  %372 = vmatpush1.bf16.msra.mxu0 %v329
  %373 = vmatprep.subr.bf16.mxu0 %v328
  %374 = vmatpush1.bf16.msra.mxu0 %v327
  %375 = vmatprep.subr.bf16.mxu0 0
  %376 = vmatpush2.bf16.msra.mxu0 0
  %377 = vmatprep.subr.bf16.mxu0 0
  %378 = vmatpush2.bf16.msra.mxu0 0
  %379 = vmatprep.subr.bf16.mxu0 0
  %380 = vmatpush2.bf16.msra.mxu0 0
  %381 = vmatprep.subr.bf16.mxu0 0
  %382 = vmatpush2.bf16.msra.mxu0 0
  %383 = vmatprep.subr.bf16.mxu0 0
  %384 = vmatpush2.bf16.msra.mxu0 0
  %385 = vmatprep.subr.bf16.mxu0 0
  %386 = vmatpush2.bf16.msra.mxu0 0
  %387 = vmatprep.subr.bf16.mxu0 0
  %388 = vmatpush2.bf16.msra.mxu0 0
  %389 = vmatprep.subr.bf16.mxu0 0
  %390 = vmatpush2.bf16.msra.mxu0 0
  %391 = vmatprep.mubr.bf16.mxu0 0
  %392 = vmatmul.mubr.bf16.gmra.mxu0 %v259
  %v393 = vpop.f32.mrf.mxu0
  %v394 = vadd.f32 %v221, %v393
  %v395 = vpop.f32.mrf.mxu0
  %v396 = vadd.f32 %v223, %v395
  %v397 = vpop.f32.mrf.mxu0
  %v398 = vadd.f32 %v225, %v397
  %v399 = vpop.f32.mrf.mxu0
  %v400 = vadd.f32 %v227, %v399
  %401 = vmatprep.mubr.bf16.mxu0 0
  %402 = vmatmul.mubr.bf16.gmra.mxu0 %v276
  %v403 = vpop.f32.mrf.mxu0
  %v404 = vadd.f32 %v231, %v403
  %v405 = vpop.f32.mrf.mxu0
  %v406 = vadd.f32 %v233, %v405
  %v407 = vpop.f32.mrf.mxu0
  %v408 = vadd.f32 %v235, %v407
  %v409 = vpop.f32.mrf.mxu0
  %v410 = vadd.f32 %v237, %v409
  %411 = vdwg.mxu0
  %v412 = vld [vmem:[%s1 + $0x100] sm:$0xff]
  %v413 = vld [vmem:[%s1 + $0x108] sm:$0xff]
  %v414 = vld [vmem:[%s1 + $0x110] sm:$0xff]
  %v415 = vld [vmem:[%s1 + $0x118] sm:$0xff]
  %v416 = vld [vmem:[%s1 + $0x120] sm:$0xff]
  %v417 = vld [vmem:[%s1 + $0x128] sm:$0xff]
  %v418 = vld [vmem:[%s1 + $0x130] sm:$0xff]
  %v419 = vld [vmem:[%s1 + $0x138] sm:$0xff]
  %v420 = vld [vmem:[%s1 + $0x140] sm:$0xff]
  %v421 = vld [vmem:[%s1 + $0x148] sm:$0xff]
  %v422 = vld [vmem:[%s1 + $0x150] sm:$0xff]
  %v423 = vld [vmem:[%s1 + $0x158] sm:$0xff]
  %v424 = vld [vmem:[%s1 + $0x160] sm:$0xff]
  %v425 = vld [vmem:[%s1 + $0x168] sm:$0xff]
  %v426 = vld [vmem:[%s1 + $0x170] sm:$0xff]
  %v427 = vld [vmem:[%s1 + $0x178] sm:$0xff]
  %v432 = vcombine.low %v15, %v17
  %v433 = vcombine.low %v19, %v21
  %v435 = vunpack.c.l.s4 1983009808
  %v436 = vunpack.c.0.s8 %v435
  %v437 = vlaneseq
  %v438 = vshrl.u32 %v437, 7
  %v439 = vsub.s32 %v436, %v438
  %v440 = vrot.slane %v432, %v439
  %v442 = vunpack.c.l.s4 1983009808
  %v443 = vunpack.c.0.s8 %v442
  %v444 = vlaneseq
  %v445 = vshrl.u32 %v444, 7
  %v446 = vsub.s32 %v443, %v445
  %v447 = vrot.slane %v433, %v446
  %v448 = vcombine.low %v440, %v447
  %v449 = vcombine.low %v23, %v25
  %v450 = vcombine.low %v27, %v29
  %v452 = vunpack.c.l.s4 1983009808
  %v453 = vunpack.c.0.s8 %v452
  %v454 = vlaneseq
  %v455 = vshrl.u32 %v454, 7
  %v456 = vsub.s32 %v453, %v455
  %v457 = vrot.slane %v449, %v456
  %v459 = vunpack.c.l.s4 1983009808
  %v460 = vunpack.c.0.s8 %v459
  %v461 = vlaneseq
  %v462 = vshrl.u32 %v461, 7
  %v463 = vsub.s32 %v460, %v462
  %v464 = vrot.slane %v450, %v463
  %v465 = vcombine.low %v457, %v464
  %v484 = vunpack.c.l.b16 %v412
  %v485 = vunpack.c.h.b16 %v412
  %v486 = vunpack.c.l.b16 %v413
  %v487 = vunpack.c.h.b16 %v413
  %v488 = vunpack.c.l.b16 %v414
  %v489 = vunpack.c.h.b16 %v414
  %v490 = vunpack.c.l.b16 %v415
  %v491 = vunpack.c.h.b16 %v415
  %v492 = vunpack.c.l.b16 %v416
  %v493 = vunpack.c.h.b16 %v416
  %v494 = vunpack.c.l.b16 %v417
  %v495 = vunpack.c.h.b16 %v417
  %v496 = vunpack.c.l.b16 %v418
  %v497 = vunpack.c.h.b16 %v418
  %v498 = vunpack.c.l.b16 %v419
  %v499 = vunpack.c.h.b16 %v419
  %v500 = vunpack.c.l.b16 %v420
  %v501 = vunpack.c.h.b16 %v420
  %v502 = vunpack.c.l.b16 %v421
  %v503 = vunpack.c.h.b16 %v421
  %v504 = vunpack.c.l.b16 %v422
  %v505 = vunpack.c.h.b16 %v422
  %v506 = vunpack.c.l.b16 %v423
  %v507 = vunpack.c.h.b16 %v423
  %v508 = vunpack.c.l.b16 %v424
  %v509 = vunpack.c.h.b16 %v424
  %v510 = vunpack.c.l.b16 %v425
  %v511 = vunpack.c.h.b16 %v425
  %v512 = vunpack.c.l.b16 %v426
  %v513 = vunpack.c.h.b16 %v426
  %v514 = vunpack.c.l.b16 %v427
  %v515 = vunpack.c.h.b16 %v427
  %v516 = vpack.c.b16 %v486, %v484
  %v517 = vpack.c.b16 %v487, %v485
  %v518 = vpack.c.b16 %v490, %v488
  %v519 = vpack.c.b16 %v491, %v489
  %v520 = vpack.c.b16 %v494, %v492
  %v521 = vpack.c.b16 %v495, %v493
  %v522 = vpack.c.b16 %v498, %v496
  %v523 = vpack.c.b16 %v499, %v497
  %v524 = vpack.c.b16 %v502, %v500
  %v525 = vpack.c.b16 %v503, %v501
  %v526 = vpack.c.b16 %v506, %v504
  %v527 = vpack.c.b16 %v507, %v505
  %v528 = vpack.c.b16 %v510, %v508
  %v529 = vpack.c.b16 %v511, %v509
  %v530 = vpack.c.b16 %v514, %v512
  %v531 = vpack.c.b16 %v515, %v513
  %548 = vmatprep.subr.bf16.mxu0 %v531
  %549 = vmatpush1.bf16.msra.mxu0 %v530
  %550 = vmatprep.subr.bf16.mxu0 %v529
  %551 = vmatpush1.bf16.msra.mxu0 %v528
  %552 = vmatprep.subr.bf16.mxu0 %v527
  %553 = vmatpush1.bf16.msra.mxu0 %v526
  %554 = vmatprep.subr.bf16.mxu0 %v525
  %555 = vmatpush1.bf16.msra.mxu0 %v524
  %556 = vmatprep.subr.bf16.mxu0 %v523
  %557 = vmatpush1.bf16.msra.mxu0 %v522
  %558 = vmatprep.subr.bf16.mxu0 %v521
  %559 = vmatpush1.bf16.msra.mxu0 %v520
  %560 = vmatprep.subr.bf16.mxu0 %v519
  %561 = vmatpush1.bf16.msra.mxu0 %v518
  %562 = vmatprep.subr.bf16.mxu0 %v517
  %563 = vmatpush1.bf16.msra.mxu0 %v516
  %564 = vmatprep.subr.bf16.mxu0 0
  %565 = vmatpush2.bf16.msra.mxu0 0
  %566 = vmatprep.subr.bf16.mxu0 0
  %567 = vmatpush2.bf16.msra.mxu0 0
  %568 = vmatprep.subr.bf16.mxu0 0
  %569 = vmatpush2.bf16.msra.mxu0 0
  %570 = vmatprep.subr.bf16.mxu0 0
  %571 = vmatpush2.bf16.msra.mxu0 0
  %572 = vmatprep.subr.bf16.mxu0 0
  %573 = vmatpush2.bf16.msra.mxu0 0
  %574 = vmatprep.subr.bf16.mxu0 0
  %575 = vmatpush2.bf16.msra.mxu0 0
  %576 = vmatprep.subr.bf16.mxu0 0
  %577 = vmatpush2.bf16.msra.mxu0 0
  %578 = vmatprep.subr.bf16.mxu0 0
  %579 = vmatpush2.bf16.msra.mxu0 0
  %580 = vmatprep.mubr.bf16.mxu0 0
  %581 = vmatmul.mubr.bf16.gmra.mxu0 %v448
  %v582 = vpop.f32.mrf.mxu0
  %v583 = vadd.f32 0.0, %v582
  %v584 = vpop.f32.mrf.mxu0
  %v585 = vadd.f32 0.0, %v584
  %v586 = vpop.f32.mrf.mxu0
  %v587 = vadd.f32 0.0, %v586
  %v588 = vpop.f32.mrf.mxu0
  %v589 = vadd.f32 0.0, %v588
  %590 = vmatprep.mubr.bf16.mxu0 0
  %591 = vmatmul.mubr.bf16.gmra.mxu0 %v465
  %v592 = vpop.f32.mrf.mxu0
  %v593 = vadd.f32 0.0, %v592
  %v594 = vpop.f32.mrf.mxu0
  %v595 = vadd.f32 0.0, %v594
  %v596 = vpop.f32.mrf.mxu0
  %v597 = vadd.f32 0.0, %v596
  %v598 = vpop.f32.mrf.mxu0
  %v599 = vadd.f32 0.0, %v598
  %600 = vdwg.mxu0
  %v601 = vadd.f32 %v394, %v583
  %v602 = vadd.f32 %v396, %v585
  %v603 = vadd.f32 %v398, %v587
  %v604 = vadd.f32 %v400, %v589
  %v605 = vadd.f32 %v404, %v593
  %v606 = vadd.f32 %v406, %v595
  %v607 = vadd.f32 %v408, %v597
  %v608 = vadd.f32 %v410, %v599
  %v609 = vrot.slane %v14, 5
  %v610 = vrot.slane %v609, 4
  %v611 = vrot.slane %v22, 5
  %v612 = vrot.slane %v611, 4
  %v613 = vrot.slane %v16, 5
  %v614 = vrot.slane %v613, 4
  %v615 = vrot.slane %v24, 5
  %v616 = vrot.slane %v615, 4
  %v617 = vld [vmem:[%s1 + $0x180] sm:$0xff]
  %v618 = vld [vmem:[%s1 + $0x188] sm:$0xff]
  %v619 = vld [vmem:[%s1 + $0x190] sm:$0xff]
  %v620 = vld [vmem:[%s1 + $0x198] sm:$0xff]
  %v621 = vld [vmem:[%s1 + $0x1a0] sm:$0xff]
  %v622 = vld [vmem:[%s1 + $0x1a8] sm:$0xff]
  %v623 = vld [vmem:[%s1 + $0x1b0] sm:$0xff]
  %v624 = vld [vmem:[%s1 + $0x1b8] sm:$0xff]
  %v625 = vld [vmem:[%s1 + $0x1c0] sm:$0xff]
  %v626 = vld [vmem:[%s1 + $0x1c8] sm:$0xff]
  %v627 = vld [vmem:[%s1 + $0x1d0] sm:$0xff]
  %v628 = vld [vmem:[%s1 + $0x1d8] sm:$0xff]
  %v629 = vld [vmem:[%s1 + $0x1e0] sm:$0xff]
  %v630 = vld [vmem:[%s1 + $0x1e8] sm:$0xff]
  %v631 = vld [vmem:[%s1 + $0x1f0] sm:$0xff]
  %v632 = vld [vmem:[%s1 + $0x1f8] sm:$0xff]
  %v633 = vcombine.low %v610, %v614
  %v635 = vunpack.c.l.s4 1983009808
  %v636 = vunpack.c.0.s8 %v635
  %v637 = vlaneseq
  %v638 = vshrl.u32 %v637, 7
  %v639 = vsub.s32 %v636, %v638
  %v640 = vrot.slane %v633, %v639
  %v641 = vcombine.low %v258, %v640
  %v642 = vcombine.low %v612, %v616
  %v644 = vunpack.c.l.s4 1983009808
  %v645 = vunpack.c.0.s8 %v644
  %v646 = vlaneseq
  %v647 = vshrl.u32 %v646, 7
  %v648 = vsub.s32 %v645, %v647
  %v649 = vrot.slane %v642, %v648
  %v650 = vcombine.low %v275, %v649
  %v669 = vunpack.c.l.b16 %v617
  %v670 = vunpack.c.h.b16 %v617
  %v671 = vunpack.c.l.b16 %v618
  %v672 = vunpack.c.h.b16 %v618
  %v673 = vunpack.c.l.b16 %v619
  %v674 = vunpack.c.h.b16 %v619
  %v675 = vunpack.c.l.b16 %v620
  %v676 = vunpack.c.h.b16 %v620
  %v677 = vunpack.c.l.b16 %v621
  %v678 = vunpack.c.h.b16 %v621
  %v679 = vunpack.c.l.b16 %v622
  %v680 = vunpack.c.h.b16 %v622
  %v681 = vunpack.c.l.b16 %v623
  %v682 = vunpack.c.h.b16 %v623
  %v683 = vunpack.c.l.b16 %v624
  %v684 = vunpack.c.h.b16 %v624
  %v685 = vunpack.c.l.b16 %v625
  %v686 = vunpack.c.h.b16 %v625
  %v687 = vunpack.c.l.b16 %v626
  %v688 = vunpack.c.h.b16 %v626
  %v689 = vunpack.c.l.b16 %v627
  %v690 = vunpack.c.h.b16 %v627
  %v691 = vunpack.c.l.b16 %v628
  %v692 = vunpack.c.h.b16 %v628
  %v693 = vunpack.c.l.b16 %v629
  %v694 = vunpack.c.h.b16 %v629
  %v695 = vunpack.c.l.b16 %v630
  %v696 = vunpack.c.h.b16 %v630
  %v697 = vunpack.c.l.b16 %v631
  %v698 = vunpack.c.h.b16 %v631
  %v699 = vunpack.c.l.b16 %v632
  %v700 = vunpack.c.h.b16 %v632
  %v701 = vpack.c.b16 %v671, %v669
  %v702 = vpack.c.b16 %v672, %v670
  %v703 = vpack.c.b16 %v675, %v673
  %v704 = vpack.c.b16 %v676, %v674
  %v705 = vpack.c.b16 %v679, %v677
  %v706 = vpack.c.b16 %v680, %v678
  %v707 = vpack.c.b16 %v683, %v681
  %v708 = vpack.c.b16 %v684, %v682
  %v709 = vpack.c.b16 %v687, %v685
  %v710 = vpack.c.b16 %v688, %v686
  %v711 = vpack.c.b16 %v691, %v689
  %v712 = vpack.c.b16 %v692, %v690
  %v713 = vpack.c.b16 %v695, %v693
  %v714 = vpack.c.b16 %v696, %v694
  %v715 = vpack.c.b16 %v699, %v697
  %v716 = vpack.c.b16 %v700, %v698
  %733 = vmatprep.subr.bf16.mxu0 %v716
  %734 = vmatpush1.bf16.msra.mxu0 %v715
  %735 = vmatprep.subr.bf16.mxu0 %v714
  %736 = vmatpush1.bf16.msra.mxu0 %v713
  %737 = vmatprep.subr.bf16.mxu0 %v712
  %738 = vmatpush1.bf16.msra.mxu0 %v711
  %739 = vmatprep.subr.bf16.mxu0 %v710
  %740 = vmatpush1.bf16.msra.mxu0 %v709
  %741 = vmatprep.subr.bf16.mxu0 %v708
  %742 = vmatpush1.bf16.msra.mxu0 %v707
  %743 = vmatprep.subr.bf16.mxu0 %v706
  %744 = vmatpush1.bf16.msra.mxu0 %v705
  %745 = vmatprep.subr.bf16.mxu0 %v704
  %746 = vmatpush1.bf16.msra.mxu0 %v703
  %747 = vmatprep.subr.bf16.mxu0 %v702
  %748 = vmatpush1.bf16.msra.mxu0 %v701
  %749 = vmatprep.subr.bf16.mxu0 0
  %750 = vmatpush2.bf16.msra.mxu0 0
  %751 = vmatprep.subr.bf16.mxu0 0
  %752 = vmatpush2.bf16.msra.mxu0 0
  %753 = vmatprep.subr.bf16.mxu0 0
  %754 = vmatpush2.bf16.msra.mxu0 0
  %755 = vmatprep.subr.bf16.mxu0 0
  %756 = vmatpush2.bf16.msra.mxu0 0
  %757 = vmatprep.subr.bf16.mxu0 0
  %758 = vmatpush2.bf16.msra.mxu0 0
  %759 = vmatprep.subr.bf16.mxu0 0
  %760 = vmatpush2.bf16.msra.mxu0 0
  %761 = vmatprep.subr.bf16.mxu0 0
  %762 = vmatpush2.bf16.msra.mxu0 0
  %763 = vmatprep.subr.bf16.mxu0 0
  %764 = vmatpush2.bf16.msra.mxu0 0
  %765 = vmatprep.mubr.bf16.mxu0 0
  %766 = vmatmul.mubr.bf16.gmra.mxu0 %v641
  %v767 = vpop.f32.mrf.mxu0
  %v768 = vadd.f32 0.0, %v767
  %v769 = vpop.f32.mrf.mxu0
  %v770 = vadd.f32 0.0, %v769
  %v771 = vpop.f32.mrf.mxu0
  %v772 = vadd.f32 0.0, %v771
  %v773 = vpop.f32.mrf.mxu0
  %v774 = vadd.f32 0.0, %v773
  %775 = vmatprep.mubr.bf16.mxu0 0
  %776 = vmatmul.mubr.bf16.gmra.mxu0 %v650
  %v777 = vpop.f32.mrf.mxu0
  %v778 = vadd.f32 0.0, %v777
  %v779 = vpop.f32.mrf.mxu0
  %v780 = vadd.f32 0.0, %v779
  %v781 = vpop.f32.mrf.mxu0
  %v782 = vadd.f32 0.0, %v781
  %v783 = vpop.f32.mrf.mxu0
  %v784 = vadd.f32 0.0, %v783
  %785 = vdwg.mxu0
  %v786 = vadd.f32 %v601, %v768
  %v787 = vadd.f32 %v602, %v770
  %v788 = vadd.f32 %v603, %v772
  %v789 = vadd.f32 %v604, %v774
  %v790 = vadd.f32 %v605, %v778
  %v791 = vadd.f32 %v606, %v780
  %v792 = vadd.f32 %v607, %v782
  %v793 = vadd.f32 %v608, %v784
  %v794 = vrot.slane %v15, 5
  %v795 = vrot.slane %v794, 4
  %v796 = vrot.slane %v23, 5
  %v797 = vrot.slane %v796, 4
  %v798 = vld [vmem:[%s1 + $0x200] sm:$0xff]
  %v799 = vld [vmem:[%s1 + $0x208] sm:$0xff]
  %v800 = vld [vmem:[%s1 + $0x210] sm:$0xff]
  %v801 = vld [vmem:[%s1 + $0x218] sm:$0xff]
  %v802 = vld [vmem:[%s1 + $0x220] sm:$0xff]
  %v803 = vld [vmem:[%s1 + $0x228] sm:$0xff]
  %v804 = vld [vmem:[%s1 + $0x230] sm:$0xff]
  %v805 = vld [vmem:[%s1 + $0x238] sm:$0xff]
  %v806 = vld [vmem:[%s1 + $0x240] sm:$0xff]
  %v807 = vld [vmem:[%s1 + $0x248] sm:$0xff]
  %v808 = vld [vmem:[%s1 + $0x250] sm:$0xff]
  %v809 = vld [vmem:[%s1 + $0x258] sm:$0xff]
  %v810 = vld [vmem:[%s1 + $0x260] sm:$0xff]
  %v811 = vld [vmem:[%s1 + $0x268] sm:$0xff]
  %v812 = vld [vmem:[%s1 + $0x270] sm:$0xff]
  %v813 = vld [vmem:[%s1 + $0x278] sm:$0xff]
  %v814 = vcombine.low %v614, %v795
  %v816 = vunpack.c.l.s4 1983009808
  %v817 = vunpack.c.0.s8 %v816
  %v818 = vlaneseq
  %v819 = vshrl.u32 %v818, 7
  %v820 = vsub.s32 %v817, %v819
  %v821 = vrot.slane %v814, %v820
  %v822 = vcombine.low %v85, %v821
  %v823 = vcombine.low %v616, %v797
  %v825 = vunpack.c.l.s4 1983009808
  %v826 = vunpack.c.0.s8 %v825
  %v827 = vlaneseq
  %v828 = vshrl.u32 %v827, 7
  %v829 = vsub.s32 %v826, %v828
  %v830 = vrot.slane %v823, %v829
  %v831 = vcombine.low %v102, %v830
  %v850 = vunpack.c.l.b16 %v798
  %v851 = vunpack.c.h.b16 %v798
  %v852 = vunpack.c.l.b16 %v799
  %v853 = vunpack.c.h.b16 %v799
  %v854 = vunpack.c.l.b16 %v800
  %v855 = vunpack.c.h.b16 %v800
  %v856 = vunpack.c.l.b16 %v801
  %v857 = vunpack.c.h.b16 %v801
  %v858 = vunpack.c.l.b16 %v802
  %v859 = vunpack.c.h.b16 %v802
  %v860 = vunpack.c.l.b16 %v803
  %v861 = vunpack.c.h.b16 %v803
  %v862 = vunpack.c.l.b16 %v804
  %v863 = vunpack.c.h.b16 %v804
  %v864 = vunpack.c.l.b16 %v805
  %v865 = vunpack.c.h.b16 %v805
  %v866 = vunpack.c.l.b16 %v806
  %v867 = vunpack.c.h.b16 %v806
  %v868 = vunpack.c.l.b16 %v807
  %v869 = vunpack.c.h.b16 %v807
  %v870 = vunpack.c.l.b16 %v808
  %v871 = vunpack.c.h.b16 %v808
  %v872 = vunpack.c.l.b16 %v809
  %v873 = vunpack.c.h.b16 %v809
  %v874 = vunpack.c.l.b16 %v810
  %v875 = vunpack.c.h.b16 %v810
  %v876 = vunpack.c.l.b16 %v811
  %v877 = vunpack.c.h.b16 %v811
  %v878 = vunpack.c.l.b16 %v812
  %v879 = vunpack.c.h.b16 %v812
  %v880 = vunpack.c.l.b16 %v813
  %v881 = vunpack.c.h.b16 %v813
  %v882 = vpack.c.b16 %v852, %v850
  %v883 = vpack.c.b16 %v853, %v851
  %v884 = vpack.c.b16 %v856, %v854
  %v885 = vpack.c.b16 %v857, %v855
  %v886 = vpack.c.b16 %v860, %v858
  %v887 = vpack.c.b16 %v861, %v859
  %v888 = vpack.c.b16 %v864, %v862
  %v889 = vpack.c.b16 %v865, %v863
  %v890 = vpack.c.b16 %v868, %v866
  %v891 = vpack.c.b16 %v869, %v867
  %v892 = vpack.c.b16 %v872, %v870
  %v893 = vpack.c.b16 %v873, %v871
  %v894 = vpack.c.b16 %v876, %v874
  %v895 = vpack.c.b16 %v877, %v875
  %v896 = vpack.c.b16 %v880, %v878
  %v897 = vpack.c.b16 %v881, %v879
  %914 = vmatprep.subr.bf16.mxu0 %v897
  %915 = vmatpush1.bf16.msra.mxu0 %v896
  %916 = vmatprep.subr.bf16.mxu0 %v895
  %917 = vmatpush1.bf16.msra.mxu0 %v894
  %918 = vmatprep.subr.bf16.mxu0 %v893
  %919 = vmatpush1.bf16.msra.mxu0 %v892
  %920 = vmatprep.subr.bf16.mxu0 %v891
  %921 = vmatpush1.bf16.msra.mxu0 %v890
  %922 = vmatprep.subr.bf16.mxu0 %v889
  %923 = vmatpush1.bf16.msra.mxu0 %v888
  %924 = vmatprep.subr.bf16.mxu0 %v887
  %925 = vmatpush1.bf16.msra.mxu0 %v886
  %926 = vmatprep.subr.bf16.mxu0 %v885
  %927 = vmatpush1.bf16.msra.mxu0 %v884
  %928 = vmatprep.subr.bf16.mxu0 %v883
  %929 = vmatpush1.bf16.msra.mxu0 %v882
  %930 = vmatprep.subr.bf16.mxu0 0
  %931 = vmatpush2.bf16.msra.mxu0 0
  %932 = vmatprep.subr.bf16.mxu0 0
  %933 = vmatpush2.bf16.msra.mxu0 0
  %934 = vmatprep.subr.bf16.mxu0 0
  %935 = vmatpush2.bf16.msra.mxu0 0
  %936 = vmatprep.subr.bf16.mxu0 0
  %937 = vmatpush2.bf16.msra.mxu0 0
  %938 = vmatprep.subr.bf16.mxu0 0
  %939 = vmatpush2.bf16.msra.mxu0 0
  %940 = vmatprep.subr.bf16.mxu0 0
  %941 = vmatpush2.bf16.msra.mxu0 0
  %942 = vmatprep.subr.bf16.mxu0 0
  %943 = vmatpush2.bf16.msra.mxu0 0
  %944 = vmatprep.subr.bf16.mxu0 0
  %945 = vmatpush2.bf16.msra.mxu0 0
  %946 = vmatprep.mubr.bf16.mxu0 0
  %947 = vmatmul.mubr.bf16.gmra.mxu0 %v822
  %v948 = vpop.f32.mrf.mxu0
  %v949 = vadd.f32 0.0, %v948
  %v950 = vpop.f32.mrf.mxu0
  %v951 = vadd.f32 0.0, %v950
  %v952 = vpop.f32.mrf.mxu0
  %v953 = vadd.f32 0.0, %v952
  %v954 = vpop.f32.mrf.mxu0
  %v955 = vadd.f32 0.0, %v954
  %956 = vmatprep.mubr.bf16.mxu0 0
  %957 = vmatmul.mubr.bf16.gmra.mxu0 %v831
  %v958 = vpop.f32.mrf.mxu0
  %v959 = vadd.f32 0.0, %v958
  %v960 = vpop.f32.mrf.mxu0
  %v961 = vadd.f32 0.0, %v960
  %v962 = vpop.f32.mrf.mxu0
  %v963 = vadd.f32 0.0, %v962
  %v964 = vpop.f32.mrf.mxu0
  %v965 = vadd.f32 0.0, %v964
  %966 = vdwg.mxu0
  %v967 = vadd.f32 %v786, %v949
  %v968 = vadd.f32 %v787, %v951
  %v969 = vadd.f32 %v788, %v953
  %v970 = vadd.f32 %v789, %v955
  %v971 = vadd.f32 %v790, %v959
  %v972 = vadd.f32 %v791, %v961
  %v973 = vadd.f32 %v792, %v963
  %v974 = vadd.f32 %v793, %v965
  %v975 = vrot.slane %v17, 5
  %v976 = vrot.slane %v975, 4
  %v977 = vrot.slane %v25, 5
  %v978 = vrot.slane %v977, 4
  %v979 = vld [vmem:[%s1 + $0x280] sm:$0xff]
  %v980 = vld [vmem:[%s1 + $0x288] sm:$0xff]
  %v981 = vld [vmem:[%s1 + $0x290] sm:$0xff]
  %v982 = vld [vmem:[%s1 + $0x298] sm:$0xff]
  %v983 = vld [vmem:[%s1 + $0x2a0] sm:$0xff]
  %v984 = vld [vmem:[%s1 + $0x2a8] sm:$0xff]
  %v985 = vld [vmem:[%s1 + $0x2b0] sm:$0xff]
  %v986 = vld [vmem:[%s1 + $0x2b8] sm:$0xff]
  %v987 = vld [vmem:[%s1 + $0x2c0] sm:$0xff]
  %v988 = vld [vmem:[%s1 + $0x2c8] sm:$0xff]
  %v989 = vld [vmem:[%s1 + $0x2d0] sm:$0xff]
  %v990 = vld [vmem:[%s1 + $0x2d8] sm:$0xff]
  %v991 = vld [vmem:[%s1 + $0x2e0] sm:$0xff]
  %v992 = vld [vmem:[%s1 + $0x2e8] sm:$0xff]
  %v993 = vld [vmem:[%s1 + $0x2f0] sm:$0xff]
  %v994 = vld [vmem:[%s1 + $0x2f8] sm:$0xff]
  %v995 = vcombine.low %v795, %v976
  %v997 = vunpack.c.l.s4 1983009808
  %v998 = vunpack.c.0.s8 %v997
  %v999 = vlaneseq
  %v1000 = vshrl.u32 %v999, 7
  %v1001 = vsub.s32 %v998, %v1000
  %v1002 = vrot.slane %v995, %v1001
  %v1003 = vcombine.low %v447, %v1002
  %v1004 = vcombine.low %v797, %v978
  %v1006 = vunpack.c.l.s4 1983009808
  %v1007 = vunpack.c.0.s8 %v1006
  %v1008 = vlaneseq
  %v1009 = vshrl.u32 %v1008, 7
  %v1010 = vsub.s32 %v1007, %v1009
  %v1011 = vrot.slane %v1004, %v1010
  %v1012 = vcombine.low %v464, %v1011
  %v1031 = vunpack.c.l.b16 %v979
  %v1032 = vunpack.c.h.b16 %v979
  %v1033 = vunpack.c.l.b16 %v980
  %v1034 = vunpack.c.h.b16 %v980
  %v1035 = vunpack.c.l.b16 %v981
  %v1036 = vunpack.c.h.b16 %v981
  %v1037 = vunpack.c.l.b16 %v982
  %v1038 = vunpack.c.h.b16 %v982
  %v1039 = vunpack.c.l.b16 %v983
  %v1040 = vunpack.c.h.b16 %v983
  %v1041 = vunpack.c.l.b16 %v984
  %v1042 = vunpack.c.h.b16 %v984
  %v1043 = vunpack.c.l.b16 %v985
  %v1044 = vunpack.c.h.b16 %v985
  %v1045 = vunpack.c.l.b16 %v986
  %v1046 = vunpack.c.h.b16 %v986
  %v1047 = vunpack.c.l.b16 %v987
  %v1048 = vunpack.c.h.b16 %v987
  %v1049 = vunpack.c.l.b16 %v988
  %v1050 = vunpack.c.h.b16 %v988
  %v1051 = vunpack.c.l.b16 %v989
  %v1052 = vunpack.c.h.b16 %v989
  %v1053 = vunpack.c.l.b16 %v990
  %v1054 = vunpack.c.h.b16 %v990
  %v1055 = vunpack.c.l.b16 %v991
  %v1056 = vunpack.c.h.b16 %v991
  %v1057 = vunpack.c.l.b16 %v992
  %v1058 = vunpack.c.h.b16 %v992
  %v1059 = vunpack.c.l.b16 %v993
  %v1060 = vunpack.c.h.b16 %v993
  %v1061 = vunpack.c.l.b16 %v994
  %v1062 = vunpack.c.h.b16 %v994
  %v1063 = vpack.c.b16 %v1033, %v1031
  %v1064 = vpack.c.b16 %v1034, %v1032
  %v1065 = vpack.c.b16 %v1037, %v1035
  %v1066 = vpack.c.b16 %v1038, %v1036
  %v1067 = vpack.c.b16 %v1041, %v1039
  %v1068 = vpack.c.b16 %v1042, %v1040
  %v1069 = vpack.c.b16 %v1045, %v1043
  %v1070 = vpack.c.b16 %v1046, %v1044
  %v1071 = vpack.c.b16 %v1049, %v1047
  %v1072 = vpack.c.b16 %v1050, %v1048
  %v1073 = vpack.c.b16 %v1053, %v1051
  %v1074 = vpack.c.b16 %v1054, %v1052
  %v1075 = vpack.c.b16 %v1057, %v1055
  %v1076 = vpack.c.b16 %v1058, %v1056
  %v1077 = vpack.c.b16 %v1061, %v1059
  %v1078 = vpack.c.b16 %v1062, %v1060
  %1095 = vmatprep.subr.bf16.mxu0 %v1078
  %1096 = vmatpush1.bf16.msra.mxu0 %v1077
  %1097 = vmatprep.subr.bf16.mxu0 %v1076
  %1098 = vmatpush1.bf16.msra.mxu0 %v1075
  %1099 = vmatprep.subr.bf16.mxu0 %v1074
  %1100 = vmatpush1.bf16.msra.mxu0 %v1073
  %1101 = vmatprep.subr.bf16.mxu0 %v1072
  %1102 = vmatpush1.bf16.msra.mxu0 %v1071
  %1103 = vmatprep.subr.bf16.mxu0 %v1070
  %1104 = vmatpush1.bf16.msra.mxu0 %v1069
  %1105 = vmatprep.subr.bf16.mxu0 %v1068
  %1106 = vmatpush1.bf16.msra.mxu0 %v1067
  %1107 = vmatprep.subr.bf16.mxu0 %v1066
  %1108 = vmatpush1.bf16.msra.mxu0 %v1065
  %1109 = vmatprep.subr.bf16.mxu0 %v1064
  %1110 = vmatpush1.bf16.msra.mxu0 %v1063
  %1111 = vmatprep.subr.bf16.mxu0 0
  %1112 = vmatpush2.bf16.msra.mxu0 0
  %1113 = vmatprep.subr.bf16.mxu0 0
  %1114 = vmatpush2.bf16.msra.mxu0 0
  %1115 = vmatprep.subr.bf16.mxu0 0
  %1116 = vmatpush2.bf16.msra.mxu0 0
  %1117 = vmatprep.subr.bf16.mxu0 0
  %1118 = vmatpush2.bf16.msra.mxu0 0
  %1119 = vmatprep.subr.bf16.mxu0 0
  %1120 = vmatpush2.bf16.msra.mxu0 0
  %1121 = vmatprep.subr.bf16.mxu0 0
  %1122 = vmatpush2.bf16.msra.mxu0 0
  %1123 = vmatprep.subr.bf16.mxu0 0
  %1124 = vmatpush2.bf16.msra.mxu0 0
  %1125 = vmatprep.subr.bf16.mxu0 0
  %1126 = vmatpush2.bf16.msra.mxu0 0
  %1127 = vmatprep.mubr.bf16.mxu0 0
  %1128 = vmatmul.mubr.bf16.gmra.mxu0 %v1003
  %v1129 = vpop.f32.mrf.mxu0
  %v1130 = vadd.f32 0.0, %v1129
  %v1131 = vpop.f32.mrf.mxu0
  %v1132 = vadd.f32 0.0, %v1131
  %v1133 = vpop.f32.mrf.mxu0
  %v1134 = vadd.f32 0.0, %v1133
  %v1135 = vpop.f32.mrf.mxu0
  %v1136 = vadd.f32 0.0, %v1135
  %1137 = vmatprep.mubr.bf16.mxu0 0
  %1138 = vmatmul.mubr.bf16.gmra.mxu0 %v1012
  %v1139 = vpop.f32.mrf.mxu0
  %v1140 = vadd.f32 0.0, %v1139
  %v1141 = vpop.f32.mrf.mxu0
  %v1142 = vadd.f32 0.0, %v1141
  %v1143 = vpop.f32.mrf.mxu0
  %v1144 = vadd.f32 0.0, %v1143
  %v1145 = vpop.f32.mrf.mxu0
  %v1146 = vadd.f32 0.0, %v1145
  %1147 = vdwg.mxu0
  %v1148 = vadd.f32 %v967, %v1130
  %v1149 = vadd.f32 %v968, %v1132
  %v1150 = vadd.f32 %v969, %v1134
  %v1151 = vadd.f32 %v970, %v1136
  %v1152 = vadd.f32 %v971, %v1140
  %v1153 = vadd.f32 %v972, %v1142
  %v1154 = vadd.f32 %v973, %v1144
  %v1155 = vadd.f32 %v974, %v1146
  %v1157 = vunpack.c.l.s4 1983009808
  %v1158 = vunpack.c.0.s8 %v1157
  %v1159 = vlaneseq
  %v1160 = vshrl.u32 %v1159, 7
  %v1161 = vsub.s32 %v1158, %v1160
  %v1162 = vrot.slane %v14, %v1161
  %v1163 = vcombine.high %v1162, %v1162
  %v1165 = vunpack.c.l.s4 1983009808
  %v1166 = vunpack.c.0.s8 %v1165
  %v1167 = vlaneseq
  %v1168 = vshrl.u32 %v1167, 7
  %v1169 = vsub.s32 %v1166, %v1168
  %v1170 = vrot.slane %v16, %v1169
  %v1171 = vcombine.high %v1170, %v1170
  %v1173 = vunpack.c.l.s4 1983009808
  %v1174 = vunpack.c.0.s8 %v1173
  %v1175 = vlaneseq
  %v1176 = vshrl.u32 %v1175, 7
  %v1177 = vsub.s32 %v1174, %v1176
  %v1178 = vrot.slane %v18, %v1177
  %v1179 = vcombine.high %v1178, %v1178
  %v1181 = vunpack.c.l.s4 1983009808
  %v1182 = vunpack.c.0.s8 %v1181
  %v1183 = vlaneseq
  %v1184 = vshrl.u32 %v1183, 7
  %v1185 = vsub.s32 %v1182, %v1184
  %v1186 = vrot.slane %v20, %v1185
  %v1187 = vcombine.high %v1186, %v1186
  %v1189 = vunpack.c.l.s4 1983009808
  %v1190 = vunpack.c.0.s8 %v1189
  %v1191 = vlaneseq
  %v1192 = vshrl.u32 %v1191, 7
  %v1193 = vsub.s32 %v1190, %v1192
  %v1194 = vrot.slane %v22, %v1193
  %v1195 = vcombine.high %v1194, %v1194
  %v1197 = vunpack.c.l.s4 1983009808
  %v1198 = vunpack.c.0.s8 %v1197
  %v1199 = vlaneseq
  %v1200 = vshrl.u32 %v1199, 7
  %v1201 = vsub.s32 %v1198, %v1200
  %v1202 = vrot.slane %v24, %v1201
  %v1203 = vcombine.high %v1202, %v1202
  %v1205 = vunpack.c.l.s4 1983009808
  %v1206 = vunpack.c.0.s8 %v1205
  %v1207 = vlaneseq
  %v1208 = vshrl.u32 %v1207, 7
  %v1209 = vsub.s32 %v1206, %v1208
  %v1210 = vrot.slane %v26, %v1209
  %v1211 = vcombine.high %v1210, %v1210
  %v1213 = vunpack.c.l.s4 1983009808
  %v1214 = vunpack.c.0.s8 %v1213
  %v1215 = vlaneseq
  %v1216 = vshrl.u32 %v1215, 7
  %v1217 = vsub.s32 %v1214, %v1216
  %v1218 = vrot.slane %v28, %v1217
  %v1219 = vcombine.high %v1218, %v1218
  %vm1220 = vcmask 1040384
  %vm1221 = vcmask 1042434
  %vm1222 = vmor %vm1220, %vm1221
  %vm1223 = vcmask 1044484
  %vm1224 = vmor %vm1222, %vm1223
  %vm1225 = vcmask 1046534
  %vm1226 = vmor %vm1224, %vm1225
  %v1227 = vrot.slane %v1162, 7
  %v1228 = vrot.slane %v1227, 2
  %v1229 = vrot.slane %v1163, 7
  %v1230 = vsel %vm1226, %v1228, %v1229
  %v1231 = vrot.slane %v1170, 7
  %v1232 = vrot.slane %v1231, 2
  %v1233 = vrot.slane %v1171, 7
  %v1234 = vsel %vm1226, %v1232, %v1233
  %v1235 = vrot.slane %v1178, 7
  %v1236 = vrot.slane %v1235, 2
  %v1237 = vrot.slane %v1179, 7
  %v1238 = vsel %vm1226, %v1236, %v1237
  %v1239 = vrot.slane %v1186, 7
  %v1240 = vrot.slane %v1239, 2
  %v1241 = vrot.slane %v1187, 7
  %v1242 = vsel %vm1226, %v1240, %v1241
  %v1243 = vrot.slane %v1194, 7
  %v1244 = vrot.slane %v1243, 2
  %v1245 = vrot.slane %v1195, 7
  %v1246 = vsel %vm1226, %v1244, %v1245
  %v1247 = vrot.slane %v1202, 7
  %v1248 = vrot.slane %v1247, 2
  %v1249 = vrot.slane %v1203, 7
  %v1250 = vsel %vm1226, %v1248, %v1249
  %v1251 = vrot.slane %v1210, 7
  %v1252 = vrot.slane %v1251, 2
  %v1253 = vrot.slane %v1211, 7
  %v1254 = vsel %vm1226, %v1252, %v1253
  %v1255 = vrot.slane %v1218, 7
  %v1256 = vrot.slane %v1255, 2
  %v1257 = vrot.slane %v1219, 7
  %v1258 = vsel %vm1226, %v1256, %v1257
  %v1259 = vld [vmem:[%s1 + $0x300] sm:$0xff]
  %v1260 = vld [vmem:[%s1 + $0x308] sm:$0xff]
  %v1261 = vld [vmem:[%s1 + $0x310] sm:$0xff]
  %v1262 = vld [vmem:[%s1 + $0x318] sm:$0xff]
  %v1263 = vld [vmem:[%s1 + $0x320] sm:$0xff]
  %v1264 = vld [vmem:[%s1 + $0x328] sm:$0xff]
  %v1265 = vld [vmem:[%s1 + $0x330] sm:$0xff]
  %v1266 = vld [vmem:[%s1 + $0x338] sm:$0xff]
  %v1267 = vld [vmem:[%s1 + $0x340] sm:$0xff]
  %v1268 = vld [vmem:[%s1 + $0x348] sm:$0xff]
  %v1269 = vld [vmem:[%s1 + $0x350] sm:$0xff]
  %v1270 = vld [vmem:[%s1 + $0x358] sm:$0xff]
  %v1271 = vld [vmem:[%s1 + $0x360] sm:$0xff]
  %v1272 = vld [vmem:[%s1 + $0x368] sm:$0xff]
  %v1273 = vld [vmem:[%s1 + $0x370] sm:$0xff]
  %v1274 = vld [vmem:[%s1 + $0x378] sm:$0xff]
  %v1275 = vcombine.low %v1230, %v1234
  %v1276 = vcombine.low %v1238, %v1242
  %v1278 = vunpack.c.l.s4 1983009808
  %v1279 = vunpack.c.0.s8 %v1278
  %v1280 = vlaneseq
  %v1281 = vshrl.u32 %v1280, 7
  %v1282 = vsub.s32 %v1279, %v1281
  %v1283 = vrot.slane %v1275, %v1282
  %v1285 = vunpack.c.l.s4 1983009808
  %v1286 = vunpack.c.0.s8 %v1285
  %v1287 = vlaneseq
  %v1288 = vshrl.u32 %v1287, 7
  %v1289 = vsub.s32 %v1286, %v1288
  %v1290 = vrot.slane %v1276, %v1289
  %v1291 = vcombine.low %v1283, %v1290
  %v1292 = vcombine.low %v1246, %v1250
  %v1293 = vcombine.low %v1254, %v1258
  %v1295 = vunpack.c.l.s4 1983009808
  %v1296 = vunpack.c.0.s8 %v1295
  %v1297 = vlaneseq
  %v1298 = vshrl.u32 %v1297, 7
  %v1299 = vsub.s32 %v1296, %v1298
  %v1300 = vrot.slane %v1292, %v1299
  %v1302 = vunpack.c.l.s4 1983009808
  %v1303 = vunpack.c.0.s8 %v1302
  %v1304 = vlaneseq
  %v1305 = vshrl.u32 %v1304, 7
  %v1306 = vsub.s32 %v1303, %v1305
  %v1307 = vrot.slane %v1293, %v1306
  %v1308 = vcombine.low %v1300, %v1307
  %v1327 = vunpack.c.l.b16 %v1259
  %v1328 = vunpack.c.h.b16 %v1259
  %v1329 = vunpack.c.l.b16 %v1260
  %v1330 = vunpack.c.h.b16 %v1260
  %v1331 = vunpack.c.l.b16 %v1261
  %v1332 = vunpack.c.h.b16 %v1261
  %v1333 = vunpack.c.l.b16 %v1262
  %v1334 = vunpack.c.h.b16 %v1262
  %v1335 = vunpack.c.l.b16 %v1263
  %v1336 = vunpack.c.h.b16 %v1263
  %v1337 = vunpack.c.l.b16 %v1264
  %v1338 = vunpack.c.h.b16 %v1264
  %v1339 = vunpack.c.l.b16 %v1265
  %v1340 = vunpack.c.h.b16 %v1265
  %v1341 = vunpack.c.l.b16 %v1266
  %v1342 = vunpack.c.h.b16 %v1266
  %v1343 = vunpack.c.l.b16 %v1267
  %v1344 = vunpack.c.h.b16 %v1267
  %v1345 = vunpack.c.l.b16 %v1268
  %v1346 = vunpack.c.h.b16 %v1268
  %v1347 = vunpack.c.l.b16 %v1269
  %v1348 = vunpack.c.h.b16 %v1269
  %v1349 = vunpack.c.l.b16 %v1270
  %v1350 = vunpack.c.h.b16 %v1270
  %v1351 = vunpack.c.l.b16 %v1271
  %v1352 = vunpack.c.h.b16 %v1271
  %v1353 = vunpack.c.l.b16 %v1272
  %v1354 = vunpack.c.h.b16 %v1272
  %v1355 = vunpack.c.l.b16 %v1273
  %v1356 = vunpack.c.h.b16 %v1273
  %v1357 = vunpack.c.l.b16 %v1274
  %v1358 = vunpack.c.h.b16 %v1274
  %v1359 = vpack.c.b16 %v1329, %v1327
  %v1360 = vpack.c.b16 %v1330, %v1328
  %v1361 = vpack.c.b16 %v1333, %v1331
  %v1362 = vpack.c.b16 %v1334, %v1332
  %v1363 = vpack.c.b16 %v1337, %v1335
  %v1364 = vpack.c.b16 %v1338, %v1336
  %v1365 = vpack.c.b16 %v1341, %v1339
  %v1366 = vpack.c.b16 %v1342, %v1340
  %v1367 = vpack.c.b16 %v1345, %v1343
  %v1368 = vpack.c.b16 %v1346, %v1344
  %v1369 = vpack.c.b16 %v1349, %v1347
  %v1370 = vpack.c.b16 %v1350, %v1348
  %v1371 = vpack.c.b16 %v1353, %v1351
  %v1372 = vpack.c.b16 %v1354, %v1352
  %v1373 = vpack.c.b16 %v1357, %v1355
  %v1374 = vpack.c.b16 %v1358, %v1356
  %1391 = vmatprep.subr.bf16.mxu0 %v1374
  %1392 = vmatpush1.bf16.msra.mxu0 %v1373
  %1393 = vmatprep.subr.bf16.mxu0 %v1372
  %1394 = vmatpush1.bf16.msra.mxu0 %v1371
  %1395 = vmatprep.subr.bf16.mxu0 %v1370
  %1396 = vmatpush1.bf16.msra.mxu0 %v1369
  %1397 = vmatprep.subr.bf16.mxu0 %v1368
  %1398 = vmatpush1.bf16.msra.mxu0 %v1367
  %1399 = vmatprep.subr.bf16.mxu0 %v1366
  %1400 = vmatpush1.bf16.msra.mxu0 %v1365
  %1401 = vmatprep.subr.bf16.mxu0 %v1364
  %1402 = vmatpush1.bf16.msra.mxu0 %v1363
  %1403 = vmatprep.subr.bf16.mxu0 %v1362
  %1404 = vmatpush1.bf16.msra.mxu0 %v1361
  %1405 = vmatprep.subr.bf16.mxu0 %v1360
  %1406 = vmatpush1.bf16.msra.mxu0 %v1359
  %1407 = vmatprep.subr.bf16.mxu0 0
  %1408 = vmatpush2.bf16.msra.mxu0 0
  %1409 = vmatprep.subr.bf16.mxu0 0
  %1410 = vmatpush2.bf16.msra.mxu0 0
  %1411 = vmatprep.subr.bf16.mxu0 0
  %1412 = vmatpush2.bf16.msra.mxu0 0
  %1413 = vmatprep.subr.bf16.mxu0 0
  %1414 = vmatpush2.bf16.msra.mxu0 0
  %1415 = vmatprep.subr.bf16.mxu0 0
  %1416 = vmatpush2.bf16.msra.mxu0 0
  %1417 = vmatprep.subr.bf16.mxu0 0
  %1418 = vmatpush2.bf16.msra.mxu0 0
  %1419 = vmatprep.subr.bf16.mxu0 0
  %1420 = vmatpush2.bf16.msra.mxu0 0
  %1421 = vmatprep.subr.bf16.mxu0 0
  %1422 = vmatpush2.bf16.msra.mxu0 0
  %1423 = vmatprep.mubr.bf16.mxu0 0
  %1424 = vmatmul.mubr.bf16.gmra.mxu0 %v1291
  %v1425 = vpop.f32.mrf.mxu0
  %v1426 = vadd.f32 0.0, %v1425
  %v1427 = vpop.f32.mrf.mxu0
  %v1428 = vadd.f32 0.0, %v1427
  %v1429 = vpop.f32.mrf.mxu0
  %v1430 = vadd.f32 0.0, %v1429
  %v1431 = vpop.f32.mrf.mxu0
  %v1432 = vadd.f32 0.0, %v1431
  %1433 = vmatprep.mubr.bf16.mxu0 0
  %1434 = vmatmul.mubr.bf16.gmra.mxu0 %v1308
  %v1435 = vpop.f32.mrf.mxu0
  %v1436 = vadd.f32 0.0, %v1435
  %v1437 = vpop.f32.mrf.mxu0
  %v1438 = vadd.f32 0.0, %v1437
  %v1439 = vpop.f32.mrf.mxu0
  %v1440 = vadd.f32 0.0, %v1439
  %v1441 = vpop.f32.mrf.mxu0
  %v1442 = vadd.f32 0.0, %v1441
  %1443 = vdwg.mxu0
  %v1444 = vadd.f32 %v1148, %v1426
  %v1445 = vadd.f32 %v1149, %v1428
  %v1446 = vadd.f32 %v1150, %v1430
  %v1447 = vadd.f32 %v1151, %v1432
  %v1448 = vadd.f32 %v1152, %v1436
  %v1449 = vadd.f32 %v1153, %v1438
  %v1450 = vadd.f32 %v1154, %v1440
  %v1451 = vadd.f32 %v1155, %v1442
  %v1453 = vunpack.c.l.s4 1983009808
  %v1454 = vunpack.c.0.s8 %v1453
  %v1455 = vlaneseq
  %v1456 = vshrl.u32 %v1455, 7
  %v1457 = vsub.s32 %v1454, %v1456
  %v1458 = vrot.slane %v15, %v1457
  %v1459 = vcombine.high %v1458, %v1458
  %v1461 = vunpack.c.l.s4 1983009808
  %v1462 = vunpack.c.0.s8 %v1461
  %v1463 = vlaneseq
  %v1464 = vshrl.u32 %v1463, 7
  %v1465 = vsub.s32 %v1462, %v1464
  %v1466 = vrot.slane %v19, %v1465
  %v1467 = vcombine.high %v1466, %v1466
  %v1469 = vunpack.c.l.s4 1983009808
  %v1470 = vunpack.c.0.s8 %v1469
  %v1471 = vlaneseq
  %v1472 = vshrl.u32 %v1471, 7
  %v1473 = vsub.s32 %v1470, %v1472
  %v1474 = vrot.slane %v23, %v1473
  %v1475 = vcombine.high %v1474, %v1474
  %v1477 = vunpack.c.l.s4 1983009808
  %v1478 = vunpack.c.0.s8 %v1477
  %v1479 = vlaneseq
  %v1480 = vshrl.u32 %v1479, 7
  %v1481 = vsub.s32 %v1478, %v1480
  %v1482 = vrot.slane %v27, %v1481
  %v1483 = vcombine.high %v1482, %v1482
  %v1484 = vrot.slane %v1458, 7
  %v1485 = vrot.slane %v1484, 2
  %v1486 = vrot.slane %v1459, 7
  %v1487 = vsel %vm1226, %v1485, %v1486
  %v1488 = vrot.slane %v1466, 7
  %v1489 = vrot.slane %v1488, 2
  %v1490 = vrot.slane %v1467, 7
  %v1491 = vsel %vm1226, %v1489, %v1490
  %v1492 = vrot.slane %v1474, 7
  %v1493 = vrot.slane %v1492, 2
  %v1494 = vrot.slane %v1475, 7
  %v1495 = vsel %vm1226, %v1493, %v1494
  %v1496 = vrot.slane %v1482, 7
  %v1497 = vrot.slane %v1496, 2
  %v1498 = vrot.slane %v1483, 7
  %v1499 = vsel %vm1226, %v1497, %v1498
  %v1500 = vld [vmem:[%s1 + $0x380] sm:$0xff]
  %v1501 = vld [vmem:[%s1 + $0x388] sm:$0xff]
  %v1502 = vld [vmem:[%s1 + $0x390] sm:$0xff]
  %v1503 = vld [vmem:[%s1 + $0x398] sm:$0xff]
  %v1504 = vld [vmem:[%s1 + $0x3a0] sm:$0xff]
  %v1505 = vld [vmem:[%s1 + $0x3a8] sm:$0xff]
  %v1506 = vld [vmem:[%s1 + $0x3b0] sm:$0xff]
  %v1507 = vld [vmem:[%s1 + $0x3b8] sm:$0xff]
  %v1508 = vld [vmem:[%s1 + $0x3c0] sm:$0xff]
  %v1509 = vld [vmem:[%s1 + $0x3c8] sm:$0xff]
  %v1510 = vld [vmem:[%s1 + $0x3d0] sm:$0xff]
  %v1511 = vld [vmem:[%s1 + $0x3d8] sm:$0xff]
  %v1512 = vld [vmem:[%s1 + $0x3e0] sm:$0xff]
  %v1513 = vld [vmem:[%s1 + $0x3e8] sm:$0xff]
  %v1514 = vld [vmem:[%s1 + $0x3f0] sm:$0xff]
  %v1515 = vld [vmem:[%s1 + $0x3f8] sm:$0xff]
  %v1516 = vcombine.low %v1234, %v1487
  %v1517 = vcombine.low %v1242, %v1491
  %v1519 = vunpack.c.l.s4 1983009808
  %v1520 = vunpack.c.0.s8 %v1519
  %v1521 = vlaneseq
  %v1522 = vshrl.u32 %v1521, 7
  %v1523 = vsub.s32 %v1520, %v1522
  %v1524 = vrot.slane %v1516, %v1523
  %v1526 = vunpack.c.l.s4 1983009808
  %v1527 = vunpack.c.0.s8 %v1526
  %v1528 = vlaneseq
  %v1529 = vshrl.u32 %v1528, 7
  %v1530 = vsub.s32 %v1527, %v1529
  %v1531 = vrot.slane %v1517, %v1530
  %v1532 = vcombine.low %v1524, %v1531
  %v1533 = vcombine.low %v1250, %v1495
  %v1534 = vcombine.low %v1258, %v1499
  %v1536 = vunpack.c.l.s4 1983009808
  %v1537 = vunpack.c.0.s8 %v1536
  %v1538 = vlaneseq
  %v1539 = vshrl.u32 %v1538, 7
  %v1540 = vsub.s32 %v1537, %v1539
  %v1541 = vrot.slane %v1533, %v1540
  %v1543 = vunpack.c.l.s4 1983009808
  %v1544 = vunpack.c.0.s8 %v1543
  %v1545 = vlaneseq
  %v1546 = vshrl.u32 %v1545, 7
  %v1547 = vsub.s32 %v1544, %v1546
  %v1548 = vrot.slane %v1534, %v1547
  %v1549 = vcombine.low %v1541, %v1548
  %v1568 = vunpack.c.l.b16 %v1500
  %v1569 = vunpack.c.h.b16 %v1500
  %v1570 = vunpack.c.l.b16 %v1501
  %v1571 = vunpack.c.h.b16 %v1501
  %v1572 = vunpack.c.l.b16 %v1502
  %v1573 = vunpack.c.h.b16 %v1502
  %v1574 = vunpack.c.l.b16 %v1503
  %v1575 = vunpack.c.h.b16 %v1503
  %v1576 = vunpack.c.l.b16 %v1504
  %v1577 = vunpack.c.h.b16 %v1504
  %v1578 = vunpack.c.l.b16 %v1505
  %v1579 = vunpack.c.h.b16 %v1505
  %v1580 = vunpack.c.l.b16 %v1506
  %v1581 = vunpack.c.h.b16 %v1506
  %v1582 = vunpack.c.l.b16 %v1507
  %v1583 = vunpack.c.h.b16 %v1507
  %v1584 = vunpack.c.l.b16 %v1508
  %v1585 = vunpack.c.h.b16 %v1508
  %v1586 = vunpack.c.l.b16 %v1509
  %v1587 = vunpack.c.h.b16 %v1509
  %v1588 = vunpack.c.l.b16 %v1510
  %v1589 = vunpack.c.h.b16 %v1510
  %v1590 = vunpack.c.l.b16 %v1511
  %v1591 = vunpack.c.h.b16 %v1511
  %v1592 = vunpack.c.l.b16 %v1512
  %v1593 = vunpack.c.h.b16 %v1512
  %v1594 = vunpack.c.l.b16 %v1513
  %v1595 = vunpack.c.h.b16 %v1513
  %v1596 = vunpack.c.l.b16 %v1514
  %v1597 = vunpack.c.h.b16 %v1514
  %v1598 = vunpack.c.l.b16 %v1515
  %v1599 = vunpack.c.h.b16 %v1515
  %v1600 = vpack.c.b16 %v1570, %v1568
  %v1601 = vpack.c.b16 %v1571, %v1569
  %v1602 = vpack.c.b16 %v1574, %v1572
  %v1603 = vpack.c.b16 %v1575, %v1573
  %v1604 = vpack.c.b16 %v1578, %v1576
  %v1605 = vpack.c.b16 %v1579, %v1577
  %v1606 = vpack.c.b16 %v1582, %v1580
  %v1607 = vpack.c.b16 %v1583, %v1581
  %v1608 = vpack.c.b16 %v1586, %v1584
  %v1609 = vpack.c.b16 %v1587, %v1585
  %v1610 = vpack.c.b16 %v1590, %v1588
  %v1611 = vpack.c.b16 %v1591, %v1589
  %v1612 = vpack.c.b16 %v1594, %v1592
  %v1613 = vpack.c.b16 %v1595, %v1593
  %v1614 = vpack.c.b16 %v1598, %v1596
  %v1615 = vpack.c.b16 %v1599, %v1597
  %1632 = vmatprep.subr.bf16.mxu0 %v1615
  %1633 = vmatpush1.bf16.msra.mxu0 %v1614
  %1634 = vmatprep.subr.bf16.mxu0 %v1613
  %1635 = vmatpush1.bf16.msra.mxu0 %v1612
  %1636 = vmatprep.subr.bf16.mxu0 %v1611
  %1637 = vmatpush1.bf16.msra.mxu0 %v1610
  %1638 = vmatprep.subr.bf16.mxu0 %v1609
  %1639 = vmatpush1.bf16.msra.mxu0 %v1608
  %1640 = vmatprep.subr.bf16.mxu0 %v1607
  %1641 = vmatpush1.bf16.msra.mxu0 %v1606
  %1642 = vmatprep.subr.bf16.mxu0 %v1605
  %1643 = vmatpush1.bf16.msra.mxu0 %v1604
  %1644 = vmatprep.subr.bf16.mxu0 %v1603
  %1645 = vmatpush1.bf16.msra.mxu0 %v1602
  %1646 = vmatprep.subr.bf16.mxu0 %v1601
  %1647 = vmatpush1.bf16.msra.mxu0 %v1600
  %1648 = vmatprep.subr.bf16.mxu0 0
  %1649 = vmatpush2.bf16.msra.mxu0 0
  %1650 = vmatprep.subr.bf16.mxu0 0
  %1651 = vmatpush2.bf16.msra.mxu0 0
  %1652 = vmatprep.subr.bf16.mxu0 0
  %1653 = vmatpush2.bf16.msra.mxu0 0
  %1654 = vmatprep.subr.bf16.mxu0 0
  %1655 = vmatpush2.bf16.msra.mxu0 0
  %1656 = vmatprep.subr.bf16.mxu0 0
  %1657 = vmatpush2.bf16.msra.mxu0 0
  %1658 = vmatprep.subr.bf16.mxu0 0
  %1659 = vmatpush2.bf16.msra.mxu0 0
  %1660 = vmatprep.subr.bf16.mxu0 0
  %1661 = vmatpush2.bf16.msra.mxu0 0
  %1662 = vmatprep.subr.bf16.mxu0 0
  %1663 = vmatpush2.bf16.msra.mxu0 0
  %1664 = vmatprep.mubr.bf16.mxu0 0
  %1665 = vmatmul.mubr.bf16.gmra.mxu0 %v1532
  %v1666 = vpop.f32.mrf.mxu0
  %v1667 = vadd.f32 0.0, %v1666
  %v1668 = vpop.f32.mrf.mxu0
  %v1669 = vadd.f32 0.0, %v1668
  %v1670 = vpop.f32.mrf.mxu0
  %v1671 = vadd.f32 0.0, %v1670
  %v1672 = vpop.f32.mrf.mxu0
  %v1673 = vadd.f32 0.0, %v1672
  %1674 = vmatprep.mubr.bf16.mxu0 0
  %1675 = vmatmul.mubr.bf16.gmra.mxu0 %v1549
  %v1676 = vpop.f32.mrf.mxu0
  %v1677 = vadd.f32 0.0, %v1676
  %v1678 = vpop.f32.mrf.mxu0
  %v1679 = vadd.f32 0.0, %v1678
  %v1680 = vpop.f32.mrf.mxu0
  %v1681 = vadd.f32 0.0, %v1680
  %v1682 = vpop.f32.mrf.mxu0
  %v1683 = vadd.f32 0.0, %v1682
  %1684 = vdwg.mxu0
  %v1685 = vadd.f32 %v1444, %v1667
  %v1686 = vadd.f32 %v1445, %v1669
  %v1687 = vadd.f32 %v1446, %v1671
  %v1688 = vadd.f32 %v1447, %v1673
  %v1689 = vadd.f32 %v1448, %v1677
  %v1690 = vadd.f32 %v1449, %v1679
  %v1691 = vadd.f32 %v1450, %v1681
  %v1692 = vadd.f32 %v1451, %v1683
  %v1694 = vunpack.c.l.s4 1983009808
  %v1695 = vunpack.c.0.s8 %v1694
  %v1696 = vlaneseq
  %v1697 = vshrl.u32 %v1696, 7
  %v1698 = vsub.s32 %v1695, %v1697
  %v1699 = vrot.slane %v17, %v1698
  %v1700 = vcombine.high %v1699, %v1699
  %v1702 = vunpack.c.l.s4 1983009808
  %v1703 = vunpack.c.0.s8 %v1702
  %v1704 = vlaneseq
  %v1705 = vshrl.u32 %v1704, 7
  %v1706 = vsub.s32 %v1703, %v1705
  %v1707 = vrot.slane %v21, %v1706
  %v1708 = vcombine.high %v1707, %v1707
  %v1710 = vunpack.c.l.s4 1983009808
  %v1711 = vunpack.c.0.s8 %v1710
  %v1712 = vlaneseq
  %v1713 = vshrl.u32 %v1712, 7
  %v1714 = vsub.s32 %v1711, %v1713
  %v1715 = vrot.slane %v25, %v1714
  %v1716 = vcombine.high %v1715, %v1715
  %v1718 = vunpack.c.l.s4 1983009808
  %v1719 = vunpack.c.0.s8 %v1718
  %v1720 = vlaneseq
  %v1721 = vshrl.u32 %v1720, 7
  %v1722 = vsub.s32 %v1719, %v1721
  %v1723 = vrot.slane %v29, %v1722
  %v1724 = vcombine.high %v1723, %v1723
  %v1725 = vrot.slane %v1699, 7
  %v1726 = vrot.slane %v1725, 2
  %v1727 = vrot.slane %v1700, 7
  %v1728 = vsel %vm1226, %v1726, %v1727
  %v1729 = vrot.slane %v1707, 7
  %v1730 = vrot.slane %v1729, 2
  %v1731 = vrot.slane %v1708, 7
  %v1732 = vsel %vm1226, %v1730, %v1731
  %v1733 = vrot.slane %v1715, 7
  %v1734 = vrot.slane %v1733, 2
  %v1735 = vrot.slane %v1716, 7
  %v1736 = vsel %vm1226, %v1734, %v1735
  %v1737 = vrot.slane %v1723, 7
  %v1738 = vrot.slane %v1737, 2
  %v1739 = vrot.slane %v1724, 7
  %v1740 = vsel %vm1226, %v1738, %v1739
  %v1741 = vld [vmem:[%s1 + $0x400] sm:$0xff]
  %v1742 = vld [vmem:[%s1 + $0x408] sm:$0xff]
  %v1743 = vld [vmem:[%s1 + $0x410] sm:$0xff]
  %v1744 = vld [vmem:[%s1 + $0x418] sm:$0xff]
  %v1745 = vld [vmem:[%s1 + $0x420] sm:$0xff]
  %v1746 = vld [vmem:[%s1 + $0x428] sm:$0xff]
  %v1747 = vld [vmem:[%s1 + $0x430] sm:$0xff]
  %v1748 = vld [vmem:[%s1 + $0x438] sm:$0xff]
  %v1749 = vld [vmem:[%s1 + $0x440] sm:$0xff]
  %v1750 = vld [vmem:[%s1 + $0x448] sm:$0xff]
  %v1751 = vld [vmem:[%s1 + $0x450] sm:$0xff]
  %v1752 = vld [vmem:[%s1 + $0x458] sm:$0xff]
  %v1753 = vld [vmem:[%s1 + $0x460] sm:$0xff]
  %v1754 = vld [vmem:[%s1 + $0x468] sm:$0xff]
  %v1755 = vld [vmem:[%s1 + $0x470] sm:$0xff]
  %v1756 = vld [vmem:[%s1 + $0x478] sm:$0xff]
  %v1757 = vcombine.low %v1487, %v1728
  %v1758 = vcombine.low %v1491, %v1732
  %v1760 = vunpack.c.l.s4 1983009808
  %v1761 = vunpack.c.0.s8 %v1760
  %v1762 = vlaneseq
  %v1763 = vshrl.u32 %v1762, 7
  %v1764 = vsub.s32 %v1761, %v1763
  %v1765 = vrot.slane %v1757, %v1764
  %v1767 = vunpack.c.l.s4 1983009808
  %v1768 = vunpack.c.0.s8 %v1767
  %v1769 = vlaneseq
  %v1770 = vshrl.u32 %v1769, 7
  %v1771 = vsub.s32 %v1768, %v1770
  %v1772 = vrot.slane %v1758, %v1771
  %v1773 = vcombine.low %v1765, %v1772
  %v1774 = vcombine.low %v1495, %v1736
  %v1775 = vcombine.low %v1499, %v1740
  %v1777 = vunpack.c.l.s4 1983009808
  %v1778 = vunpack.c.0.s8 %v1777
  %v1779 = vlaneseq
  %v1780 = vshrl.u32 %v1779, 7
  %v1781 = vsub.s32 %v1778, %v1780
  %v1782 = vrot.slane %v1774, %v1781
  %v1784 = vunpack.c.l.s4 1983009808
  %v1785 = vunpack.c.0.s8 %v1784
  %v1786 = vlaneseq
  %v1787 = vshrl.u32 %v1786, 7
  %v1788 = vsub.s32 %v1785, %v1787
  %v1789 = vrot.slane %v1775, %v1788
  %v1790 = vcombine.low %v1782, %v1789
  %v1809 = vunpack.c.l.b16 %v1741
  %v1810 = vunpack.c.h.b16 %v1741
  %v1811 = vunpack.c.l.b16 %v1742
  %v1812 = vunpack.c.h.b16 %v1742
  %v1813 = vunpack.c.l.b16 %v1743
  %v1814 = vunpack.c.h.b16 %v1743
  %v1815 = vunpack.c.l.b16 %v1744
  %v1816 = vunpack.c.h.b16 %v1744
  %v1817 = vunpack.c.l.b16 %v1745
  %v1818 = vunpack.c.h.b16 %v1745
  %v1819 = vunpack.c.l.b16 %v1746
  %v1820 = vunpack.c.h.b16 %v1746
  %v1821 = vunpack.c.l.b16 %v1747
  %v1822 = vunpack.c.h.b16 %v1747
  %v1823 = vunpack.c.l.b16 %v1748
  %v1824 = vunpack.c.h.b16 %v1748
  %v1825 = vunpack.c.l.b16 %v1749
  %v1826 = vunpack.c.h.b16 %v1749
  %v1827 = vunpack.c.l.b16 %v1750
  %v1828 = vunpack.c.h.b16 %v1750
  %v1829 = vunpack.c.l.b16 %v1751
  %v1830 = vunpack.c.h.b16 %v1751
  %v1831 = vunpack.c.l.b16 %v1752
  %v1832 = vunpack.c.h.b16 %v1752
  %v1833 = vunpack.c.l.b16 %v1753
  %v1834 = vunpack.c.h.b16 %v1753
  %v1835 = vunpack.c.l.b16 %v1754
  %v1836 = vunpack.c.h.b16 %v1754
  %v1837 = vunpack.c.l.b16 %v1755
  %v1838 = vunpack.c.h.b16 %v1755
  %v1839 = vunpack.c.l.b16 %v1756
  %v1840 = vunpack.c.h.b16 %v1756
  %v1841 = vpack.c.b16 %v1811, %v1809
  %v1842 = vpack.c.b16 %v1812, %v1810
  %v1843 = vpack.c.b16 %v1815, %v1813
  %v1844 = vpack.c.b16 %v1816, %v1814
  %v1845 = vpack.c.b16 %v1819, %v1817
  %v1846 = vpack.c.b16 %v1820, %v1818
  %v1847 = vpack.c.b16 %v1823, %v1821
  %v1848 = vpack.c.b16 %v1824, %v1822
  %v1849 = vpack.c.b16 %v1827, %v1825
  %v1850 = vpack.c.b16 %v1828, %v1826
  %v1851 = vpack.c.b16 %v1831, %v1829
  %v1852 = vpack.c.b16 %v1832, %v1830
  %v1853 = vpack.c.b16 %v1835, %v1833
  %v1854 = vpack.c.b16 %v1836, %v1834
  %v1855 = vpack.c.b16 %v1839, %v1837
  %v1856 = vpack.c.b16 %v1840, %v1838
  %1873 = vmatprep.subr.bf16.mxu0 %v1856
  %1874 = vmatpush1.bf16.msra.mxu0 %v1855
  %1875 = vmatprep.subr.bf16.mxu0 %v1854
  %1876 = vmatpush1.bf16.msra.mxu0 %v1853
  %1877 = vmatprep.subr.bf16.mxu0 %v1852
  %1878 = vmatpush1.bf16.msra.mxu0 %v1851
  %1879 = vmatprep.subr.bf16.mxu0 %v1850
  %1880 = vmatpush1.bf16.msra.mxu0 %v1849
  %1881 = vmatprep.subr.bf16.mxu0 %v1848
  %1882 = vmatpush1.bf16.msra.mxu0 %v1847
  %1883 = vmatprep.subr.bf16.mxu0 %v1846
  %1884 = vmatpush1.bf16.msra.mxu0 %v1845
  %1885 = vmatprep.subr.bf16.mxu0 %v1844
  %1886 = vmatpush1.bf16.msra.mxu0 %v1843
  %1887 = vmatprep.subr.bf16.mxu0 %v1842
  %1888 = vmatpush1.bf16.msra.mxu0 %v1841
  %1889 = vmatprep.subr.bf16.mxu0 0
  %1890 = vmatpush2.bf16.msra.mxu0 0
  %1891 = vmatprep.subr.bf16.mxu0 0
  %1892 = vmatpush2.bf16.msra.mxu0 0
  %1893 = vmatprep.subr.bf16.mxu0 0
  %1894 = vmatpush2.bf16.msra.mxu0 0
  %1895 = vmatprep.subr.bf16.mxu0 0
  %1896 = vmatpush2.bf16.msra.mxu0 0
  %1897 = vmatprep.subr.bf16.mxu0 0
  %1898 = vmatpush2.bf16.msra.mxu0 0
  %1899 = vmatprep.subr.bf16.mxu0 0
  %1900 = vmatpush2.bf16.msra.mxu0 0
  %1901 = vmatprep.subr.bf16.mxu0 0
  %1902 = vmatpush2.bf16.msra.mxu0 0
  %1903 = vmatprep.subr.bf16.mxu0 0
  %1904 = vmatpush2.bf16.msra.mxu0 0
  %1905 = vmatprep.mubr.bf16.mxu0 0
  %1906 = vmatmul.mubr.bf16.gmra.mxu0 %v1773
  %v1907 = vpop.f32.mrf.mxu0
  %v1908 = vadd.f32 0.0, %v1907
  %v1909 = vpop.f32.mrf.mxu0
  %v1910 = vadd.f32 0.0, %v1909
  %v1911 = vpop.f32.mrf.mxu0
  %v1912 = vadd.f32 0.0, %v1911
  %v1913 = vpop.f32.mrf.mxu0
  %v1914 = vadd.f32 0.0, %v1913
  %1915 = vmatprep.mubr.bf16.mxu0 0
  %1916 = vmatmul.mubr.bf16.gmra.mxu0 %v1790
  %v1917 = vpop.f32.mrf.mxu0
  %v1918 = vadd.f32 0.0, %v1917
  %v1919 = vpop.f32.mrf.mxu0
  %v1920 = vadd.f32 0.0, %v1919
  %v1921 = vpop.f32.mrf.mxu0
  %v1922 = vadd.f32 0.0, %v1921
  %v1923 = vpop.f32.mrf.mxu0
  %v1924 = vadd.f32 0.0, %v1923
  %1925 = vdwg.mxu0
  %v1926 = vadd.f32 %v1685, %v1908
  %v1927 = vadd.f32 %v1686, %v1910
  %v1928 = vadd.f32 %v1687, %v1912
  %v1929 = vadd.f32 %v1688, %v1914
  %v1930 = vadd.f32 %v1689, %v1918
  %v1931 = vadd.f32 %v1690, %v1920
  %v1932 = vadd.f32 %v1691, %v1922
  %v1933 = vadd.f32 %v1692, %v1924
  %v1942 = vcombine.low %v1926, %v1927
  %v1943 = vcombine.high %v1926, %v1927
  %v1944 = vcombine.low %v1928, %v1929
  %v1945 = vcombine.high %v1928, %v1929
  %v1946 = vcombine.low %v1930, %v1931
  %v1947 = vcombine.high %v1930, %v1931
  %v1948 = vcombine.low %v1932, %v1933
  %v1949 = vcombine.high %v1932, %v1933
  %1958 = vst [vmem:[%s2] sm:$0xff] %v1942
  %1959 = vst [vmem:[%s2 + $0x8] sm:$0xff] %v1943
  %1960 = vst [vmem:[%s2 + $0x10] sm:$0xff] %v1944
  %1961 = vst [vmem:[%s2 + $0x18] sm:$0xff] %v1945
  %1962 = vst [vmem:[%s2 + $0x20] sm:$0xff] %v1946
  %1963 = vst [vmem:[%s2 + $0x28] sm:$0xff] %v1947
  %1964 = vst [vmem:[%s2 + $0x30] sm:$0xff] %v1948
  %1965 = vst [vmem:[%s2 + $0x38] sm:$0xff] %v1949
  %v1966 = vadd.f32 %v1926, %v1928
  %v1967 = vadd.f32 %v1966, %v1930
  %v1968 = vadd.f32 %v1967, %v1932
  %v1969 = vrot.slane %v1968, 4
  %v1970 = vadd.f32 %v1968, %v1969
  %v1971 = vrot.slane %v1970, 2
  %v1972 = vadd.f32 %v1970, %v1971
  %v1973 = vrot.slane %v1972, 1
  %v1974 = vadd.f32 %v1972, %v1973
  %v1975 = vadd.f32 %v1927, %v1929
  %v1976 = vadd.f32 %v1975, %v1931
  %v1977 = vadd.f32 %v1976, %v1933
  %v1978 = vrot.slane %v1977, 4
  %v1979 = vadd.f32 %v1977, %v1978
  %v1980 = vrot.slane %v1979, 2
  %v1981 = vadd.f32 %v1979, %v1980
  %v1982 = vrot.slane %v1981, 1
  %v1983 = vadd.f32 %v1981, %v1982
  %v1984 = vmul.f32 %v1926, %v1926
  %v1985 = vmul.f32 %v1927, %v1927
  %v1986 = vmul.f32 %v1928, %v1928
  %v1987 = vmul.f32 %v1929, %v1929
  %v1988 = vmul.f32 %v1930, %v1930
  %v1989 = vmul.f32 %v1931, %v1931
  %v1990 = vmul.f32 %v1932, %v1932
  %v1991 = vmul.f32 %v1933, %v1933
  %v1992 = vadd.f32 %v1984, %v1986
  %v1993 = vadd.f32 %v1992, %v1988
  %v1994 = vadd.f32 %v1993, %v1990
  %v1995 = vrot.slane %v1994, 4
  %v1996 = vadd.f32 %v1994, %v1995
  %v1997 = vrot.slane %v1996, 2
  %v1998 = vadd.f32 %v1996, %v1997
  %v1999 = vrot.slane %v1998, 1
  %v2000 = vadd.f32 %v1998, %v1999
  %v2001 = vadd.f32 %v1985, %v1987
  %v2002 = vadd.f32 %v2001, %v1989
  %v2003 = vadd.f32 %v2002, %v1991
  %v2004 = vrot.slane %v2003, 4
  %v2005 = vadd.f32 %v2003, %v2004
  %v2006 = vrot.slane %v2005, 2
  %v2007 = vadd.f32 %v2005, %v2006
  %v2008 = vrot.slane %v2007, 1
  %v2009 = vadd.f32 %v2007, %v2008
  %vm2010 = vcmask 1040384
  %v2011 = vsel %vm2010, %v1974, %v2000
  %v2012 = vsel %vm2010, %v1983, %v2009
  %v2015 = vcombine.low %v2011, %v2012
  %v2017 = vunpack.c.l.s4 1983009808
  %v2018 = vunpack.c.0.s8 %v2017
  %v2019 = vlaneseq
  %v2020 = vshrl.u32 %v2019, 7
  %v2021 = vsub.s32 %v2018, %v2020
  %v2022 = vrot.slane %v2015, %v2021
  %2024 = vst [vmem:[%s3] sm:$0xf] %v2022
  // Predicated region
  $region10: #{conv_etal_forward.10} parent=0 // pred_check
    _
  $region11: #{conv_etal_forward.10} parent=0 // pred_check_branch
    %2026 = sbr.rel (0) target = $region13
  $region12: #{conv_etal_forward.10} parent=0 // pred_region
    _
  $region13: #{conv_etal_forward.10} parent=0 // pred_fallthru
    _
  // Predicated region
  $region14: #{conv_etal_forward.10} parent=0 // pred_check
    _
  $region15: #{conv_etal_forward.10} parent=0 // pred_check_branch
    %2028 = sbr.rel (0) target = $region17
  $region16: #{conv_etal_forward.10} parent=0 // pred_region
    _
  $region17: #{conv_etal_forward.10} parent=0 // pred_fallthru
    _
  // Predicated region
  $region18: #{conv_etal_forward.10} parent=0 // pred_check
    _
  $region19: #{conv_etal_forward.10} parent=0 // pred_check_branch
    %2030 = sbr.rel (0) target = $region21
  $region20: #{conv_etal_forward.10} parent=0 // pred_region
    _
  $region21: #{conv_etal_forward.10} parent=0 // pred_fallthru
    _
  // Predicated region
  $region22: #{conv_etal_forward.10} parent=0 // pred_check
    _
  $region23: #{conv_etal_forward.10} parent=0 // pred_check_branch
    %2032 = sbr.rel (0) target = $region25
  $region24: #{conv_etal_forward.10} parent=0 // pred_region
    _
  $region25: #{conv_etal_forward.10} parent=0 // pred_fallthru
    _

</llo_original>
